<compile_context>
chip_gen: v7x
topology: tpu7x:2x2x1
jax: 0.10.0
libtpu: 0.0.40
codegen_flags: <defaults>
</compile_context>

<pallas_src>
import functools

import jax
import jax.numpy as jnp
from jax import lax
from jax.experimental import pallas as pl
from jax.experimental.pallas import tpu as pltpu


def _repeat_lanes(x, r):
    """repeat_interleave along the last (lane) axis: (tH, W) -> (tH, W*r)."""
    t_h, w = x.shape
    return jnp.broadcast_to(x[:, :, None], (t_h, w, r)).reshape(t_h, w * r)


def _lpg_kernel(plane_ref, out_ref, *, R, W):
    # plane_ref: (1, 4, tH, W)    -- one batch element, one H tile, chans n1..n4
    # out_ref:   (1, tH, R, W*R)  -- out[0, h, i, w*R+j] = value of output
    #                                pixel (h*R + i, w*R + j)
    t_h = plane_ref.shape[2]
    WR = W * R

    n1 = plane_ref[0, 0]  # (tH, W)
    n2 = plane_ref[0, 1]
    n3 = plane_ref[0, 2]
    n4 = plane_ref[0, 3]

    # Lane-expand the plane coefficients once per block (amortized over the
    # R output rows produced per input row).
    n1e = _repeat_lanes(n1, R)  # (tH, W*R)
    n2e = _repeat_lanes(n2, R)
    n3e = _repeat_lanes(n3, R)
    n4e = _repeat_lanes(n4, R)

    # u depends only on the output column index q:  u = ((q % R) - (R-1)/2)/R
    j = lax.broadcasted_iota(jnp.int32, (t_h, WR), 1) % R
    u = (j.astype(jnp.float32) - (R - 1) * 0.5) * (1.0 / R)

    # Hoist the i-invariant part of the denominator.
    base = n1e * u + n3e  # (tH, W*R)

    for i in range(R):  # static unroll; R is small (2 / 4 / 8)
        v_i = (i - (R - 1) * 0.5) / R  # python float scalar
        denom = base + n2e * v_i
        out_ref[0, :, i, :] = n4e * pl.reciprocal(denom, approx=False)


def _choose_tile_h(H, R, W, target_bytes=2 * 1024 * 1024):
    """Largest divisor tH of H (multiple of 8, or H itself) whose factored
    f32 output block (tH, R, W*R) stays within ~target_bytes (so double
    buffering fits comfortably inside the default scoped VMEM on v5e)."""
    row_bytes = R * R * W * 4
    best = None
    for t_h in range(1, H + 1):
        if H % t_h:
            continue
        if (t_h % 8) and t_h != H:
            continue
        if t_h * row_bytes <= target_bytes:
            best = t_h
    if best is None:
        best = 8 if H % 8 == 0 else H
    return best


def local_planar_guidance(plane_eq, focal, upratio):
    """plane_eq: (B, 4, H, W) float32; focal unused. Returns (B, H*r, W*r)."""
    del focal  # unused by the reference forward pass
    B, C, H, W = plane_eq.shape
    assert C == 4
    R = int(upratio)
    plane_eq = plane_eq.astype(jnp.float32)

    t_h = _choose_tile_h(H, R, W)
    grid = (B, H // t_h)

    kernel = functools.partial(_lpg_kernel, R=R, W=W)

    # TODO(synk): for very small feature maps (W*R < 128) one could fold H
    # into the lane axis as well for fully dense stores; not done here.
    out_factored = pl.pallas_call(
        kernel,
        out_shape=jax.ShapeDtypeStruct((B, H, R, W * R), jnp.float32),
        grid_spec=pltpu.PrefetchScalarGridSpec(
            num_scalar_prefetch=0,
            grid=grid,
            in_specs=[
                pl.BlockSpec((1, 4, t_h, W), lambda b, h: (b, 0, h, 0)),
            ],
            out_specs=pl.BlockSpec((1, t_h, R, W * R), lambda b, h: (b, h, 0, 0)),
        ),
        compiler_params=pltpu.CompilerParams(
            dimension_semantics=("parallel", "parallel"),
        ),
    )(plane_eq)

    # (B, H, R, W*R) -> (B, H*R, W*R): contiguous reshape, no HBM transpose.
    return out_factored.reshape(B, H * R, W * R)


def _reference_lpg(plane_eq, upratio):
    """Pure-JAX reproduction of the PyTorch forward (for verification)."""
    r = int(upratio)
    B, _, H, W = plane_eq.shape
    pe = jnp.repeat(jnp.repeat(plane_eq, r, axis=2), r, axis=3)
    n1, n2, n3, n4 = pe[:, 0], pe[:, 1], pe[:, 2], pe[:, 3]
    u = ((jnp.arange(W * r) % r).astype(jnp.float32) - (r - 1) * 0.5) / r
    v = ((jnp.arange(H * r) % r).astype(jnp.float32) - (r - 1) * 0.5) / r
    return n4 / (n1 * u[None, None, :] + n2 * v[None, :, None] + n3)


if __name__ == "__main__":
    key = jax.random.PRNGKey(0)

    # Two small configs: R=8 (fully (8,128)-dense blocks) and R=4 (sub-8 R dim).
    configs = [
        (2, 16, 16, 8),   # B, H, W, upratio -> output (2, 128, 128)
        (2, 16, 32, 4),   # B, H, W, upratio -> output (2, 64, 128)
    ]

    for (B, H, W, upratio) in configs:
        k1, k2, key = jax.random.split(key, 3)
        plane_eq = jax.random.normal(k1, (B, 4, H, W), dtype=jnp.float32) * 0.1
        # Shift the n3 channel away from zero so the denominator is well-behaved.
        plane_eq = plane_eq.at[:, 2].add(2.0)
        focal = jax.random.uniform(k2, (B,), dtype=jnp.float32) * 100.0 + 500.0

        out = local_planar_guidance(plane_eq, focal, upratio)
        out = jax.block_until_ready(out)

        ref = _reference_lpg(plane_eq, upratio)
        assert out.shape == (B, H * upratio, W * upratio), out.shape
        max_err = float(jnp.max(jnp.abs(out - ref)))
        assert jnp.allclose(out, ref, atol=1e-5, rtol=1e-5), max_err

    print("KERNEL_OK")
</pallas_src>

<mosaic_0001>
module attributes {stable_mosaic.version = 11 : i64} {
  func.func @_lpg_kernel(%arg0: i32, %arg1: i32, %arg2: memref<1x4x16x16xf32, #tpu.memory_space<vmem>>, %arg3: memref<1x16x8x128xf32, #tpu.memory_space<vmem>>) attributes {dimension_semantics = [#tpu.dimension_semantics<parallel>, #tpu.dimension_semantics<parallel>], iteration_bounds = array<i64: 2, 1>, scalar_prefetch = 0 : i64, scratch_operands = 0 : i64, tpu.core_type = #tpu.core_type<tc>, window_params = [{transform_indices = @transform_0, window_bounds = array<i64: 1, 4, 16, 16>}, {transform_indices = @transform_1, window_bounds = array<i64: 1, 16, 8, 128>}]} {
    %c0 = arith.constant 0 : index
    %c0_0 = arith.constant 0 : index
    %c0_1 = arith.constant 0 : index
    %c0_2 = arith.constant 0 : index
    %0 = vector.load %arg2[%c0, %c0_0, %c0_1, %c0_2] : memref<1x4x16x16xf32, #tpu.memory_space<vmem>>, vector<1x1x16x16xf32>
    %1 = vector.shape_cast %0 : vector<1x1x16x16xf32> to vector<16x16xf32>
    %c0_3 = arith.constant 0 : index
    %c1 = arith.constant 1 : index
    %c0_4 = arith.constant 0 : index
    %c0_5 = arith.constant 0 : index
    %2 = vector.load %arg2[%c0_3, %c1, %c0_4, %c0_5] : memref<1x4x16x16xf32, #tpu.memory_space<vmem>>, vector<1x1x16x16xf32>
    %3 = vector.shape_cast %2 : vector<1x1x16x16xf32> to vector<16x16xf32>
    %c0_6 = arith.constant 0 : index
    %c2 = arith.constant 2 : index
    %c0_7 = arith.constant 0 : index
    %c0_8 = arith.constant 0 : index
    %4 = vector.load %arg2[%c0_6, %c2, %c0_7, %c0_8] : memref<1x4x16x16xf32, #tpu.memory_space<vmem>>, vector<1x1x16x16xf32>
    %5 = vector.shape_cast %4 : vector<1x1x16x16xf32> to vector<16x16xf32>
    %c0_9 = arith.constant 0 : index
    %c3 = arith.constant 3 : index
    %c0_10 = arith.constant 0 : index
    %c0_11 = arith.constant 0 : index
    %6 = vector.load %arg2[%c0_9, %c3, %c0_10, %c0_11] : memref<1x4x16x16xf32, #tpu.memory_space<vmem>>, vector<1x1x16x16xf32>
    %7 = vector.shape_cast %6 : vector<1x1x16x16xf32> to vector<16x16xf32>
    %8 = vector.shape_cast %1 : vector<16x16xf32> to vector<16x16x1xf32>
    %9 = vector.shape_cast %8 : vector<16x16x1xf32> to vector<16x16x1xf32>
    %10 = vector.broadcast %9 : vector<16x16x1xf32> to vector<16x16x8xf32>
    %11 = vector.shape_cast %10 : vector<16x16x8xf32> to vector<16x128xf32>
    %12 = vector.shape_cast %3 : vector<16x16xf32> to vector<16x16x1xf32>
    %13 = vector.shape_cast %12 : vector<16x16x1xf32> to vector<16x16x1xf32>
    %14 = vector.broadcast %13 : vector<16x16x1xf32> to vector<16x16x8xf32>
    %15 = vector.shape_cast %14 : vector<16x16x8xf32> to vector<16x128xf32>
    %16 = vector.shape_cast %5 : vector<16x16xf32> to vector<16x16x1xf32>
    %17 = vector.shape_cast %16 : vector<16x16x1xf32> to vector<16x16x1xf32>
    %18 = vector.broadcast %17 : vector<16x16x1xf32> to vector<16x16x8xf32>
    %19 = vector.shape_cast %18 : vector<16x16x8xf32> to vector<16x128xf32>
    %20 = vector.shape_cast %7 : vector<16x16xf32> to vector<16x16x1xf32>
    %21 = vector.shape_cast %20 : vector<16x16x1xf32> to vector<16x16x1xf32>
    %22 = vector.broadcast %21 : vector<16x16x1xf32> to vector<16x16x8xf32>
    %23 = vector.shape_cast %22 : vector<16x16x8xf32> to vector<16x128xf32>
    %24 = tpu.iota {dimensions = array<i32: 1>} : vector<16x128xi32>
    %c8_i32 = arith.constant 8 : i32
    %c0_i32 = arith.constant 0 : i32
    %25 = arith.cmpi eq, %c8_i32, %c0_i32 : i32
    %c1_i32 = arith.constant 1 : i32
    %26 = arith.select %25, %c1_i32, %c8_i32 : i32
    %27 = vector.broadcast %26 : i32 to vector<16x128xi32>
    %28 = arith.remsi %24, %27 : vector<16x128xi32>
    %c0_i32_12 = arith.constant 0 : i32
    %29 = vector.broadcast %c0_i32_12 : i32 to vector<16x128xi32>
    %30 = arith.cmpi ne, %28, %29 : vector<16x128xi32>
    %c0_i32_13 = arith.constant 0 : i32
    %31 = vector.broadcast %c0_i32_13 : i32 to vector<16x128xi32>
    %32 = arith.cmpi slt, %28, %31 : vector<16x128xi32>
    %c0_i32_14 = arith.constant 0 : i32
    %33 = arith.cmpi slt, %26, %c0_i32_14 : i32
    %34 = vector.broadcast %33 : i1 to vector<16x128xi1>
    %35 = vector.broadcast %34 : vector<16x128xi1> to vector<16x128xi1>
    %36 = arith.xori %32, %35 : vector<16x128xi1>
    %37 = arith.andi %36, %30 : vector<16x128xi1>
    %38 = vector.broadcast %26 : i32 to vector<16x128xi32>
    %39 = arith.addi %28, %38 : vector<16x128xi32>
    %40 = arith.select %37, %39, %28 : vector<16x128xi1>, vector<16x128xi32>
    %41 = arith.sitofp %40 : vector<16x128xi32> to vector<16x128xf32>
    %cst = arith.constant 3.500000e+00 : f32
    %42 = vector.broadcast %cst : f32 to vector<16x128xf32>
    %43 = arith.subf %41, %42 : vector<16x128xf32>
    %cst_15 = arith.constant 1.250000e-01 : f32
    %44 = vector.broadcast %cst_15 : f32 to vector<16x128xf32>
    %45 = arith.mulf %43, %44 : vector<16x128xf32>
    %46 = arith.mulf %11, %45 : vector<16x128xf32>
    %47 = arith.addf %46, %19 : vector<16x128xf32>
    %cst_16 = arith.constant -4.375000e-01 : f32
    %48 = vector.broadcast %cst_16 : f32 to vector<16x128xf32>
    %49 = arith.mulf %15, %48 : vector<16x128xf32>
    %50 = arith.addf %47, %49 : vector<16x128xf32>
    %51 = tpu.reciprocal %50 : vector<16x128xf32> -> vector<16x128xf32>
    %52 = arith.mulf %23, %51 : vector<16x128xf32>
    %c0_17 = arith.constant 0 : index
    %c0_18 = arith.constant 0 : index
    %c0_19 = arith.constant 0 : index
    %c0_20 = arith.constant 0 : index
    %53 = vector.load %arg3[%c0_17, %c0_18, %c0_19, %c0_20] : memref<1x16x8x128xf32, #tpu.memory_space<vmem>>, vector<1x16x1x128xf32>
    %54 = vector.shape_cast %53 : vector<1x16x1x128xf32> to vector<16x128xf32>
    %55 = vector.shape_cast %52 : vector<16x128xf32> to vector<1x16x1x128xf32>
    tpu.vector_store %arg3[%c0_17, %c0_18, %c0_19, %c0_20], %55 {strides = array<i32>} : memref<1x16x8x128xf32, #tpu.memory_space<vmem>>, vector<1x16x1x128xf32>,
    %cst_21 = arith.constant -3.125000e-01 : f32
    %56 = vector.broadcast %cst_21 : f32 to vector<16x128xf32>
    %57 = arith.mulf %15, %56 : vector<16x128xf32>
    %58 = arith.addf %47, %57 : vector<16x128xf32>
    %59 = tpu.reciprocal %58 : vector<16x128xf32> -> vector<16x128xf32>
    %60 = arith.mulf %23, %59 : vector<16x128xf32>
    %c0_22 = arith.constant 0 : index
    %c0_23 = arith.constant 0 : index
    %c1_24 = arith.constant 1 : index
    %c0_25 = arith.constant 0 : index
    %61 = vector.load %arg3[%c0_22, %c0_23, %c1_24, %c0_25] : memref<1x16x8x128xf32, #tpu.memory_space<vmem>>, vector<1x16x1x128xf32>
    %62 = vector.shape_cast %61 : vector<1x16x1x128xf32> to vector<16x128xf32>
    %63 = vector.shape_cast %60 : vector<16x128xf32> to vector<1x16x1x128xf32>
    tpu.vector_store %arg3[%c0_22, %c0_23, %c1_24, %c0_25], %63 {strides = array<i32>} : memref<1x16x8x128xf32, #tpu.memory_space<vmem>>, vector<1x16x1x128xf32>,
    %cst_26 = arith.constant -1.875000e-01 : f32
    %64 = vector.broadcast %cst_26 : f32 to vector<16x128xf32>
    %65 = arith.mulf %15, %64 : vector<16x128xf32>
    %66 = arith.addf %47, %65 : vector<16x128xf32>
    %67 = tpu.reciprocal %66 : vector<16x128xf32> -> vector<16x128xf32>
    %68 = arith.mulf %23, %67 : vector<16x128xf32>
    %c0_27 = arith.constant 0 : index
    %c0_28 = arith.constant 0 : index
    %c2_29 = arith.constant 2 : index
    %c0_30 = arith.constant 0 : index
    %69 = vector.load %arg3[%c0_27, %c0_28, %c2_29, %c0_30] : memref<1x16x8x128xf32, #tpu.memory_space<vmem>>, vector<1x16x1x128xf32>
    %70 = vector.shape_cast %69 : vector<1x16x1x128xf32> to vector<16x128xf32>
    %71 = vector.shape_cast %68 : vector<16x128xf32> to vector<1x16x1x128xf32>
    tpu.vector_store %arg3[%c0_27, %c0_28, %c2_29, %c0_30], %71 {strides = array<i32>} : memref<1x16x8x128xf32, #tpu.memory_space<vmem>>, vector<1x16x1x128xf32>,
    %cst_31 = arith.constant -6.250000e-02 : f32
    %72 = vector.broadcast %cst_31 : f32 to vector<16x128xf32>
    %73 = arith.mulf %15, %72 : vector<16x128xf32>
    %74 = arith.addf %47, %73 : vector<16x128xf32>
    %75 = tpu.reciprocal %74 : vector<16x128xf32> -> vector<16x128xf32>
    %76 = arith.mulf %23, %75 : vector<16x128xf32>
    %c0_32 = arith.constant 0 : index
    %c0_33 = arith.constant 0 : index
    %c3_34 = arith.constant 3 : index
    %c0_35 = arith.constant 0 : index
    %77 = vector.load %arg3[%c0_32, %c0_33, %c3_34, %c0_35] : memref<1x16x8x128xf32, #tpu.memory_space<vmem>>, vector<1x16x1x128xf32>
    %78 = vector.shape_cast %77 : vector<1x16x1x128xf32> to vector<16x128xf32>
    %79 = vector.shape_cast %76 : vector<16x128xf32> to vector<1x16x1x128xf32>
    tpu.vector_store %arg3[%c0_32, %c0_33, %c3_34, %c0_35], %79 {strides = array<i32>} : memref<1x16x8x128xf32, #tpu.memory_space<vmem>>, vector<1x16x1x128xf32>,
    %cst_36 = arith.constant 6.250000e-02 : f32
    %80 = vector.broadcast %cst_36 : f32 to vector<16x128xf32>
    %81 = arith.mulf %15, %80 : vector<16x128xf32>
    %82 = arith.addf %47, %81 : vector<16x128xf32>
    %83 = tpu.reciprocal %82 : vector<16x128xf32> -> vector<16x128xf32>
    %84 = arith.mulf %23, %83 : vector<16x128xf32>
    %c0_37 = arith.constant 0 : index
    %c0_38 = arith.constant 0 : index
    %c4 = arith.constant 4 : index
    %c0_39 = arith.constant 0 : index
    %85 = vector.load %arg3[%c0_37, %c0_38, %c4, %c0_39] : memref<1x16x8x128xf32, #tpu.memory_space<vmem>>, vector<1x16x1x128xf32>
    %86 = vector.shape_cast %85 : vector<1x16x1x128xf32> to vector<16x128xf32>
    %87 = vector.shape_cast %84 : vector<16x128xf32> to vector<1x16x1x128xf32>
    tpu.vector_store %arg3[%c0_37, %c0_38, %c4, %c0_39], %87 {strides = array<i32>} : memref<1x16x8x128xf32, #tpu.memory_space<vmem>>, vector<1x16x1x128xf32>,
    %cst_40 = arith.constant 1.875000e-01 : f32
    %88 = vector.broadcast %cst_40 : f32 to vector<16x128xf32>
    %89 = arith.mulf %15, %88 : vector<16x128xf32>
    %90 = arith.addf %47, %89 : vector<16x128xf32>
    %91 = tpu.reciprocal %90 : vector<16x128xf32> -> vector<16x128xf32>
    %92 = arith.mulf %23, %91 : vector<16x128xf32>
    %c0_41 = arith.constant 0 : index
    %c0_42 = arith.constant 0 : index
    %c5 = arith.constant 5 : index
    %c0_43 = arith.constant 0 : index
    %93 = vector.load %arg3[%c0_41, %c0_42, %c5, %c0_43] : memref<1x16x8x128xf32, #tpu.memory_space<vmem>>, vector<1x16x1x128xf32>
    %94 = vector.shape_cast %93 : vector<1x16x1x128xf32> to vector<16x128xf32>
    %95 = vector.shape_cast %92 : vector<16x128xf32> to vector<1x16x1x128xf32>
    tpu.vector_store %arg3[%c0_41, %c0_42, %c5, %c0_43], %95 {strides = array<i32>} : memref<1x16x8x128xf32, #tpu.memory_space<vmem>>, vector<1x16x1x128xf32>,
    %cst_44 = arith.constant 3.125000e-01 : f32
    %96 = vector.broadcast %cst_44 : f32 to vector<16x128xf32>
    %97 = arith.mulf %15, %96 : vector<16x128xf32>
    %98 = arith.addf %47, %97 : vector<16x128xf32>
    %99 = tpu.reciprocal %98 : vector<16x128xf32> -> vector<16x128xf32>
    %100 = arith.mulf %23, %99 : vector<16x128xf32>
    %c0_45 = arith.constant 0 : index
    %c0_46 = arith.constant 0 : index
    %c6 = arith.constant 6 : index
    %c0_47 = arith.constant 0 : index
    %101 = vector.load %arg3[%c0_45, %c0_46, %c6, %c0_47] : memref<1x16x8x128xf32, #tpu.memory_space<vmem>>, vector<1x16x1x128xf32>
    %102 = vector.shape_cast %101 : vector<1x16x1x128xf32> to vector<16x128xf32>
    %103 = vector.shape_cast %100 : vector<16x128xf32> to vector<1x16x1x128xf32>
    tpu.vector_store %arg3[%c0_45, %c0_46, %c6, %c0_47], %103 {strides = array<i32>} : memref<1x16x8x128xf32, #tpu.memory_space<vmem>>, vector<1x16x1x128xf32>,
    %cst_48 = arith.constant 4.375000e-01 : f32
    %104 = vector.broadcast %cst_48 : f32 to vector<16x128xf32>
    %105 = arith.mulf %15, %104 : vector<16x128xf32>
    %106 = arith.addf %47, %105 : vector<16x128xf32>
    %107 = tpu.reciprocal %106 : vector<16x128xf32> -> vector<16x128xf32>
    %108 = arith.mulf %23, %107 : vector<16x128xf32>
    %c0_49 = arith.constant 0 : index
    %c0_50 = arith.constant 0 : index
    %c7 = arith.constant 7 : index
    %c0_51 = arith.constant 0 : index
    %109 = vector.load %arg3[%c0_49, %c0_50, %c7, %c0_51] : memref<1x16x8x128xf32, #tpu.memory_space<vmem>>, vector<1x16x1x128xf32>
    %110 = vector.shape_cast %109 : vector<1x16x1x128xf32> to vector<16x128xf32>
    %111 = vector.shape_cast %108 : vector<16x128xf32> to vector<1x16x1x128xf32>
    tpu.vector_store %arg3[%c0_49, %c0_50, %c7, %c0_51], %111 {strides = array<i32>} : memref<1x16x8x128xf32, #tpu.memory_space<vmem>>, vector<1x16x1x128xf32>,
    return
  }
  func.func @transform_0(%arg0: i32, %arg1: i32) -> (i32, i32, i32, i32) {
    %c0_i32 = arith.constant 0 : i32
    %c0_i32_0 = arith.constant 0 : i32
    %c0_i32_1 = arith.constant 0 : i32
    return %arg0, %c0_i32, %arg1, %c0_i32_0 : i32, i32, i32, i32
  }
  func.func @transform_1(%arg0: i32, %arg1: i32) -> (i32, i32, i32, i32) {
    %c0_i32 = arith.constant 0 : i32
    %c0_i32_0 = arith.constant 0 : i32
    %c0_i32_1 = arith.constant 0 : i32
    return %arg0, %arg1, %c0_i32, %c0_i32_0 : i32, i32, i32, i32
  }
}

</mosaic_0001>

<llo_original>
// kernel: tpu_custom_call.1
$region0: #{tpu_custom_call.1}
  #allocation0 [shape = 'u32[]', space=smem, size = 0x4, offset = 0x4, fixed_abs, tag = 'smem constant byte address 0x4 - core index']
  #allocation1 [shape = 'u32[144,128]{1,0:T(1,128)}', space=vmem, size = 0x12000, scoped, tag = 'internal scratch']
  %s0 = inlined_call_operand.hbm [shape: f32[2,4,16,16], index: 0, kind: input, shape index: {}]
  %s1 = inlined_call_operand.hbm [shape: f32[2,16,8,128], index: 1, kind: output, shape index: {}]
  %s2 = sld [smem:[#allocation0]]
  $region41: #{tpu_custom_call.1} parent=0
    _
  %s4 = ssub.s32 1, %s2
  %s5 = scalar_select 0, %s4, %s2
  $region1: #{tpu_custom_call.1} parent=0
    #allocation2 [shape = 'u8[65536]{0}', space=vmem, size = 0x10000, scoped, tag = 'input window, operand 0']
    #allocation3 [shape = 's32[2]{0}', space=sflag, size = 0x8, scoped, tag = 'scoped memory for tpu_custom_call.1']
    #allocation4 [shape = 's32[2]{0}', space=sflag, size = 0x8, scoped, tag = 'scoped memory for tpu_custom_call.1']
    #allocation5 [shape = 'u8[131072]{0}', space=vmem, size = 0x20000, scoped, tag = 'output window, operand 0']
    %6 = vsyncpa [#allocation3], 0
    %s7 = scalar_lea.sflag [#allocation3], 1
    %8 = vsyncpa %s7, 0
    %9 = vsyncpa [#allocation4], 0
    %s10 = scalar_lea.sflag [#allocation4], 1
    %11 = vsyncpa %s10, 0
    loop: start=0, step=1, limit=4
    $region2: #{tpu_custom_call.1} parent=1 // loop_pre_header
      _
    $region3: #{tpu_custom_call.1} parent=1 // loop_header
      %s13 = sphi 0, %s17
      %p14 = scmp.ge.s32.totalorder %s13, 4
      %s20 = sphi 0, %s32
      %s21 = sphi 0, %s28
      %s22 = sphi 0, %s20
      %s23 = sphi 0, %s21
      %s24 = sphi 0, %s22
      %s25 = sphi 0, %s23
      %s37 = sphi 0, %s39
      %s40 = sphi 0, %s37
      %s41 = sphi 0, %s40
      %s57 = sphi 0, %s41
      %s65 = sphi 0, %s67
      %s68 = sphi 0, %s65
      %s69 = sphi 0, %s68
      %s85 = sphi 0, %s69
    $region4: #{tpu_custom_call.1} parent=1 // loop_header_branch
      %16 = sbr.rel (%p14) target = $region8
    $region5: #{tpu_custom_call.1} parent=1 // loop_body
      %s18 = ssub.s32 %s13, 1
      %s19 = ssub.s32 %s13, 2
      %s26 = sadd.s32 1, %s21
      %p27 = scmp.ge.s32.totalorder %s26, 1
      %s28 = scalar_select %p27, 0, %s26
      %s29 = sadd.s32 1, %s20
      %s30 = scalar_select %p27, %s29, %s20
      %p31 = scmp.ge.s32.totalorder %s30, 2
      %s32 = scalar_select %p31, 0, %s30
      %s33 = ssub.s32 %s20, %s32
      %s34 = ssub.s32 %s21, %s28
      %s35 = sor.u32 %s33, %s34
      %p36 = scmp.eq.s32.totalorder %s35, 0
      %s38 = sadd.s32 %s37, 1
      %s39 = scalar_select %p36, %s37, %s38
      %p42 = pneg %p36
      %p43 = scmp.eq.s32.totalorder %s13, 1
      %p44 = por %p42, %p43
      %p45 = scmp.ne.s32.totalorder %s37, %s40
      %p46 = scmp.eq.s32.totalorder %s13, 0
      %p47 = por %p45, %p46
      %p48 = scmp.ne.s32.totalorder %s37, %s40
      %p49 = scmp.eq.s32.totalorder %s18, 1
      %p50 = por %p48, %p49
      %p51 = scmp.ne.s32.totalorder %s40, %s41
      %p52 = scmp.eq.s32.totalorder %s18, 0
      %p53 = por %p51, %p52
      %p54 = scmp.ne.s32.totalorder %s40, %s41
      %p55 = scmp.eq.s32.totalorder %s19, 1
      %p56 = por %p54, %p55
      %p58 = scmp.ne.s32.totalorder %s41, %s57
      %p59 = scmp.eq.s32.totalorder %s19, 0
      %p60 = por %p58, %p59
      %s61 = ssub.s32 %s20, %s32
      %s62 = ssub.s32 %s21, %s28
      %s63 = sor.u32 %s61, %s62
      %p64 = scmp.eq.s32.totalorder %s63, 0
      %s66 = sadd.s32 %s65, 1
      %s67 = scalar_select %p64, %s65, %s66
      %p70 = pneg %p64
      %p71 = scmp.eq.s32.totalorder %s13, 1
      %p72 = por %p70, %p71
      %p73 = scmp.ne.s32.totalorder %s65, %s68
      %p74 = scmp.eq.s32.totalorder %s13, 0
      %p75 = por %p73, %p74
      %p76 = scmp.ne.s32.totalorder %s65, %s68
      %p77 = scmp.eq.s32.totalorder %s18, 1
      %p78 = por %p76, %p77
      %p79 = scmp.ne.s32.totalorder %s68, %s69
      %p80 = scmp.eq.s32.totalorder %s18, 0
      %p81 = por %p79, %p80
      %p82 = scmp.ne.s32.totalorder %s68, %s69
      %p83 = scmp.eq.s32.totalorder %s19, 1
      %p84 = por %p82, %p83
      %p86 = scmp.ne.s32.totalorder %s69, %s85
      %p87 = scmp.eq.s32.totalorder %s19, 0
      %p88 = por %p86, %p87
      %p89 = scmp.le.s32.totalorder 1, %s13
      %p90 = scmp.lt.s32.totalorder %s13, 3
      %p91 = pnand %p89, %p90
      %p92 = pneg %p91
      // Predicated region
      $region9: #{tpu_custom_call.1} parent=5 // pred_check
        _
      $region10: #{tpu_custom_call.1} parent=5 // pred_check_branch
        %94 = sbr.rel (%p91) target = $region12
      $region11: #{tpu_custom_call.1} parent=5 // pred_region
        %s95 = ssub.s32 %s13, 1
      $region12: #{tpu_custom_call.1} parent=5 // pred_fallthru
        _
      %p96 = scmp.lt.s32.totalorder %s13, 2
      // Predicated region
      $region13: #{tpu_custom_call.1} parent=5 // pred_check
        %p97 = pneg %p96
      $region14: #{tpu_custom_call.1} parent=5 // pred_check_branch
        %99 = sbr.rel (%p97) target = $region16
      $region15: #{tpu_custom_call.1} parent=5 // pred_region
        // Predicated region
        $region17: #{tpu_custom_call.1} parent=15 // pred_check
          %p100 = pneg %p47
        $region18: #{tpu_custom_call.1} parent=15 // pred_check_branch
          %102 = sbr.rel (%p100) target = $region20
        $region19: #{tpu_custom_call.1} parent=15 // pred_region
          %s103 = sand.u32 %s37, 1
          %s104 = scalar_lea.sflag [#allocation3], %s103
          %s105 = sand.u32 %s37, 1
          %s106 = smul.addr %s105, 64
          %s107 = scalar_lea.vmem [#allocation2], %s106
          %s108 = smul.u32 2, %s21
          %s110 = ssub.s32 1024, 1024
          %111 = vsyncadd %s104, %s110
          %s112 = smul.addr %s20, 8
          %s113 = sadd.s32 %s108, %s112
          %s114 = smul.addr %s113, 128
          %s115 = scalar_lea.hbm %s0, %s114
          %s116 = sshll.u32 %s107, 4
          %s117 = int_to_ptr.vmem [resolvable:$true] %s116
          %122 = dma.hbm_to_vmem [thread:$0]  %s115, 1024, %s117, %s104, 128, 128, 8
        $region20: #{tpu_custom_call.1} parent=15 // pred_fallthru
          _
      $region16: #{tpu_custom_call.1} parent=5 // pred_fallthru
        _
      %p123 = scmp.le.s32.totalorder 1, %s13
      %p124 = scmp.lt.s32.totalorder %s13, 3
      %p125 = pnand %p123, %p124
      %p126 = pneg %p125
      // Predicated region
      $region21: #{tpu_custom_call.1} parent=5 // pred_check
        _
      $region22: #{tpu_custom_call.1} parent=5 // pred_check_branch
        %128 = sbr.rel (%p125) target = $region24
      $region23: #{tpu_custom_call.1} parent=5 // pred_region
        %s129 = ssub.s32 %s13, 1
        %s130 = sand.u32 %s40, 1
        %s131 = scalar_lea.sflag [#allocation3], %s130
        %s132 = sand.u32 %s40, 1
        %s133 = smul.addr %s132, 64
        %s134 = scalar_lea.vmem [#allocation2], %s133
        // Predicated region
        $region25: #{tpu_custom_call.1} parent=23 // pred_check
          %p135 = pneg %p53
        $region26: #{tpu_custom_call.1} parent=23 // pred_check_branch
          %137 = sbr.rel (%p135) target = $region28
        $region27: #{tpu_custom_call.1} parent=23 // pred_region
          %138 = dma.done %s131, 1024
        $region28: #{tpu_custom_call.1} parent=23 // pred_fallthru
          _
        %s139 = sand.u32 %s40, 1
        %s140 = scalar_lea.sflag [#allocation3], %s139
        %s141 = sand.u32 %s40, 1
        %s142 = smul.addr %s141, 64
        %s143 = scalar_lea.vmem [#allocation2], %s142
        %p144 = pneg %p53
        %p145 = pneg %p50
        %p146 = pneg %p81
        %p147 = pneg %p78
        %s148 = sand.u32 %s68, 1
        %s149 = scalar_lea.sflag [#allocation4], %s148
        %s150 = sand.u32 %s68, 1
        %s151 = smul.addr %s150, 128
        %s152 = scalar_lea.vmem [#allocation5], %s151
        %s153 = smul.u32 2, %s23
        %s154 = smul.u32 16, %s23
        %v155 = vld [vmem:[%s134] sm:$0xff]
        %v156 = vld [vmem:[%s134 + $0x8] sm:$0xff]
        %s157 = scalar_lea.vmem %s134, 16 [#allocation2]
        %v158 = vld [vmem:[%s157] sm:$0xff]
        %v159 = vld [vmem:[%s157 + $0x8] sm:$0xff]
        %s160 = scalar_lea.vmem %s134, 32 [#allocation2]
        %v161 = vld [vmem:[%s160] sm:$0xff]
        %v162 = vld [vmem:[%s160 + $0x8] sm:$0xff]
        %s163 = scalar_lea.vmem %s134, 48 [#allocation2]
        %v164 = vld [vmem:[%s163] sm:$0xff]
        %v165 = vld [vmem:[%s163 + $0x8] sm:$0xff]
        %v166 = vlaneseq
        %v167 = vshrl.u32 %v166, 7
        %v168 = vsub.s32 0, %v167
        %v169 = vrot.slane %v155, %v168
        %171 = vbcast.lane.b32.xlu0 %v169, 256
        %v172 = vpop.permute.xlu0 %171
        %s174 = sor.u32 256, 8
        %175 = vbcast.lane.b32.xlu0 %v169, %s174
        %v176 = vpop.permute.xlu0 %175
        %v177 = vlaneseq
        %v178 = vshrl.u32 %v177, 7
        %v179 = vsub.s32 1, %v178
        %v180 = vrot.slane %v155, %v179
        %182 = vbcast.lane.b32.xlu0 %v180, 256
        %v183 = vpop.permute.xlu0 %182
        %s185 = sor.u32 256, 8
        %186 = vbcast.lane.b32.xlu0 %v180, %s185
        %v187 = vpop.permute.xlu0 %186
        %v188 = vlaneseq
        %v189 = vshrl.u32 %v188, 7
        %v190 = vsub.s32 2, %v189
        %v191 = vrot.slane %v155, %v190
        %193 = vbcast.lane.b32.xlu0 %v191, 256
        %v194 = vpop.permute.xlu0 %193
        %s196 = sor.u32 256, 8
        %197 = vbcast.lane.b32.xlu0 %v191, %s196
        %v198 = vpop.permute.xlu0 %197
        %v199 = vlaneseq
        %v200 = vshrl.u32 %v199, 7
        %v201 = vsub.s32 3, %v200
        %v202 = vrot.slane %v155, %v201
        %204 = vbcast.lane.b32.xlu0 %v202, 256
        %v205 = vpop.permute.xlu0 %204
        %s207 = sor.u32 256, 8
        %208 = vbcast.lane.b32.xlu0 %v202, %s207
        %v209 = vpop.permute.xlu0 %208
        %v210 = vlaneseq
        %v211 = vshrl.u32 %v210, 7
        %v212 = vsub.s32 4, %v211
        %v213 = vrot.slane %v155, %v212
        %215 = vbcast.lane.b32.xlu0 %v213, 256
        %v216 = vpop.permute.xlu0 %215
        %s218 = sor.u32 256, 8
        %219 = vbcast.lane.b32.xlu0 %v213, %s218
        %v220 = vpop.permute.xlu0 %219
        %v221 = vlaneseq
        %v222 = vshrl.u32 %v221, 7
        %v223 = vsub.s32 5, %v222
        %v224 = vrot.slane %v155, %v223
        %226 = vbcast.lane.b32.xlu0 %v224, 256
        %v227 = vpop.permute.xlu0 %226
        %s229 = sor.u32 256, 8
        %230 = vbcast.lane.b32.xlu0 %v224, %s229
        %v231 = vpop.permute.xlu0 %230
        %v232 = vlaneseq
        %v233 = vshrl.u32 %v232, 7
        %v234 = vsub.s32 6, %v233
        %v235 = vrot.slane %v155, %v234
        %237 = vbcast.lane.b32.xlu0 %v235, 256
        %v238 = vpop.permute.xlu0 %237
        %s240 = sor.u32 256, 8
        %241 = vbcast.lane.b32.xlu0 %v235, %s240
        %v242 = vpop.permute.xlu0 %241
        %v243 = vlaneseq
        %v244 = vshrl.u32 %v243, 7
        %v245 = vsub.s32 7, %v244
        %v246 = vrot.slane %v155, %v245
        %248 = vbcast.lane.b32.xlu0 %v246, 256
        %v249 = vpop.permute.xlu0 %248
        %s251 = sor.u32 256, 8
        %252 = vbcast.lane.b32.xlu0 %v246, %s251
        %v253 = vpop.permute.xlu0 %252
        %v254 = vlaneseq
        %v255 = vshrl.u32 %v254, 7
        %v256 = vsub.s32 0, %v255
        %v257 = vrot.slane %v156, %v256
        %259 = vbcast.lane.b32.xlu0 %v257, 256
        %v260 = vpop.permute.xlu0 %259
        %s262 = sor.u32 256, 8
        %263 = vbcast.lane.b32.xlu0 %v257, %s262
        %v264 = vpop.permute.xlu0 %263
        %v265 = vlaneseq
        %v266 = vshrl.u32 %v265, 7
        %v267 = vsub.s32 1, %v266
        %v268 = vrot.slane %v156, %v267
        %270 = vbcast.lane.b32.xlu0 %v268, 256
        %v271 = vpop.permute.xlu0 %270
        %s273 = sor.u32 256, 8
        %274 = vbcast.lane.b32.xlu0 %v268, %s273
        %v275 = vpop.permute.xlu0 %274
        %v276 = vlaneseq
        %v277 = vshrl.u32 %v276, 7
        %v278 = vsub.s32 2, %v277
        %v279 = vrot.slane %v156, %v278
        %281 = vbcast.lane.b32.xlu0 %v279, 256
        %v282 = vpop.permute.xlu0 %281
        %s284 = sor.u32 256, 8
        %285 = vbcast.lane.b32.xlu0 %v279, %s284
        %v286 = vpop.permute.xlu0 %285
        %v287 = vlaneseq
        %v288 = vshrl.u32 %v287, 7
        %v289 = vsub.s32 3, %v288
        %v290 = vrot.slane %v156, %v289
        %292 = vbcast.lane.b32.xlu0 %v290, 256
        %v293 = vpop.permute.xlu0 %292
        %s295 = sor.u32 256, 8
        %296 = vbcast.lane.b32.xlu0 %v290, %s295
        %v297 = vpop.permute.xlu0 %296
        %v298 = vlaneseq
        %v299 = vshrl.u32 %v298, 7
        %v300 = vsub.s32 4, %v299
        %v301 = vrot.slane %v156, %v300
        %303 = vbcast.lane.b32.xlu0 %v301, 256
        %v304 = vpop.permute.xlu0 %303
        %s306 = sor.u32 256, 8
        %307 = vbcast.lane.b32.xlu0 %v301, %s306
        %v308 = vpop.permute.xlu0 %307
        %v309 = vlaneseq
        %v310 = vshrl.u32 %v309, 7
        %v311 = vsub.s32 5, %v310
        %v312 = vrot.slane %v156, %v311
        %314 = vbcast.lane.b32.xlu0 %v312, 256
        %v315 = vpop.permute.xlu0 %314
        %s317 = sor.u32 256, 8
        %318 = vbcast.lane.b32.xlu0 %v312, %s317
        %v319 = vpop.permute.xlu0 %318
        %v320 = vlaneseq
        %v321 = vshrl.u32 %v320, 7
        %v322 = vsub.s32 6, %v321
        %v323 = vrot.slane %v156, %v322
        %325 = vbcast.lane.b32.xlu0 %v323, 256
        %v326 = vpop.permute.xlu0 %325
        %s328 = sor.u32 256, 8
        %329 = vbcast.lane.b32.xlu0 %v323, %s328
        %v330 = vpop.permute.xlu0 %329
        %v331 = vlaneseq
        %v332 = vshrl.u32 %v331, 7
        %v333 = vsub.s32 7, %v332
        %v334 = vrot.slane %v156, %v333
        %336 = vbcast.lane.b32.xlu0 %v334, 256
        %v337 = vpop.permute.xlu0 %336
        %s339 = sor.u32 256, 8
        %340 = vbcast.lane.b32.xlu0 %v334, %s339
        %v341 = vpop.permute.xlu0 %340
        %v342 = vcombine.low %v172, %v194
        %v343 = vcombine.high %v172, %v194
        %v345 = vunpack.c.l.s4 1983009808
        %v346 = vunpack.c.0.s8 %v345
        %v347 = vlaneseq
        %v348 = vshrl.u32 %v347, 7
        %v349 = vsub.s32 %v346, %v348
        %v350 = vrot.slane %v342, %v349
        %v352 = vunpack.c.l.s4 1983009808
        %v353 = vunpack.c.0.s8 %v352
        %v354 = vlaneseq
        %v355 = vshrl.u32 %v354, 7
        %v356 = vsub.s32 %v353, %v355
        %v357 = vrot.slane %v343, %v356
        %v358 = vcombine.low %v183, %v205
        %v359 = vcombine.high %v183, %v205
        %v361 = vunpack.c.l.s4 1983009808
        %v362 = vunpack.c.0.s8 %v361
        %v363 = vlaneseq
        %v364 = vshrl.u32 %v363, 7
        %v365 = vsub.s32 %v362, %v364
        %v366 = vrot.slane %v358, %v365
        %v368 = vunpack.c.l.s4 1983009808
        %v369 = vunpack.c.0.s8 %v368
        %v370 = vlaneseq
        %v371 = vshrl.u32 %v370, 7
        %v372 = vsub.s32 %v369, %v371
        %v373 = vrot.slane %v359, %v372
        %v374 = vcombine.low %v216, %v238
        %v375 = vcombine.high %v216, %v238
        %v377 = vunpack.c.l.s4 1983009808
        %v378 = vunpack.c.0.s8 %v377
        %v379 = vlaneseq
        %v380 = vshrl.u32 %v379, 7
        %v381 = vsub.s32 %v378, %v380
        %v382 = vrot.slane %v374, %v381
        %v384 = vunpack.c.l.s4 1983009808
        %v385 = vunpack.c.0.s8 %v384
        %v386 = vlaneseq
        %v387 = vshrl.u32 %v386, 7
        %v388 = vsub.s32 %v385, %v387
        %v389 = vrot.slane %v375, %v388
        %v390 = vcombine.low %v227, %v249
        %v391 = vcombine.high %v227, %v249
        %v393 = vunpack.c.l.s4 1983009808
        %v394 = vunpack.c.0.s8 %v393
        %v395 = vlaneseq
        %v396 = vshrl.u32 %v395, 7
        %v397 = vsub.s32 %v394, %v396
        %v398 = vrot.slane %v390, %v397
        %v400 = vunpack.c.l.s4 1983009808
        %v401 = vunpack.c.0.s8 %v400
        %v402 = vlaneseq
        %v403 = vshrl.u32 %v402, 7
        %v404 = vsub.s32 %v401, %v403
        %v405 = vrot.slane %v391, %v404
        %v406 = vcombine.low %v350, %v366
        %v407 = vcombine.high %v350, %v366
        %v409 = vunpack.c.l.s4 1934713408
        %v410 = vunpack.c.0.s8 %v409
        %v411 = vlaneseq
        %v412 = vshrl.u32 %v411, 7
        %v413 = vsub.s32 %v410, %v412
        %v414 = vrot.slane %v406, %v413
        %v416 = vunpack.c.l.s4 1934713408
        %v417 = vunpack.c.0.s8 %v416
        %v418 = vlaneseq
        %v419 = vshrl.u32 %v418, 7
        %v420 = vsub.s32 %v417, %v419
        %v421 = vrot.slane %v407, %v420
        %v422 = vcombine.low %v357, %v373
        %v423 = vcombine.high %v357, %v373
        %v425 = vunpack.c.l.s4 1934713408
        %v426 = vunpack.c.0.s8 %v425
        %v427 = vlaneseq
        %v428 = vshrl.u32 %v427, 7
        %v429 = vsub.s32 %v426, %v428
        %v430 = vrot.slane %v422, %v429
        %v432 = vunpack.c.l.s4 1934713408
        %v433 = vunpack.c.0.s8 %v432
        %v434 = vlaneseq
        %v435 = vshrl.u32 %v434, 7
        %v436 = vsub.s32 %v433, %v435
        %v437 = vrot.slane %v423, %v436
        %v438 = vcombine.low %v382, %v398
        %v439 = vcombine.high %v382, %v398
        %v441 = vunpack.c.l.s4 1934713408
        %v442 = vunpack.c.0.s8 %v441
        %v443 = vlaneseq
        %v444 = vshrl.u32 %v443, 7
        %v445 = vsub.s32 %v442, %v444
        %v446 = vrot.slane %v438, %v445
        %v448 = vunpack.c.l.s4 1934713408
        %v449 = vunpack.c.0.s8 %v448
        %v450 = vlaneseq
        %v451 = vshrl.u32 %v450, 7
        %v452 = vsub.s32 %v449, %v451
        %v453 = vrot.slane %v439, %v452
        %v454 = vcombine.low %v389, %v405
        %v455 = vcombine.high %v389, %v405
        %v457 = vunpack.c.l.s4 1934713408
        %v458 = vunpack.c.0.s8 %v457
        %v459 = vlaneseq
        %v460 = vshrl.u32 %v459, 7
        %v461 = vsub.s32 %v458, %v460
        %v462 = vrot.slane %v454, %v461
        %v464 = vunpack.c.l.s4 1934713408
        %v465 = vunpack.c.0.s8 %v464
        %v466 = vlaneseq
        %v467 = vshrl.u32 %v466, 7
        %v468 = vsub.s32 %v465, %v467
        %v469 = vrot.slane %v455, %v468
        %v470 = vcombine.low %v414, %v446
        %v471 = vcombine.high %v414, %v446
        %v472 = vcombine.low %v421, %v453
        %v473 = vcombine.high %v421, %v453
        %v474 = vcombine.low %v430, %v462
        %v475 = vcombine.high %v430, %v462
        %v476 = vcombine.low %v437, %v469
        %v477 = vcombine.high %v437, %v469
        %v478 = vcombine.low %v260, %v282
        %v479 = vcombine.high %v260, %v282
        %v481 = vunpack.c.l.s4 1983009808
        %v482 = vunpack.c.0.s8 %v481
        %v483 = vlaneseq
        %v484 = vshrl.u32 %v483, 7
        %v485 = vsub.s32 %v482, %v484
        %v486 = vrot.slane %v478, %v485
        %v488 = vunpack.c.l.s4 1983009808
        %v489 = vunpack.c.0.s8 %v488
        %v490 = vlaneseq
        %v491 = vshrl.u32 %v490, 7
        %v492 = vsub.s32 %v489, %v491
        %v493 = vrot.slane %v479, %v492
        %v494 = vcombine.low %v271, %v293
        %v495 = vcombine.high %v271, %v293
        %v497 = vunpack.c.l.s4 1983009808
        %v498 = vunpack.c.0.s8 %v497
        %v499 = vlaneseq
        %v500 = vshrl.u32 %v499, 7
        %v501 = vsub.s32 %v498, %v500
        %v502 = vrot.slane %v494, %v501
        %v504 = vunpack.c.l.s4 1983009808
        %v505 = vunpack.c.0.s8 %v504
        %v506 = vlaneseq
        %v507 = vshrl.u32 %v506, 7
        %v508 = vsub.s32 %v505, %v507
        %v509 = vrot.slane %v495, %v508
        %v510 = vcombine.low %v304, %v326
        %v511 = vcombine.high %v304, %v326
        %v513 = vunpack.c.l.s4 1983009808
        %v514 = vunpack.c.0.s8 %v513
        %v515 = vlaneseq
        %v516 = vshrl.u32 %v515, 7
        %v517 = vsub.s32 %v514, %v516
        %v518 = vrot.slane %v510, %v517
        %v520 = vunpack.c.l.s4 1983009808
        %v521 = vunpack.c.0.s8 %v520
        %v522 = vlaneseq
        %v523 = vshrl.u32 %v522, 7
        %v524 = vsub.s32 %v521, %v523
        %v525 = vrot.slane %v511, %v524
        %v526 = vcombine.low %v315, %v337
        %v527 = vcombine.high %v315, %v337
        %v529 = vunpack.c.l.s4 1983009808
        %v530 = vunpack.c.0.s8 %v529
        %v531 = vlaneseq
        %v532 = vshrl.u32 %v531, 7
        %v533 = vsub.s32 %v530, %v532
        %v534 = vrot.slane %v526, %v533
        %v536 = vunpack.c.l.s4 1983009808
        %v537 = vunpack.c.0.s8 %v536
        %v538 = vlaneseq
        %v539 = vshrl.u32 %v538, 7
        %v540 = vsub.s32 %v537, %v539
        %v541 = vrot.slane %v527, %v540
        %v542 = vcombine.low %v486, %v502
        %v543 = vcombine.high %v486, %v502
        %v545 = vunpack.c.l.s4 1934713408
        %v546 = vunpack.c.0.s8 %v545
        %v547 = vlaneseq
        %v548 = vshrl.u32 %v547, 7
        %v549 = vsub.s32 %v546, %v548
        %v550 = vrot.slane %v542, %v549
        %v552 = vunpack.c.l.s4 1934713408
        %v553 = vunpack.c.0.s8 %v552
        %v554 = vlaneseq
        %v555 = vshrl.u32 %v554, 7
        %v556 = vsub.s32 %v553, %v555
        %v557 = vrot.slane %v543, %v556
        %v558 = vcombine.low %v493, %v509
        %v559 = vcombine.high %v493, %v509
        %v561 = vunpack.c.l.s4 1934713408
        %v562 = vunpack.c.0.s8 %v561
        %v563 = vlaneseq
        %v564 = vshrl.u32 %v563, 7
        %v565 = vsub.s32 %v562, %v564
        %v566 = vrot.slane %v558, %v565
        %v568 = vunpack.c.l.s4 1934713408
        %v569 = vunpack.c.0.s8 %v568
        %v570 = vlaneseq
        %v571 = vshrl.u32 %v570, 7
        %v572 = vsub.s32 %v569, %v571
        %v573 = vrot.slane %v559, %v572
        %v574 = vcombine.low %v518, %v534
        %v575 = vcombine.high %v518, %v534
        %v577 = vunpack.c.l.s4 1934713408
        %v578 = vunpack.c.0.s8 %v577
        %v579 = vlaneseq
        %v580 = vshrl.u32 %v579, 7
        %v581 = vsub.s32 %v578, %v580
        %v582 = vrot.slane %v574, %v581
        %v584 = vunpack.c.l.s4 1934713408
        %v585 = vunpack.c.0.s8 %v584
        %v586 = vlaneseq
        %v587 = vshrl.u32 %v586, 7
        %v588 = vsub.s32 %v585, %v587
        %v589 = vrot.slane %v575, %v588
        %v590 = vcombine.low %v525, %v541
        %v591 = vcombine.high %v525, %v541
        %v593 = vunpack.c.l.s4 1934713408
        %v594 = vunpack.c.0.s8 %v593
        %v595 = vlaneseq
        %v596 = vshrl.u32 %v595, 7
        %v597 = vsub.s32 %v594, %v596
        %v598 = vrot.slane %v590, %v597
        %v600 = vunpack.c.l.s4 1934713408
        %v601 = vunpack.c.0.s8 %v600
        %v602 = vlaneseq
        %v603 = vshrl.u32 %v602, 7
        %v604 = vsub.s32 %v601, %v603
        %v605 = vrot.slane %v591, %v604
        %v606 = vcombine.low %v550, %v582
        %v607 = vcombine.high %v550, %v582
        %v608 = vcombine.low %v557, %v589
        %v609 = vcombine.high %v557, %v589
        %v610 = vcombine.low %v566, %v598
        %v611 = vcombine.high %v566, %v598
        %v612 = vcombine.low %v573, %v605
        %v613 = vcombine.high %v573, %v605
        %v614 = vcombine.low %v176, %v198
        %v615 = vcombine.high %v176, %v198
        %v617 = vunpack.c.l.s4 1983009808
        %v618 = vunpack.c.0.s8 %v617
        %v619 = vlaneseq
        %v620 = vshrl.u32 %v619, 7
        %v621 = vsub.s32 %v618, %v620
        %v622 = vrot.slane %v614, %v621
        %v624 = vunpack.c.l.s4 1983009808
        %v625 = vunpack.c.0.s8 %v624
        %v626 = vlaneseq
        %v627 = vshrl.u32 %v626, 7
        %v628 = vsub.s32 %v625, %v627
        %v629 = vrot.slane %v615, %v628
        %v630 = vcombine.low %v187, %v209
        %v631 = vcombine.high %v187, %v209
        %v633 = vunpack.c.l.s4 1983009808
        %v634 = vunpack.c.0.s8 %v633
        %v635 = vlaneseq
        %v636 = vshrl.u32 %v635, 7
        %v637 = vsub.s32 %v634, %v636
        %v638 = vrot.slane %v630, %v637
        %v640 = vunpack.c.l.s4 1983009808
        %v641 = vunpack.c.0.s8 %v640
        %v642 = vlaneseq
        %v643 = vshrl.u32 %v642, 7
        %v644 = vsub.s32 %v641, %v643
        %v645 = vrot.slane %v631, %v644
        %v646 = vcombine.low %v220, %v242
        %v647 = vcombine.high %v220, %v242
        %v649 = vunpack.c.l.s4 1983009808
        %v650 = vunpack.c.0.s8 %v649
        %v651 = vlaneseq
        %v652 = vshrl.u32 %v651, 7
        %v653 = vsub.s32 %v650, %v652
        %v654 = vrot.slane %v646, %v653
        %v656 = vunpack.c.l.s4 1983009808
        %v657 = vunpack.c.0.s8 %v656
        %v658 = vlaneseq
        %v659 = vshrl.u32 %v658, 7
        %v660 = vsub.s32 %v657, %v659
        %v661 = vrot.slane %v647, %v660
        %v662 = vcombine.low %v231, %v253
        %v663 = vcombine.high %v231, %v253
        %v665 = vunpack.c.l.s4 1983009808
        %v666 = vunpack.c.0.s8 %v665
        %v667 = vlaneseq
        %v668 = vshrl.u32 %v667, 7
        %v669 = vsub.s32 %v666, %v668
        %v670 = vrot.slane %v662, %v669
        %v672 = vunpack.c.l.s4 1983009808
        %v673 = vunpack.c.0.s8 %v672
        %v674 = vlaneseq
        %v675 = vshrl.u32 %v674, 7
        %v676 = vsub.s32 %v673, %v675
        %v677 = vrot.slane %v663, %v676
        %v678 = vcombine.low %v622, %v638
        %v679 = vcombine.high %v622, %v638
        %v681 = vunpack.c.l.s4 1934713408
        %v682 = vunpack.c.0.s8 %v681
        %v683 = vlaneseq
        %v684 = vshrl.u32 %v683, 7
        %v685 = vsub.s32 %v682, %v684
        %v686 = vrot.slane %v678, %v685
        %v688 = vunpack.c.l.s4 1934713408
        %v689 = vunpack.c.0.s8 %v688
        %v690 = vlaneseq
        %v691 = vshrl.u32 %v690, 7
        %v692 = vsub.s32 %v689, %v691
        %v693 = vrot.slane %v679, %v692
        %v694 = vcombine.low %v629, %v645
        %v695 = vcombine.high %v629, %v645
        %v697 = vunpack.c.l.s4 1934713408
        %v698 = vunpack.c.0.s8 %v697
        %v699 = vlaneseq
        %v700 = vshrl.u32 %v699, 7
        %v701 = vsub.s32 %v698, %v700
        %v702 = vrot.slane %v694, %v701
        %v704 = vunpack.c.l.s4 1934713408
        %v705 = vunpack.c.0.s8 %v704
        %v706 = vlaneseq
        %v707 = vshrl.u32 %v706, 7
        %v708 = vsub.s32 %v705, %v707
        %v709 = vrot.slane %v695, %v708
        %v710 = vcombine.low %v654, %v670
        %v711 = vcombine.high %v654, %v670
        %v713 = vunpack.c.l.s4 1934713408
        %v714 = vunpack.c.0.s8 %v713
        %v715 = vlaneseq
        %v716 = vshrl.u32 %v715, 7
        %v717 = vsub.s32 %v714, %v716
        %v718 = vrot.slane %v710, %v717
        %v720 = vunpack.c.l.s4 1934713408
        %v721 = vunpack.c.0.s8 %v720
        %v722 = vlaneseq
        %v723 = vshrl.u32 %v722, 7
        %v724 = vsub.s32 %v721, %v723
        %v725 = vrot.slane %v711, %v724
        %v726 = vcombine.low %v661, %v677
        %v727 = vcombine.high %v661, %v677
        %v729 = vunpack.c.l.s4 1934713408
        %v730 = vunpack.c.0.s8 %v729
        %v731 = vlaneseq
        %v732 = vshrl.u32 %v731, 7
        %v733 = vsub.s32 %v730, %v732
        %v734 = vrot.slane %v726, %v733
        %v736 = vunpack.c.l.s4 1934713408
        %v737 = vunpack.c.0.s8 %v736
        %v738 = vlaneseq
        %v739 = vshrl.u32 %v738, 7
        %v740 = vsub.s32 %v737, %v739
        %v741 = vrot.slane %v727, %v740
        %v742 = vcombine.low %v686, %v718
        %v743 = vcombine.high %v686, %v718
        %v744 = vcombine.low %v693, %v725
        %v745 = vcombine.high %v693, %v725
        %v746 = vcombine.low %v702, %v734
        %v747 = vcombine.high %v702, %v734
        %v748 = vcombine.low %v709, %v741
        %v749 = vcombine.high %v709, %v741
        %v750 = vcombine.low %v264, %v286
        %v751 = vcombine.high %v264, %v286
        %v753 = vunpack.c.l.s4 1983009808
        %v754 = vunpack.c.0.s8 %v753
        %v755 = vlaneseq
        %v756 = vshrl.u32 %v755, 7
        %v757 = vsub.s32 %v754, %v756
        %v758 = vrot.slane %v750, %v757
        %v760 = vunpack.c.l.s4 1983009808
        %v761 = vunpack.c.0.s8 %v760
        %v762 = vlaneseq
        %v763 = vshrl.u32 %v762, 7
        %v764 = vsub.s32 %v761, %v763
        %v765 = vrot.slane %v751, %v764
        %v766 = vcombine.low %v275, %v297
        %v767 = vcombine.high %v275, %v297
        %v769 = vunpack.c.l.s4 1983009808
        %v770 = vunpack.c.0.s8 %v769
        %v771 = vlaneseq
        %v772 = vshrl.u32 %v771, 7
        %v773 = vsub.s32 %v770, %v772
        %v774 = vrot.slane %v766, %v773
        %v776 = vunpack.c.l.s4 1983009808
        %v777 = vunpack.c.0.s8 %v776
        %v778 = vlaneseq
        %v779 = vshrl.u32 %v778, 7
        %v780 = vsub.s32 %v777, %v779
        %v781 = vrot.slane %v767, %v780
        %v782 = vcombine.low %v308, %v330
        %v783 = vcombine.high %v308, %v330
        %v785 = vunpack.c.l.s4 1983009808
        %v786 = vunpack.c.0.s8 %v785
        %v787 = vlaneseq
        %v788 = vshrl.u32 %v787, 7
        %v789 = vsub.s32 %v786, %v788
        %v790 = vrot.slane %v782, %v789
        %v792 = vunpack.c.l.s4 1983009808
        %v793 = vunpack.c.0.s8 %v792
        %v794 = vlaneseq
        %v795 = vshrl.u32 %v794, 7
        %v796 = vsub.s32 %v793, %v795
        %v797 = vrot.slane %v783, %v796
        %v798 = vcombine.low %v319, %v341
        %v799 = vcombine.high %v319, %v341
        %v801 = vunpack.c.l.s4 1983009808
        %v802 = vunpack.c.0.s8 %v801
        %v803 = vlaneseq
        %v804 = vshrl.u32 %v803, 7
        %v805 = vsub.s32 %v802, %v804
        %v806 = vrot.slane %v798, %v805
        %v808 = vunpack.c.l.s4 1983009808
        %v809 = vunpack.c.0.s8 %v808
        %v810 = vlaneseq
        %v811 = vshrl.u32 %v810, 7
        %v812 = vsub.s32 %v809, %v811
        %v813 = vrot.slane %v799, %v812
        %v814 = vcombine.low %v758, %v774
        %v815 = vcombine.high %v758, %v774
        %v817 = vunpack.c.l.s4 1934713408
        %v818 = vunpack.c.0.s8 %v817
        %v819 = vlaneseq
        %v820 = vshrl.u32 %v819, 7
        %v821 = vsub.s32 %v818, %v820
        %v822 = vrot.slane %v814, %v821
        %v824 = vunpack.c.l.s4 1934713408
        %v825 = vunpack.c.0.s8 %v824
        %v826 = vlaneseq
        %v827 = vshrl.u32 %v826, 7
        %v828 = vsub.s32 %v825, %v827
        %v829 = vrot.slane %v815, %v828
        %v830 = vcombine.low %v765, %v781
        %v831 = vcombine.high %v765, %v781
        %v833 = vunpack.c.l.s4 1934713408
        %v834 = vunpack.c.0.s8 %v833
        %v835 = vlaneseq
        %v836 = vshrl.u32 %v835, 7
        %v837 = vsub.s32 %v834, %v836
        %v838 = vrot.slane %v830, %v837
        %v840 = vunpack.c.l.s4 1934713408
        %v841 = vunpack.c.0.s8 %v840
        %v842 = vlaneseq
        %v843 = vshrl.u32 %v842, 7
        %v844 = vsub.s32 %v841, %v843
        %v845 = vrot.slane %v831, %v844
        %v846 = vcombine.low %v790, %v806
        %v847 = vcombine.high %v790, %v806
        %v849 = vunpack.c.l.s4 1934713408
        %v850 = vunpack.c.0.s8 %v849
        %v851 = vlaneseq
        %v852 = vshrl.u32 %v851, 7
        %v853 = vsub.s32 %v850, %v852
        %v854 = vrot.slane %v846, %v853
        %v856 = vunpack.c.l.s4 1934713408
        %v857 = vunpack.c.0.s8 %v856
        %v858 = vlaneseq
        %v859 = vshrl.u32 %v858, 7
        %v860 = vsub.s32 %v857, %v859
        %v861 = vrot.slane %v847, %v860
        %v862 = vcombine.low %v797, %v813
        %v863 = vcombine.high %v797, %v813
        %v865 = vunpack.c.l.s4 1934713408
        %v866 = vunpack.c.0.s8 %v865
        %v867 = vlaneseq
        %v868 = vshrl.u32 %v867, 7
        %v869 = vsub.s32 %v866, %v868
        %v870 = vrot.slane %v862, %v869
        %v872 = vunpack.c.l.s4 1934713408
        %v873 = vunpack.c.0.s8 %v872
        %v874 = vlaneseq
        %v875 = vshrl.u32 %v874, 7
        %v876 = vsub.s32 %v873, %v875
        %v877 = vrot.slane %v863, %v876
        %v878 = vcombine.low %v822, %v854
        %v879 = vcombine.high %v822, %v854
        %v880 = vcombine.low %v829, %v861
        %v881 = vcombine.high %v829, %v861
        %v882 = vcombine.low %v838, %v870
        %v883 = vcombine.high %v838, %v870
        %v884 = vcombine.low %v845, %v877
        %v885 = vcombine.high %v845, %v877
        %888 = vrot.lane.b32.xlu0 %v471, 8
        %v889 = vpop.permute.xlu0 %888
        %890 = vrot.lane.b32.xlu0 %v607, 8
        %v891 = vpop.permute.xlu0 %890
        %896 = vrot.lane.b32.xlu0 %v472, 16
        %v897 = vpop.permute.xlu0 %896
        %898 = vrot.lane.b32.xlu0 %v608, 16
        %v899 = vpop.permute.xlu0 %898
        %904 = vrot.lane.b32.xlu0 %v473, 24
        %v905 = vpop.permute.xlu0 %904
        %906 = vrot.lane.b32.xlu0 %v609, 24
        %v907 = vpop.permute.xlu0 %906
        %912 = vrot.lane.b32.xlu0 %v474, 32
        %v913 = vpop.permute.xlu0 %912
        %914 = vrot.lane.b32.xlu0 %v610, 32
        %v915 = vpop.permute.xlu0 %914
        %920 = vrot.lane.b32.xlu0 %v475, 40
        %v921 = vpop.permute.xlu0 %920
        %922 = vrot.lane.b32.xlu0 %v611, 40
        %v923 = vpop.permute.xlu0 %922
        %928 = vrot.lane.b32.xlu0 %v476, 48
        %v929 = vpop.permute.xlu0 %928
        %930 = vrot.lane.b32.xlu0 %v612, 48
        %v931 = vpop.permute.xlu0 %930
        %936 = vrot.lane.b32.xlu0 %v477, 56
        %v937 = vpop.permute.xlu0 %936
        %938 = vrot.lane.b32.xlu0 %v613, 56
        %v939 = vpop.permute.xlu0 %938
        %944 = vrot.lane.b32.xlu0 %v742, 64
        %v945 = vpop.permute.xlu0 %944
        %946 = vrot.lane.b32.xlu0 %v878, 64
        %v947 = vpop.permute.xlu0 %946
        %952 = vrot.lane.b32.xlu0 %v743, 72
        %v953 = vpop.permute.xlu0 %952
        %954 = vrot.lane.b32.xlu0 %v879, 72
        %v955 = vpop.permute.xlu0 %954
        %960 = vrot.lane.b32.xlu0 %v744, 80
        %v961 = vpop.permute.xlu0 %960
        %962 = vrot.lane.b32.xlu0 %v880, 80
        %v963 = vpop.permute.xlu0 %962
        %968 = vrot.lane.b32.xlu0 %v745, 88
        %v969 = vpop.permute.xlu0 %968
        %970 = vrot.lane.b32.xlu0 %v881, 88
        %v971 = vpop.permute.xlu0 %970
        %976 = vrot.lane.b32.xlu0 %v746, 96
        %v977 = vpop.permute.xlu0 %976
        %978 = vrot.lane.b32.xlu0 %v882, 96
        %v979 = vpop.permute.xlu0 %978
        %984 = vrot.lane.b32.xlu0 %v747, 104
        %v985 = vpop.permute.xlu0 %984
        %986 = vrot.lane.b32.xlu0 %v883, 104
        %v987 = vpop.permute.xlu0 %986
        %992 = vrot.lane.b32.xlu0 %v748, 112
        %v993 = vpop.permute.xlu0 %992
        %994 = vrot.lane.b32.xlu0 %v884, 112
        %v995 = vpop.permute.xlu0 %994
        %1000 = vrot.lane.b32.xlu0 %v749, 120
        %v1001 = vpop.permute.xlu0 %1000
        %1002 = vrot.lane.b32.xlu0 %v885, 120
        %v1003 = vpop.permute.xlu0 %1002
        %vm1006 = vcmask 64512
        %v1007 = vsel %vm1006, %v470, %v889
        %v1008 = vsel %vm1006, %v606, %v891
        %vm1009 = vcmask 130048
        %v1010 = vsel %vm1009, %v1007, %v897
        %v1011 = vsel %vm1009, %v1008, %v899
        %vm1012 = vcmask 195584
        %v1013 = vsel %vm1012, %v1010, %v905
        %v1014 = vsel %vm1012, %v1011, %v907
        %vm1015 = vcmask 261120
        %v1016 = vsel %vm1015, %v1013, %v913
        %v1017 = vsel %vm1015, %v1014, %v915
        %vm1018 = vcmask 326656
        %v1019 = vsel %vm1018, %v1016, %v921
        %v1020 = vsel %vm1018, %v1017, %v923
        %vm1021 = vcmask 392192
        %v1022 = vsel %vm1021, %v1019, %v929
        %v1023 = vsel %vm1021, %v1020, %v931
        %vm1024 = vcmask 457728
        %v1025 = vsel %vm1024, %v1022, %v937
        %v1026 = vsel %vm1024, %v1023, %v939
        %vm1027 = vcmask 523264
        %v1028 = vsel %vm1027, %v1025, %v945
        %v1029 = vsel %vm1027, %v1026, %v947
        %vm1030 = vcmask 588800
        %v1031 = vsel %vm1030, %v1028, %v953
        %v1032 = vsel %vm1030, %v1029, %v955
        %vm1033 = vcmask 654336
        %v1034 = vsel %vm1033, %v1031, %v961
        %v1035 = vsel %vm1033, %v1032, %v963
        %vm1036 = vcmask 719872
        %v1037 = vsel %vm1036, %v1034, %v969
        %v1038 = vsel %vm1036, %v1035, %v971
        %vm1039 = vcmask 785408
        %v1040 = vsel %vm1039, %v1037, %v977
        %v1041 = vsel %vm1039, %v1038, %v979
        %vm1042 = vcmask 850944
        %v1043 = vsel %vm1042, %v1040, %v985
        %v1044 = vsel %vm1042, %v1041, %v987
        %vm1045 = vcmask 916480
        %v1046 = vsel %vm1045, %v1043, %v993
        %v1047 = vsel %vm1045, %v1044, %v995
        %vm1048 = vcmask 982016
        %v1049 = vsel %vm1048, %v1046, %v1001
        %v1050 = vsel %vm1048, %v1047, %v1003
        %v1051 = vlaneseq
        %v1052 = vshrl.u32 %v1051, 7
        %v1053 = vsub.s32 0, %v1052
        %v1054 = vrot.slane %v158, %v1053
        %1056 = vbcast.lane.b32.xlu0 %v1054, 256
        %v1057 = vpop.permute.xlu0 %1056
        %s1059 = sor.u32 256, 8
        %1060 = vbcast.lane.b32.xlu0 %v1054, %s1059
        %v1061 = vpop.permute.xlu0 %1060
        %v1062 = vlaneseq
        %v1063 = vshrl.u32 %v1062, 7
        %v1064 = vsub.s32 1, %v1063
        %v1065 = vrot.slane %v158, %v1064
        %1067 = vbcast.lane.b32.xlu0 %v1065, 256
        %v1068 = vpop.permute.xlu0 %1067
        %s1070 = sor.u32 256, 8
        %1071 = vbcast.lane.b32.xlu0 %v1065, %s1070
        %v1072 = vpop.permute.xlu0 %1071
        %v1073 = vlaneseq
        %v1074 = vshrl.u32 %v1073, 7
        %v1075 = vsub.s32 2, %v1074
        %v1076 = vrot.slane %v158, %v1075
        %1078 = vbcast.lane.b32.xlu0 %v1076, 256
        %v1079 = vpop.permute.xlu0 %1078
        %s1081 = sor.u32 256, 8
        %1082 = vbcast.lane.b32.xlu0 %v1076, %s1081
        %v1083 = vpop.permute.xlu0 %1082
        %v1084 = vlaneseq
        %v1085 = vshrl.u32 %v1084, 7
        %v1086 = vsub.s32 3, %v1085
        %v1087 = vrot.slane %v158, %v1086
        %1089 = vbcast.lane.b32.xlu0 %v1087, 256
        %v1090 = vpop.permute.xlu0 %1089
        %s1092 = sor.u32 256, 8
        %1093 = vbcast.lane.b32.xlu0 %v1087, %s1092
        %v1094 = vpop.permute.xlu0 %1093
        %v1095 = vlaneseq
        %v1096 = vshrl.u32 %v1095, 7
        %v1097 = vsub.s32 4, %v1096
        %v1098 = vrot.slane %v158, %v1097
        %1100 = vbcast.lane.b32.xlu0 %v1098, 256
        %v1101 = vpop.permute.xlu0 %1100
        %s1103 = sor.u32 256, 8
        %1104 = vbcast.lane.b32.xlu0 %v1098, %s1103
        %v1105 = vpop.permute.xlu0 %1104
        %v1106 = vlaneseq
        %v1107 = vshrl.u32 %v1106, 7
        %v1108 = vsub.s32 5, %v1107
        %v1109 = vrot.slane %v158, %v1108
        %1111 = vbcast.lane.b32.xlu0 %v1109, 256
        %v1112 = vpop.permute.xlu0 %1111
        %s1114 = sor.u32 256, 8
        %1115 = vbcast.lane.b32.xlu0 %v1109, %s1114
        %v1116 = vpop.permute.xlu0 %1115
        %v1117 = vlaneseq
        %v1118 = vshrl.u32 %v1117, 7
        %v1119 = vsub.s32 6, %v1118
        %v1120 = vrot.slane %v158, %v1119
        %1122 = vbcast.lane.b32.xlu0 %v1120, 256
        %v1123 = vpop.permute.xlu0 %1122
        %s1125 = sor.u32 256, 8
        %1126 = vbcast.lane.b32.xlu0 %v1120, %s1125
        %v1127 = vpop.permute.xlu0 %1126
        %v1128 = vlaneseq
        %v1129 = vshrl.u32 %v1128, 7
        %v1130 = vsub.s32 7, %v1129
        %v1131 = vrot.slane %v158, %v1130
        %1133 = vbcast.lane.b32.xlu0 %v1131, 256
        %v1134 = vpop.permute.xlu0 %1133
        %s1136 = sor.u32 256, 8
        %1137 = vbcast.lane.b32.xlu0 %v1131, %s1136
        %v1138 = vpop.permute.xlu0 %1137
        %v1139 = vlaneseq
        %v1140 = vshrl.u32 %v1139, 7
        %v1141 = vsub.s32 0, %v1140
        %v1142 = vrot.slane %v159, %v1141
        %1144 = vbcast.lane.b32.xlu0 %v1142, 256
        %v1145 = vpop.permute.xlu0 %1144
        %s1147 = sor.u32 256, 8
        %1148 = vbcast.lane.b32.xlu0 %v1142, %s1147
        %v1149 = vpop.permute.xlu0 %1148
        %v1150 = vlaneseq
        %v1151 = vshrl.u32 %v1150, 7
        %v1152 = vsub.s32 1, %v1151
        %v1153 = vrot.slane %v159, %v1152
        %1155 = vbcast.lane.b32.xlu0 %v1153, 256
        %v1156 = vpop.permute.xlu0 %1155
        %s1158 = sor.u32 256, 8
        %1159 = vbcast.lane.b32.xlu0 %v1153, %s1158
        %v1160 = vpop.permute.xlu0 %1159
        %v1161 = vlaneseq
        %v1162 = vshrl.u32 %v1161, 7
        %v1163 = vsub.s32 2, %v1162
        %v1164 = vrot.slane %v159, %v1163
        %1166 = vbcast.lane.b32.xlu0 %v1164, 256
        %v1167 = vpop.permute.xlu0 %1166
        %s1169 = sor.u32 256, 8
        %1170 = vbcast.lane.b32.xlu0 %v1164, %s1169
        %v1171 = vpop.permute.xlu0 %1170
        %v1172 = vlaneseq
        %v1173 = vshrl.u32 %v1172, 7
        %v1174 = vsub.s32 3, %v1173
        %v1175 = vrot.slane %v159, %v1174
        %1177 = vbcast.lane.b32.xlu0 %v1175, 256
        %v1178 = vpop.permute.xlu0 %1177
        %s1180 = sor.u32 256, 8
        %1181 = vbcast.lane.b32.xlu0 %v1175, %s1180
        %v1182 = vpop.permute.xlu0 %1181
        %v1183 = vlaneseq
        %v1184 = vshrl.u32 %v1183, 7
        %v1185 = vsub.s32 4, %v1184
        %v1186 = vrot.slane %v159, %v1185
        %1188 = vbcast.lane.b32.xlu0 %v1186, 256
        %v1189 = vpop.permute.xlu0 %1188
        %s1191 = sor.u32 256, 8
        %1192 = vbcast.lane.b32.xlu0 %v1186, %s1191
        %v1193 = vpop.permute.xlu0 %1192
        %v1194 = vlaneseq
        %v1195 = vshrl.u32 %v1194, 7
        %v1196 = vsub.s32 5, %v1195
        %v1197 = vrot.slane %v159, %v1196
        %1199 = vbcast.lane.b32.xlu0 %v1197, 256
        %v1200 = vpop.permute.xlu0 %1199
        %s1202 = sor.u32 256, 8
        %1203 = vbcast.lane.b32.xlu0 %v1197, %s1202
        %v1204 = vpop.permute.xlu0 %1203
        %v1205 = vlaneseq
        %v1206 = vshrl.u32 %v1205, 7
        %v1207 = vsub.s32 6, %v1206
        %v1208 = vrot.slane %v159, %v1207
        %1210 = vbcast.lane.b32.xlu0 %v1208, 256
        %v1211 = vpop.permute.xlu0 %1210
        %s1213 = sor.u32 256, 8
        %1214 = vbcast.lane.b32.xlu0 %v1208, %s1213
        %v1215 = vpop.permute.xlu0 %1214
        %v1216 = vlaneseq
        %v1217 = vshrl.u32 %v1216, 7
        %v1218 = vsub.s32 7, %v1217
        %v1219 = vrot.slane %v159, %v1218
        %1221 = vbcast.lane.b32.xlu0 %v1219, 256
        %v1222 = vpop.permute.xlu0 %1221
        %s1224 = sor.u32 256, 8
        %1225 = vbcast.lane.b32.xlu0 %v1219, %s1224
        %v1226 = vpop.permute.xlu0 %1225
        %v1227 = vcombine.low %v1057, %v1079
        %v1228 = vcombine.high %v1057, %v1079
        %v1230 = vunpack.c.l.s4 1983009808
        %v1231 = vunpack.c.0.s8 %v1230
        %v1232 = vlaneseq
        %v1233 = vshrl.u32 %v1232, 7
        %v1234 = vsub.s32 %v1231, %v1233
        %v1235 = vrot.slane %v1227, %v1234
        %v1237 = vunpack.c.l.s4 1983009808
        %v1238 = vunpack.c.0.s8 %v1237
        %v1239 = vlaneseq
        %v1240 = vshrl.u32 %v1239, 7
        %v1241 = vsub.s32 %v1238, %v1240
        %v1242 = vrot.slane %v1228, %v1241
        %v1243 = vcombine.low %v1068, %v1090
        %v1244 = vcombine.high %v1068, %v1090
        %v1246 = vunpack.c.l.s4 1983009808
        %v1247 = vunpack.c.0.s8 %v1246
        %v1248 = vlaneseq
        %v1249 = vshrl.u32 %v1248, 7
        %v1250 = vsub.s32 %v1247, %v1249
        %v1251 = vrot.slane %v1243, %v1250
        %v1253 = vunpack.c.l.s4 1983009808
        %v1254 = vunpack.c.0.s8 %v1253
        %v1255 = vlaneseq
        %v1256 = vshrl.u32 %v1255, 7
        %v1257 = vsub.s32 %v1254, %v1256
        %v1258 = vrot.slane %v1244, %v1257
        %v1259 = vcombine.low %v1101, %v1123
        %v1260 = vcombine.high %v1101, %v1123
        %v1262 = vunpack.c.l.s4 1983009808
        %v1263 = vunpack.c.0.s8 %v1262
        %v1264 = vlaneseq
        %v1265 = vshrl.u32 %v1264, 7
        %v1266 = vsub.s32 %v1263, %v1265
        %v1267 = vrot.slane %v1259, %v1266
        %v1269 = vunpack.c.l.s4 1983009808
        %v1270 = vunpack.c.0.s8 %v1269
        %v1271 = vlaneseq
        %v1272 = vshrl.u32 %v1271, 7
        %v1273 = vsub.s32 %v1270, %v1272
        %v1274 = vrot.slane %v1260, %v1273
        %v1275 = vcombine.low %v1112, %v1134
        %v1276 = vcombine.high %v1112, %v1134
        %v1278 = vunpack.c.l.s4 1983009808
        %v1279 = vunpack.c.0.s8 %v1278
        %v1280 = vlaneseq
        %v1281 = vshrl.u32 %v1280, 7
        %v1282 = vsub.s32 %v1279, %v1281
        %v1283 = vrot.slane %v1275, %v1282
        %v1285 = vunpack.c.l.s4 1983009808
        %v1286 = vunpack.c.0.s8 %v1285
        %v1287 = vlaneseq
        %v1288 = vshrl.u32 %v1287, 7
        %v1289 = vsub.s32 %v1286, %v1288
        %v1290 = vrot.slane %v1276, %v1289
        %v1291 = vcombine.low %v1235, %v1251
        %v1292 = vcombine.high %v1235, %v1251
        %v1294 = vunpack.c.l.s4 1934713408
        %v1295 = vunpack.c.0.s8 %v1294
        %v1296 = vlaneseq
        %v1297 = vshrl.u32 %v1296, 7
        %v1298 = vsub.s32 %v1295, %v1297
        %v1299 = vrot.slane %v1291, %v1298
        %v1301 = vunpack.c.l.s4 1934713408
        %v1302 = vunpack.c.0.s8 %v1301
        %v1303 = vlaneseq
        %v1304 = vshrl.u32 %v1303, 7
        %v1305 = vsub.s32 %v1302, %v1304
        %v1306 = vrot.slane %v1292, %v1305
        %v1307 = vcombine.low %v1242, %v1258
        %v1308 = vcombine.high %v1242, %v1258
        %v1310 = vunpack.c.l.s4 1934713408
        %v1311 = vunpack.c.0.s8 %v1310
        %v1312 = vlaneseq
        %v1313 = vshrl.u32 %v1312, 7
        %v1314 = vsub.s32 %v1311, %v1313
        %v1315 = vrot.slane %v1307, %v1314
        %v1317 = vunpack.c.l.s4 1934713408
        %v1318 = vunpack.c.0.s8 %v1317
        %v1319 = vlaneseq
        %v1320 = vshrl.u32 %v1319, 7
        %v1321 = vsub.s32 %v1318, %v1320
        %v1322 = vrot.slane %v1308, %v1321
        %v1323 = vcombine.low %v1267, %v1283
        %v1324 = vcombine.high %v1267, %v1283
        %v1326 = vunpack.c.l.s4 1934713408
        %v1327 = vunpack.c.0.s8 %v1326
        %v1328 = vlaneseq
        %v1329 = vshrl.u32 %v1328, 7
        %v1330 = vsub.s32 %v1327, %v1329
        %v1331 = vrot.slane %v1323, %v1330
        %v1333 = vunpack.c.l.s4 1934713408
        %v1334 = vunpack.c.0.s8 %v1333
        %v1335 = vlaneseq
        %v1336 = vshrl.u32 %v1335, 7
        %v1337 = vsub.s32 %v1334, %v1336
        %v1338 = vrot.slane %v1324, %v1337
        %v1339 = vcombine.low %v1274, %v1290
        %v1340 = vcombine.high %v1274, %v1290
        %v1342 = vunpack.c.l.s4 1934713408
        %v1343 = vunpack.c.0.s8 %v1342
        %v1344 = vlaneseq
        %v1345 = vshrl.u32 %v1344, 7
        %v1346 = vsub.s32 %v1343, %v1345
        %v1347 = vrot.slane %v1339, %v1346
        %v1349 = vunpack.c.l.s4 1934713408
        %v1350 = vunpack.c.0.s8 %v1349
        %v1351 = vlaneseq
        %v1352 = vshrl.u32 %v1351, 7
        %v1353 = vsub.s32 %v1350, %v1352
        %v1354 = vrot.slane %v1340, %v1353
        %v1355 = vcombine.low %v1299, %v1331
        %v1356 = vcombine.high %v1299, %v1331
        %v1357 = vcombine.low %v1306, %v1338
        %v1358 = vcombine.high %v1306, %v1338
        %v1359 = vcombine.low %v1315, %v1347
        %v1360 = vcombine.high %v1315, %v1347
        %v1361 = vcombine.low %v1322, %v1354
        %v1362 = vcombine.high %v1322, %v1354
        %v1363 = vcombine.low %v1145, %v1167
        %v1364 = vcombine.high %v1145, %v1167
        %v1366 = vunpack.c.l.s4 1983009808
        %v1367 = vunpack.c.0.s8 %v1366
        %v1368 = vlaneseq
        %v1369 = vshrl.u32 %v1368, 7
        %v1370 = vsub.s32 %v1367, %v1369
        %v1371 = vrot.slane %v1363, %v1370
        %v1373 = vunpack.c.l.s4 1983009808
        %v1374 = vunpack.c.0.s8 %v1373
        %v1375 = vlaneseq
        %v1376 = vshrl.u32 %v1375, 7
        %v1377 = vsub.s32 %v1374, %v1376
        %v1378 = vrot.slane %v1364, %v1377
        %v1379 = vcombine.low %v1156, %v1178
        %v1380 = vcombine.high %v1156, %v1178
        %v1382 = vunpack.c.l.s4 1983009808
        %v1383 = vunpack.c.0.s8 %v1382
        %v1384 = vlaneseq
        %v1385 = vshrl.u32 %v1384, 7
        %v1386 = vsub.s32 %v1383, %v1385
        %v1387 = vrot.slane %v1379, %v1386
        %v1389 = vunpack.c.l.s4 1983009808
        %v1390 = vunpack.c.0.s8 %v1389
        %v1391 = vlaneseq
        %v1392 = vshrl.u32 %v1391, 7
        %v1393 = vsub.s32 %v1390, %v1392
        %v1394 = vrot.slane %v1380, %v1393
        %v1395 = vcombine.low %v1189, %v1211
        %v1396 = vcombine.high %v1189, %v1211
        %v1398 = vunpack.c.l.s4 1983009808
        %v1399 = vunpack.c.0.s8 %v1398
        %v1400 = vlaneseq
        %v1401 = vshrl.u32 %v1400, 7
        %v1402 = vsub.s32 %v1399, %v1401
        %v1403 = vrot.slane %v1395, %v1402
        %v1405 = vunpack.c.l.s4 1983009808
        %v1406 = vunpack.c.0.s8 %v1405
        %v1407 = vlaneseq
        %v1408 = vshrl.u32 %v1407, 7
        %v1409 = vsub.s32 %v1406, %v1408
        %v1410 = vrot.slane %v1396, %v1409
        %v1411 = vcombine.low %v1200, %v1222
        %v1412 = vcombine.high %v1200, %v1222
        %v1414 = vunpack.c.l.s4 1983009808
        %v1415 = vunpack.c.0.s8 %v1414
        %v1416 = vlaneseq
        %v1417 = vshrl.u32 %v1416, 7
        %v1418 = vsub.s32 %v1415, %v1417
        %v1419 = vrot.slane %v1411, %v1418
        %v1421 = vunpack.c.l.s4 1983009808
        %v1422 = vunpack.c.0.s8 %v1421
        %v1423 = vlaneseq
        %v1424 = vshrl.u32 %v1423, 7
        %v1425 = vsub.s32 %v1422, %v1424
        %v1426 = vrot.slane %v1412, %v1425
        %v1427 = vcombine.low %v1371, %v1387
        %v1428 = vcombine.high %v1371, %v1387
        %v1430 = vunpack.c.l.s4 1934713408
        %v1431 = vunpack.c.0.s8 %v1430
        %v1432 = vlaneseq
        %v1433 = vshrl.u32 %v1432, 7
        %v1434 = vsub.s32 %v1431, %v1433
        %v1435 = vrot.slane %v1427, %v1434
        %v1437 = vunpack.c.l.s4 1934713408
        %v1438 = vunpack.c.0.s8 %v1437
        %v1439 = vlaneseq
        %v1440 = vshrl.u32 %v1439, 7
        %v1441 = vsub.s32 %v1438, %v1440
        %v1442 = vrot.slane %v1428, %v1441
        %v1443 = vcombine.low %v1378, %v1394
        %v1444 = vcombine.high %v1378, %v1394
        %v1446 = vunpack.c.l.s4 1934713408
        %v1447 = vunpack.c.0.s8 %v1446
        %v1448 = vlaneseq
        %v1449 = vshrl.u32 %v1448, 7
        %v1450 = vsub.s32 %v1447, %v1449
        %v1451 = vrot.slane %v1443, %v1450
        %v1453 = vunpack.c.l.s4 1934713408
        %v1454 = vunpack.c.0.s8 %v1453
        %v1455 = vlaneseq
        %v1456 = vshrl.u32 %v1455, 7
        %v1457 = vsub.s32 %v1454, %v1456
        %v1458 = vrot.slane %v1444, %v1457
        %v1459 = vcombine.low %v1403, %v1419
        %v1460 = vcombine.high %v1403, %v1419
        %v1462 = vunpack.c.l.s4 1934713408
        %v1463 = vunpack.c.0.s8 %v1462
        %v1464 = vlaneseq
        %v1465 = vshrl.u32 %v1464, 7
        %v1466 = vsub.s32 %v1463, %v1465
        %v1467 = vrot.slane %v1459, %v1466
        %v1469 = vunpack.c.l.s4 1934713408
        %v1470 = vunpack.c.0.s8 %v1469
        %v1471 = vlaneseq
        %v1472 = vshrl.u32 %v1471, 7
        %v1473 = vsub.s32 %v1470, %v1472
        %v1474 = vrot.slane %v1460, %v1473
        %v1475 = vcombine.low %v1410, %v1426
        %v1476 = vcombine.high %v1410, %v1426
        %v1478 = vunpack.c.l.s4 1934713408
        %v1479 = vunpack.c.0.s8 %v1478
        %v1480 = vlaneseq
        %v1481 = vshrl.u32 %v1480, 7
        %v1482 = vsub.s32 %v1479, %v1481
        %v1483 = vrot.slane %v1475, %v1482
        %v1485 = vunpack.c.l.s4 1934713408
        %v1486 = vunpack.c.0.s8 %v1485
        %v1487 = vlaneseq
        %v1488 = vshrl.u32 %v1487, 7
        %v1489 = vsub.s32 %v1486, %v1488
        %v1490 = vrot.slane %v1476, %v1489
        %v1491 = vcombine.low %v1435, %v1467
        %v1492 = vcombine.high %v1435, %v1467
        %v1493 = vcombine.low %v1442, %v1474
        %v1494 = vcombine.high %v1442, %v1474
        %v1495 = vcombine.low %v1451, %v1483
        %v1496 = vcombine.high %v1451, %v1483
        %v1497 = vcombine.low %v1458, %v1490
        %v1498 = vcombine.high %v1458, %v1490
        %v1499 = vcombine.low %v1061, %v1083
        %v1500 = vcombine.high %v1061, %v1083
        %v1502 = vunpack.c.l.s4 1983009808
        %v1503 = vunpack.c.0.s8 %v1502
        %v1504 = vlaneseq
        %v1505 = vshrl.u32 %v1504, 7
        %v1506 = vsub.s32 %v1503, %v1505
        %v1507 = vrot.slane %v1499, %v1506
        %v1509 = vunpack.c.l.s4 1983009808
        %v1510 = vunpack.c.0.s8 %v1509
        %v1511 = vlaneseq
        %v1512 = vshrl.u32 %v1511, 7
        %v1513 = vsub.s32 %v1510, %v1512
        %v1514 = vrot.slane %v1500, %v1513
        %v1515 = vcombine.low %v1072, %v1094
        %v1516 = vcombine.high %v1072, %v1094
        %v1518 = vunpack.c.l.s4 1983009808
        %v1519 = vunpack.c.0.s8 %v1518
        %v1520 = vlaneseq
        %v1521 = vshrl.u32 %v1520, 7
        %v1522 = vsub.s32 %v1519, %v1521
        %v1523 = vrot.slane %v1515, %v1522
        %v1525 = vunpack.c.l.s4 1983009808
        %v1526 = vunpack.c.0.s8 %v1525
        %v1527 = vlaneseq
        %v1528 = vshrl.u32 %v1527, 7
        %v1529 = vsub.s32 %v1526, %v1528
        %v1530 = vrot.slane %v1516, %v1529
        %v1531 = vcombine.low %v1105, %v1127
        %v1532 = vcombine.high %v1105, %v1127
        %v1534 = vunpack.c.l.s4 1983009808
        %v1535 = vunpack.c.0.s8 %v1534
        %v1536 = vlaneseq
        %v1537 = vshrl.u32 %v1536, 7
        %v1538 = vsub.s32 %v1535, %v1537
        %v1539 = vrot.slane %v1531, %v1538
        %v1541 = vunpack.c.l.s4 1983009808
        %v1542 = vunpack.c.0.s8 %v1541
        %v1543 = vlaneseq
        %v1544 = vshrl.u32 %v1543, 7
        %v1545 = vsub.s32 %v1542, %v1544
        %v1546 = vrot.slane %v1532, %v1545
        %v1547 = vcombine.low %v1116, %v1138
        %v1548 = vcombine.high %v1116, %v1138
        %v1550 = vunpack.c.l.s4 1983009808
        %v1551 = vunpack.c.0.s8 %v1550
        %v1552 = vlaneseq
        %v1553 = vshrl.u32 %v1552, 7
        %v1554 = vsub.s32 %v1551, %v1553
        %v1555 = vrot.slane %v1547, %v1554
        %v1557 = vunpack.c.l.s4 1983009808
        %v1558 = vunpack.c.0.s8 %v1557
        %v1559 = vlaneseq
        %v1560 = vshrl.u32 %v1559, 7
        %v1561 = vsub.s32 %v1558, %v1560
        %v1562 = vrot.slane %v1548, %v1561
        %v1563 = vcombine.low %v1507, %v1523
        %v1564 = vcombine.high %v1507, %v1523
        %v1566 = vunpack.c.l.s4 1934713408
        %v1567 = vunpack.c.0.s8 %v1566
        %v1568 = vlaneseq
        %v1569 = vshrl.u32 %v1568, 7
        %v1570 = vsub.s32 %v1567, %v1569
        %v1571 = vrot.slane %v1563, %v1570
        %v1573 = vunpack.c.l.s4 1934713408
        %v1574 = vunpack.c.0.s8 %v1573
        %v1575 = vlaneseq
        %v1576 = vshrl.u32 %v1575, 7
        %v1577 = vsub.s32 %v1574, %v1576
        %v1578 = vrot.slane %v1564, %v1577
        %v1579 = vcombine.low %v1514, %v1530
        %v1580 = vcombine.high %v1514, %v1530
        %v1582 = vunpack.c.l.s4 1934713408
        %v1583 = vunpack.c.0.s8 %v1582
        %v1584 = vlaneseq
        %v1585 = vshrl.u32 %v1584, 7
        %v1586 = vsub.s32 %v1583, %v1585
        %v1587 = vrot.slane %v1579, %v1586
        %v1589 = vunpack.c.l.s4 1934713408
        %v1590 = vunpack.c.0.s8 %v1589
        %v1591 = vlaneseq
        %v1592 = vshrl.u32 %v1591, 7
        %v1593 = vsub.s32 %v1590, %v1592
        %v1594 = vrot.slane %v1580, %v1593
        %v1595 = vcombine.low %v1539, %v1555
        %v1596 = vcombine.high %v1539, %v1555
        %v1598 = vunpack.c.l.s4 1934713408
        %v1599 = vunpack.c.0.s8 %v1598
        %v1600 = vlaneseq
        %v1601 = vshrl.u32 %v1600, 7
        %v1602 = vsub.s32 %v1599, %v1601
        %v1603 = vrot.slane %v1595, %v1602
        %v1605 = vunpack.c.l.s4 1934713408
        %v1606 = vunpack.c.0.s8 %v1605
        %v1607 = vlaneseq
        %v1608 = vshrl.u32 %v1607, 7
        %v1609 = vsub.s32 %v1606, %v1608
        %v1610 = vrot.slane %v1596, %v1609
        %v1611 = vcombine.low %v1546, %v1562
        %v1612 = vcombine.high %v1546, %v1562
        %v1614 = vunpack.c.l.s4 1934713408
        %v1615 = vunpack.c.0.s8 %v1614
        %v1616 = vlaneseq
        %v1617 = vshrl.u32 %v1616, 7
        %v1618 = vsub.s32 %v1615, %v1617
        %v1619 = vrot.slane %v1611, %v1618
        %v1621 = vunpack.c.l.s4 1934713408
        %v1622 = vunpack.c.0.s8 %v1621
        %v1623 = vlaneseq
        %v1624 = vshrl.u32 %v1623, 7
        %v1625 = vsub.s32 %v1622, %v1624
        %v1626 = vrot.slane %v1612, %v1625
        %v1627 = vcombine.low %v1571, %v1603
        %v1628 = vcombine.high %v1571, %v1603
        %v1629 = vcombine.low %v1578, %v1610
        %v1630 = vcombine.high %v1578, %v1610
        %v1631 = vcombine.low %v1587, %v1619
        %v1632 = vcombine.high %v1587, %v1619
        %v1633 = vcombine.low %v1594, %v1626
        %v1634 = vcombine.high %v1594, %v1626
        %v1635 = vcombine.low %v1149, %v1171
        %v1636 = vcombine.high %v1149, %v1171
        %v1638 = vunpack.c.l.s4 1983009808
        %v1639 = vunpack.c.0.s8 %v1638
        %v1640 = vlaneseq
        %v1641 = vshrl.u32 %v1640, 7
        %v1642 = vsub.s32 %v1639, %v1641
        %v1643 = vrot.slane %v1635, %v1642
        %v1645 = vunpack.c.l.s4 1983009808
        %v1646 = vunpack.c.0.s8 %v1645
        %v1647 = vlaneseq
        %v1648 = vshrl.u32 %v1647, 7
        %v1649 = vsub.s32 %v1646, %v1648
        %v1650 = vrot.slane %v1636, %v1649
        %v1651 = vcombine.low %v1160, %v1182
        %v1652 = vcombine.high %v1160, %v1182
        %v1654 = vunpack.c.l.s4 1983009808
        %v1655 = vunpack.c.0.s8 %v1654
        %v1656 = vlaneseq
        %v1657 = vshrl.u32 %v1656, 7
        %v1658 = vsub.s32 %v1655, %v1657
        %v1659 = vrot.slane %v1651, %v1658
        %v1661 = vunpack.c.l.s4 1983009808
        %v1662 = vunpack.c.0.s8 %v1661
        %v1663 = vlaneseq
        %v1664 = vshrl.u32 %v1663, 7
        %v1665 = vsub.s32 %v1662, %v1664
        %v1666 = vrot.slane %v1652, %v1665
        %v1667 = vcombine.low %v1193, %v1215
        %v1668 = vcombine.high %v1193, %v1215
        %v1670 = vunpack.c.l.s4 1983009808
        %v1671 = vunpack.c.0.s8 %v1670
        %v1672 = vlaneseq
        %v1673 = vshrl.u32 %v1672, 7
        %v1674 = vsub.s32 %v1671, %v1673
        %v1675 = vrot.slane %v1667, %v1674
        %v1677 = vunpack.c.l.s4 1983009808
        %v1678 = vunpack.c.0.s8 %v1677
        %v1679 = vlaneseq
        %v1680 = vshrl.u32 %v1679, 7
        %v1681 = vsub.s32 %v1678, %v1680
        %v1682 = vrot.slane %v1668, %v1681
        %v1683 = vcombine.low %v1204, %v1226
        %v1684 = vcombine.high %v1204, %v1226
        %v1686 = vunpack.c.l.s4 1983009808
        %v1687 = vunpack.c.0.s8 %v1686
        %v1688 = vlaneseq
        %v1689 = vshrl.u32 %v1688, 7
        %v1690 = vsub.s32 %v1687, %v1689
        %v1691 = vrot.slane %v1683, %v1690
        %v1693 = vunpack.c.l.s4 1983009808
        %v1694 = vunpack.c.0.s8 %v1693
        %v1695 = vlaneseq
        %v1696 = vshrl.u32 %v1695, 7
        %v1697 = vsub.s32 %v1694, %v1696
        %v1698 = vrot.slane %v1684, %v1697
        %v1699 = vcombine.low %v1643, %v1659
        %v1700 = vcombine.high %v1643, %v1659
        %v1702 = vunpack.c.l.s4 1934713408
        %v1703 = vunpack.c.0.s8 %v1702
        %v1704 = vlaneseq
        %v1705 = vshrl.u32 %v1704, 7
        %v1706 = vsub.s32 %v1703, %v1705
        %v1707 = vrot.slane %v1699, %v1706
        %v1709 = vunpack.c.l.s4 1934713408
        %v1710 = vunpack.c.0.s8 %v1709
        %v1711 = vlaneseq
        %v1712 = vshrl.u32 %v1711, 7
        %v1713 = vsub.s32 %v1710, %v1712
        %v1714 = vrot.slane %v1700, %v1713
        %v1715 = vcombine.low %v1650, %v1666
        %v1716 = vcombine.high %v1650, %v1666
        %v1718 = vunpack.c.l.s4 1934713408
        %v1719 = vunpack.c.0.s8 %v1718
        %v1720 = vlaneseq
        %v1721 = vshrl.u32 %v1720, 7
        %v1722 = vsub.s32 %v1719, %v1721
        %v1723 = vrot.slane %v1715, %v1722
        %v1725 = vunpack.c.l.s4 1934713408
        %v1726 = vunpack.c.0.s8 %v1725
        %v1727 = vlaneseq
        %v1728 = vshrl.u32 %v1727, 7
        %v1729 = vsub.s32 %v1726, %v1728
        %v1730 = vrot.slane %v1716, %v1729
        %v1731 = vcombine.low %v1675, %v1691
        %v1732 = vcombine.high %v1675, %v1691
        %v1734 = vunpack.c.l.s4 1934713408
        %v1735 = vunpack.c.0.s8 %v1734
        %v1736 = vlaneseq
        %v1737 = vshrl.u32 %v1736, 7
        %v1738 = vsub.s32 %v1735, %v1737
        %v1739 = vrot.slane %v1731, %v1738
        %v1741 = vunpack.c.l.s4 1934713408
        %v1742 = vunpack.c.0.s8 %v1741
        %v1743 = vlaneseq
        %v1744 = vshrl.u32 %v1743, 7
        %v1745 = vsub.s32 %v1742, %v1744
        %v1746 = vrot.slane %v1732, %v1745
        %v1747 = vcombine.low %v1682, %v1698
        %v1748 = vcombine.high %v1682, %v1698
        %v1750 = vunpack.c.l.s4 1934713408
        %v1751 = vunpack.c.0.s8 %v1750
        %v1752 = vlaneseq
        %v1753 = vshrl.u32 %v1752, 7
        %v1754 = vsub.s32 %v1751, %v1753
        %v1755 = vrot.slane %v1747, %v1754
        %v1757 = vunpack.c.l.s4 1934713408
        %v1758 = vunpack.c.0.s8 %v1757
        %v1759 = vlaneseq
        %v1760 = vshrl.u32 %v1759, 7
        %v1761 = vsub.s32 %v1758, %v1760
        %v1762 = vrot.slane %v1748, %v1761
        %v1763 = vcombine.low %v1707, %v1739
        %v1764 = vcombine.high %v1707, %v1739
        %v1765 = vcombine.low %v1714, %v1746
        %v1766 = vcombine.high %v1714, %v1746
        %v1767 = vcombine.low %v1723, %v1755
        %v1768 = vcombine.high %v1723, %v1755
        %v1769 = vcombine.low %v1730, %v1762
        %v1770 = vcombine.high %v1730, %v1762
        %1773 = vrot.lane.b32.xlu0 %v1356, 8
        %v1774 = vpop.permute.xlu0 %1773
        %1775 = vrot.lane.b32.xlu0 %v1492, 8
        %v1776 = vpop.permute.xlu0 %1775
        %1781 = vrot.lane.b32.xlu0 %v1357, 16
        %v1782 = vpop.permute.xlu0 %1781
        %1783 = vrot.lane.b32.xlu0 %v1493, 16
        %v1784 = vpop.permute.xlu0 %1783
        %1789 = vrot.lane.b32.xlu0 %v1358, 24
        %v1790 = vpop.permute.xlu0 %1789
        %1791 = vrot.lane.b32.xlu0 %v1494, 24
        %v1792 = vpop.permute.xlu0 %1791
        %1797 = vrot.lane.b32.xlu0 %v1359, 32
        %v1798 = vpop.permute.xlu0 %1797
        %1799 = vrot.lane.b32.xlu0 %v1495, 32
        %v1800 = vpop.permute.xlu0 %1799
        %1805 = vrot.lane.b32.xlu0 %v1360, 40
        %v1806 = vpop.permute.xlu0 %1805
        %1807 = vrot.lane.b32.xlu0 %v1496, 40
        %v1808 = vpop.permute.xlu0 %1807
        %1813 = vrot.lane.b32.xlu0 %v1361, 48
        %v1814 = vpop.permute.xlu0 %1813
        %1815 = vrot.lane.b32.xlu0 %v1497, 48
        %v1816 = vpop.permute.xlu0 %1815
        %1821 = vrot.lane.b32.xlu0 %v1362, 56
        %v1822 = vpop.permute.xlu0 %1821
        %1823 = vrot.lane.b32.xlu0 %v1498, 56
        %v1824 = vpop.permute.xlu0 %1823
        %1829 = vrot.lane.b32.xlu0 %v1627, 64
        %v1830 = vpop.permute.xlu0 %1829
        %1831 = vrot.lane.b32.xlu0 %v1763, 64
        %v1832 = vpop.permute.xlu0 %1831
        %1837 = vrot.lane.b32.xlu0 %v1628, 72
        %v1838 = vpop.permute.xlu0 %1837
        %1839 = vrot.lane.b32.xlu0 %v1764, 72
        %v1840 = vpop.permute.xlu0 %1839
        %1845 = vrot.lane.b32.xlu0 %v1629, 80
        %v1846 = vpop.permute.xlu0 %1845
        %1847 = vrot.lane.b32.xlu0 %v1765, 80
        %v1848 = vpop.permute.xlu0 %1847
        %1853 = vrot.lane.b32.xlu0 %v1630, 88
        %v1854 = vpop.permute.xlu0 %1853
        %1855 = vrot.lane.b32.xlu0 %v1766, 88
        %v1856 = vpop.permute.xlu0 %1855
        %1861 = vrot.lane.b32.xlu0 %v1631, 96
        %v1862 = vpop.permute.xlu0 %1861
        %1863 = vrot.lane.b32.xlu0 %v1767, 96
        %v1864 = vpop.permute.xlu0 %1863
        %1869 = vrot.lane.b32.xlu0 %v1632, 104
        %v1870 = vpop.permute.xlu0 %1869
        %1871 = vrot.lane.b32.xlu0 %v1768, 104
        %v1872 = vpop.permute.xlu0 %1871
        %1877 = vrot.lane.b32.xlu0 %v1633, 112
        %v1878 = vpop.permute.xlu0 %1877
        %1879 = vrot.lane.b32.xlu0 %v1769, 112
        %v1880 = vpop.permute.xlu0 %1879
        %1885 = vrot.lane.b32.xlu0 %v1634, 120
        %v1886 = vpop.permute.xlu0 %1885
        %1887 = vrot.lane.b32.xlu0 %v1770, 120
        %v1888 = vpop.permute.xlu0 %1887
        %v1891 = vsel %vm1006, %v1355, %v1774
        %v1892 = vsel %vm1006, %v1491, %v1776
        %v1893 = vsel %vm1009, %v1891, %v1782
        %v1894 = vsel %vm1009, %v1892, %v1784
        %v1895 = vsel %vm1012, %v1893, %v1790
        %v1896 = vsel %vm1012, %v1894, %v1792
        %v1897 = vsel %vm1015, %v1895, %v1798
        %v1898 = vsel %vm1015, %v1896, %v1800
        %v1899 = vsel %vm1018, %v1897, %v1806
        %v1900 = vsel %vm1018, %v1898, %v1808
        %v1901 = vsel %vm1021, %v1899, %v1814
        %v1902 = vsel %vm1021, %v1900, %v1816
        %v1903 = vsel %vm1024, %v1901, %v1822
        %v1904 = vsel %vm1024, %v1902, %v1824
        %v1905 = vsel %vm1027, %v1903, %v1830
        %v1906 = vsel %vm1027, %v1904, %v1832
        %v1907 = vsel %vm1030, %v1905, %v1838
        %v1908 = vsel %vm1030, %v1906, %v1840
        %v1909 = vsel %vm1033, %v1907, %v1846
        %v1910 = vsel %vm1033, %v1908, %v1848
        %v1911 = vsel %vm1036, %v1909, %v1854
        %v1912 = vsel %vm1036, %v1910, %v1856
        %v1913 = vsel %vm1039, %v1911, %v1862
        %v1914 = vsel %vm1039, %v1912, %v1864
        %v1915 = vsel %vm1042, %v1913, %v1870
        %v1916 = vsel %vm1042, %v1914, %v1872
        %v1917 = vsel %vm1045, %v1915, %v1878
        %v1918 = vsel %vm1045, %v1916, %v1880
        %v1919 = vsel %vm1048, %v1917, %v1886
        %v1920 = vsel %vm1048, %v1918, %v1888
        %v1921 = vlaneseq
        %v1922 = vshrl.u32 %v1921, 7
        %v1923 = vsub.s32 0, %v1922
        %v1924 = vrot.slane %v161, %v1923
        %1926 = vbcast.lane.b32.xlu0 %v1924, 256
        %v1927 = vpop.permute.xlu0 %1926
        %s1929 = sor.u32 256, 8
        %1930 = vbcast.lane.b32.xlu0 %v1924, %s1929
        %v1931 = vpop.permute.xlu0 %1930
        %v1932 = vlaneseq
        %v1933 = vshrl.u32 %v1932, 7
        %v1934 = vsub.s32 1, %v1933
        %v1935 = vrot.slane %v161, %v1934
        %1937 = vbcast.lane.b32.xlu0 %v1935, 256
        %v1938 = vpop.permute.xlu0 %1937
        %s1940 = sor.u32 256, 8
        %1941 = vbcast.lane.b32.xlu0 %v1935, %s1940
        %v1942 = vpop.permute.xlu0 %1941
        %v1943 = vlaneseq
        %v1944 = vshrl.u32 %v1943, 7
        %v1945 = vsub.s32 2, %v1944
        %v1946 = vrot.slane %v161, %v1945
        %1948 = vbcast.lane.b32.xlu0 %v1946, 256
        %v1949 = vpop.permute.xlu0 %1948
        %s1951 = sor.u32 256, 8
        %1952 = vbcast.lane.b32.xlu0 %v1946, %s1951
        %v1953 = vpop.permute.xlu0 %1952
        %v1954 = vlaneseq
        %v1955 = vshrl.u32 %v1954, 7
        %v1956 = vsub.s32 3, %v1955
        %v1957 = vrot.slane %v161, %v1956
        %1959 = vbcast.lane.b32.xlu0 %v1957, 256
        %v1960 = vpop.permute.xlu0 %1959
        %s1962 = sor.u32 256, 8
        %1963 = vbcast.lane.b32.xlu0 %v1957, %s1962
        %v1964 = vpop.permute.xlu0 %1963
        %v1965 = vlaneseq
        %v1966 = vshrl.u32 %v1965, 7
        %v1967 = vsub.s32 4, %v1966
        %v1968 = vrot.slane %v161, %v1967
        %1970 = vbcast.lane.b32.xlu0 %v1968, 256
        %v1971 = vpop.permute.xlu0 %1970
        %s1973 = sor.u32 256, 8
        %1974 = vbcast.lane.b32.xlu0 %v1968, %s1973
        %v1975 = vpop.permute.xlu0 %1974
        %v1976 = vlaneseq
        %v1977 = vshrl.u32 %v1976, 7
        %v1978 = vsub.s32 5, %v1977
        %v1979 = vrot.slane %v161, %v1978
        %1981 = vbcast.lane.b32.xlu0 %v1979, 256
        %v1982 = vpop.permute.xlu0 %1981
        %s1984 = sor.u32 256, 8
        %1985 = vbcast.lane.b32.xlu0 %v1979, %s1984
        %v1986 = vpop.permute.xlu0 %1985
        %v1987 = vlaneseq
        %v1988 = vshrl.u32 %v1987, 7
        %v1989 = vsub.s32 6, %v1988
        %v1990 = vrot.slane %v161, %v1989
        %1992 = vbcast.lane.b32.xlu0 %v1990, 256
        %v1993 = vpop.permute.xlu0 %1992
        %s1995 = sor.u32 256, 8
        %1996 = vbcast.lane.b32.xlu0 %v1990, %s1995
        %v1997 = vpop.permute.xlu0 %1996
        %v1998 = vlaneseq
        %v1999 = vshrl.u32 %v1998, 7
        %v2000 = vsub.s32 7, %v1999
        %v2001 = vrot.slane %v161, %v2000
        %2003 = vbcast.lane.b32.xlu0 %v2001, 256
        %v2004 = vpop.permute.xlu0 %2003
        %s2006 = sor.u32 256, 8
        %2007 = vbcast.lane.b32.xlu0 %v2001, %s2006
        %v2008 = vpop.permute.xlu0 %2007
        %v2009 = vlaneseq
        %v2010 = vshrl.u32 %v2009, 7
        %v2011 = vsub.s32 0, %v2010
        %v2012 = vrot.slane %v162, %v2011
        %2014 = vbcast.lane.b32.xlu0 %v2012, 256
        %v2015 = vpop.permute.xlu0 %2014
        %s2017 = sor.u32 256, 8
        %2018 = vbcast.lane.b32.xlu0 %v2012, %s2017
        %v2019 = vpop.permute.xlu0 %2018
        %v2020 = vlaneseq
        %v2021 = vshrl.u32 %v2020, 7
        %v2022 = vsub.s32 1, %v2021
        %v2023 = vrot.slane %v162, %v2022
        %2025 = vbcast.lane.b32.xlu0 %v2023, 256
        %v2026 = vpop.permute.xlu0 %2025
        %s2028 = sor.u32 256, 8
        %2029 = vbcast.lane.b32.xlu0 %v2023, %s2028
        %v2030 = vpop.permute.xlu0 %2029
        %v2031 = vlaneseq
        %v2032 = vshrl.u32 %v2031, 7
        %v2033 = vsub.s32 2, %v2032
        %v2034 = vrot.slane %v162, %v2033
        %2036 = vbcast.lane.b32.xlu0 %v2034, 256
        %v2037 = vpop.permute.xlu0 %2036
        %s2039 = sor.u32 256, 8
        %2040 = vbcast.lane.b32.xlu0 %v2034, %s2039
        %v2041 = vpop.permute.xlu0 %2040
        %v2042 = vlaneseq
        %v2043 = vshrl.u32 %v2042, 7
        %v2044 = vsub.s32 3, %v2043
        %v2045 = vrot.slane %v162, %v2044
        %2047 = vbcast.lane.b32.xlu0 %v2045, 256
        %v2048 = vpop.permute.xlu0 %2047
        %s2050 = sor.u32 256, 8
        %2051 = vbcast.lane.b32.xlu0 %v2045, %s2050
        %v2052 = vpop.permute.xlu0 %2051
        %v2053 = vlaneseq
        %v2054 = vshrl.u32 %v2053, 7
        %v2055 = vsub.s32 4, %v2054
        %v2056 = vrot.slane %v162, %v2055
        %2058 = vbcast.lane.b32.xlu0 %v2056, 256
        %v2059 = vpop.permute.xlu0 %2058
        %s2061 = sor.u32 256, 8
        %2062 = vbcast.lane.b32.xlu0 %v2056, %s2061
        %v2063 = vpop.permute.xlu0 %2062
        %v2064 = vlaneseq
        %v2065 = vshrl.u32 %v2064, 7
        %v2066 = vsub.s32 5, %v2065
        %v2067 = vrot.slane %v162, %v2066
        %2069 = vbcast.lane.b32.xlu0 %v2067, 256
        %v2070 = vpop.permute.xlu0 %2069
        %s2072 = sor.u32 256, 8
        %2073 = vbcast.lane.b32.xlu0 %v2067, %s2072
        %v2074 = vpop.permute.xlu0 %2073
        %v2075 = vlaneseq
        %v2076 = vshrl.u32 %v2075, 7
        %v2077 = vsub.s32 6, %v2076
        %v2078 = vrot.slane %v162, %v2077
        %2080 = vbcast.lane.b32.xlu0 %v2078, 256
        %v2081 = vpop.permute.xlu0 %2080
        %s2083 = sor.u32 256, 8
        %2084 = vbcast.lane.b32.xlu0 %v2078, %s2083
        %v2085 = vpop.permute.xlu0 %2084
        %v2086 = vlaneseq
        %v2087 = vshrl.u32 %v2086, 7
        %v2088 = vsub.s32 7, %v2087
        %v2089 = vrot.slane %v162, %v2088
        %2091 = vbcast.lane.b32.xlu0 %v2089, 256
        %v2092 = vpop.permute.xlu0 %2091
        %s2094 = sor.u32 256, 8
        %2095 = vbcast.lane.b32.xlu0 %v2089, %s2094
        %v2096 = vpop.permute.xlu0 %2095
        %v2097 = vcombine.low %v1927, %v1949
        %v2098 = vcombine.high %v1927, %v1949
        %v2100 = vunpack.c.l.s4 1983009808
        %v2101 = vunpack.c.0.s8 %v2100
        %v2102 = vlaneseq
        %v2103 = vshrl.u32 %v2102, 7
        %v2104 = vsub.s32 %v2101, %v2103
        %v2105 = vrot.slane %v2097, %v2104
        %v2107 = vunpack.c.l.s4 1983009808
        %v2108 = vunpack.c.0.s8 %v2107
        %v2109 = vlaneseq
        %v2110 = vshrl.u32 %v2109, 7
        %v2111 = vsub.s32 %v2108, %v2110
        %v2112 = vrot.slane %v2098, %v2111
        %v2113 = vcombine.low %v1938, %v1960
        %v2114 = vcombine.high %v1938, %v1960
        %v2116 = vunpack.c.l.s4 1983009808
        %v2117 = vunpack.c.0.s8 %v2116
        %v2118 = vlaneseq
        %v2119 = vshrl.u32 %v2118, 7
        %v2120 = vsub.s32 %v2117, %v2119
        %v2121 = vrot.slane %v2113, %v2120
        %v2123 = vunpack.c.l.s4 1983009808
        %v2124 = vunpack.c.0.s8 %v2123
        %v2125 = vlaneseq
        %v2126 = vshrl.u32 %v2125, 7
        %v2127 = vsub.s32 %v2124, %v2126
        %v2128 = vrot.slane %v2114, %v2127
        %v2129 = vcombine.low %v1971, %v1993
        %v2130 = vcombine.high %v1971, %v1993
        %v2132 = vunpack.c.l.s4 1983009808
        %v2133 = vunpack.c.0.s8 %v2132
        %v2134 = vlaneseq
        %v2135 = vshrl.u32 %v2134, 7
        %v2136 = vsub.s32 %v2133, %v2135
        %v2137 = vrot.slane %v2129, %v2136
        %v2139 = vunpack.c.l.s4 1983009808
        %v2140 = vunpack.c.0.s8 %v2139
        %v2141 = vlaneseq
        %v2142 = vshrl.u32 %v2141, 7
        %v2143 = vsub.s32 %v2140, %v2142
        %v2144 = vrot.slane %v2130, %v2143
        %v2145 = vcombine.low %v1982, %v2004
        %v2146 = vcombine.high %v1982, %v2004
        %v2148 = vunpack.c.l.s4 1983009808
        %v2149 = vunpack.c.0.s8 %v2148
        %v2150 = vlaneseq
        %v2151 = vshrl.u32 %v2150, 7
        %v2152 = vsub.s32 %v2149, %v2151
        %v2153 = vrot.slane %v2145, %v2152
        %v2155 = vunpack.c.l.s4 1983009808
        %v2156 = vunpack.c.0.s8 %v2155
        %v2157 = vlaneseq
        %v2158 = vshrl.u32 %v2157, 7
        %v2159 = vsub.s32 %v2156, %v2158
        %v2160 = vrot.slane %v2146, %v2159
        %v2161 = vcombine.low %v2105, %v2121
        %v2162 = vcombine.high %v2105, %v2121
        %v2164 = vunpack.c.l.s4 1934713408
        %v2165 = vunpack.c.0.s8 %v2164
        %v2166 = vlaneseq
        %v2167 = vshrl.u32 %v2166, 7
        %v2168 = vsub.s32 %v2165, %v2167
        %v2169 = vrot.slane %v2161, %v2168
        %v2171 = vunpack.c.l.s4 1934713408
        %v2172 = vunpack.c.0.s8 %v2171
        %v2173 = vlaneseq
        %v2174 = vshrl.u32 %v2173, 7
        %v2175 = vsub.s32 %v2172, %v2174
        %v2176 = vrot.slane %v2162, %v2175
        %v2177 = vcombine.low %v2112, %v2128
        %v2178 = vcombine.high %v2112, %v2128
        %v2180 = vunpack.c.l.s4 1934713408
        %v2181 = vunpack.c.0.s8 %v2180
        %v2182 = vlaneseq
        %v2183 = vshrl.u32 %v2182, 7
        %v2184 = vsub.s32 %v2181, %v2183
        %v2185 = vrot.slane %v2177, %v2184
        %v2187 = vunpack.c.l.s4 1934713408
        %v2188 = vunpack.c.0.s8 %v2187
        %v2189 = vlaneseq
        %v2190 = vshrl.u32 %v2189, 7
        %v2191 = vsub.s32 %v2188, %v2190
        %v2192 = vrot.slane %v2178, %v2191
        %v2193 = vcombine.low %v2137, %v2153
        %v2194 = vcombine.high %v2137, %v2153
        %v2196 = vunpack.c.l.s4 1934713408
        %v2197 = vunpack.c.0.s8 %v2196
        %v2198 = vlaneseq
        %v2199 = vshrl.u32 %v2198, 7
        %v2200 = vsub.s32 %v2197, %v2199
        %v2201 = vrot.slane %v2193, %v2200
        %v2203 = vunpack.c.l.s4 1934713408
        %v2204 = vunpack.c.0.s8 %v2203
        %v2205 = vlaneseq
        %v2206 = vshrl.u32 %v2205, 7
        %v2207 = vsub.s32 %v2204, %v2206
        %v2208 = vrot.slane %v2194, %v2207
        %v2209 = vcombine.low %v2144, %v2160
        %v2210 = vcombine.high %v2144, %v2160
        %v2212 = vunpack.c.l.s4 1934713408
        %v2213 = vunpack.c.0.s8 %v2212
        %v2214 = vlaneseq
        %v2215 = vshrl.u32 %v2214, 7
        %v2216 = vsub.s32 %v2213, %v2215
        %v2217 = vrot.slane %v2209, %v2216
        %v2219 = vunpack.c.l.s4 1934713408
        %v2220 = vunpack.c.0.s8 %v2219
        %v2221 = vlaneseq
        %v2222 = vshrl.u32 %v2221, 7
        %v2223 = vsub.s32 %v2220, %v2222
        %v2224 = vrot.slane %v2210, %v2223
        %v2225 = vcombine.low %v2169, %v2201
        %v2226 = vcombine.high %v2169, %v2201
        %v2227 = vcombine.low %v2176, %v2208
        %v2228 = vcombine.high %v2176, %v2208
        %v2229 = vcombine.low %v2185, %v2217
        %v2230 = vcombine.high %v2185, %v2217
        %v2231 = vcombine.low %v2192, %v2224
        %v2232 = vcombine.high %v2192, %v2224
        %v2233 = vcombine.low %v2015, %v2037
        %v2234 = vcombine.high %v2015, %v2037
        %v2236 = vunpack.c.l.s4 1983009808
        %v2237 = vunpack.c.0.s8 %v2236
        %v2238 = vlaneseq
        %v2239 = vshrl.u32 %v2238, 7
        %v2240 = vsub.s32 %v2237, %v2239
        %v2241 = vrot.slane %v2233, %v2240
        %v2243 = vunpack.c.l.s4 1983009808
        %v2244 = vunpack.c.0.s8 %v2243
        %v2245 = vlaneseq
        %v2246 = vshrl.u32 %v2245, 7
        %v2247 = vsub.s32 %v2244, %v2246
        %v2248 = vrot.slane %v2234, %v2247
        %v2249 = vcombine.low %v2026, %v2048
        %v2250 = vcombine.high %v2026, %v2048
        %v2252 = vunpack.c.l.s4 1983009808
        %v2253 = vunpack.c.0.s8 %v2252
        %v2254 = vlaneseq
        %v2255 = vshrl.u32 %v2254, 7
        %v2256 = vsub.s32 %v2253, %v2255
        %v2257 = vrot.slane %v2249, %v2256
        %v2259 = vunpack.c.l.s4 1983009808
        %v2260 = vunpack.c.0.s8 %v2259
        %v2261 = vlaneseq
        %v2262 = vshrl.u32 %v2261, 7
        %v2263 = vsub.s32 %v2260, %v2262
        %v2264 = vrot.slane %v2250, %v2263
        %v2265 = vcombine.low %v2059, %v2081
        %v2266 = vcombine.high %v2059, %v2081
        %v2268 = vunpack.c.l.s4 1983009808
        %v2269 = vunpack.c.0.s8 %v2268
        %v2270 = vlaneseq
        %v2271 = vshrl.u32 %v2270, 7
        %v2272 = vsub.s32 %v2269, %v2271
        %v2273 = vrot.slane %v2265, %v2272
        %v2275 = vunpack.c.l.s4 1983009808
        %v2276 = vunpack.c.0.s8 %v2275
        %v2277 = vlaneseq
        %v2278 = vshrl.u32 %v2277, 7
        %v2279 = vsub.s32 %v2276, %v2278
        %v2280 = vrot.slane %v2266, %v2279
        %v2281 = vcombine.low %v2070, %v2092
        %v2282 = vcombine.high %v2070, %v2092
        %v2284 = vunpack.c.l.s4 1983009808
        %v2285 = vunpack.c.0.s8 %v2284
        %v2286 = vlaneseq
        %v2287 = vshrl.u32 %v2286, 7
        %v2288 = vsub.s32 %v2285, %v2287
        %v2289 = vrot.slane %v2281, %v2288
        %v2291 = vunpack.c.l.s4 1983009808
        %v2292 = vunpack.c.0.s8 %v2291
        %v2293 = vlaneseq
        %v2294 = vshrl.u32 %v2293, 7
        %v2295 = vsub.s32 %v2292, %v2294
        %v2296 = vrot.slane %v2282, %v2295
        %v2297 = vcombine.low %v2241, %v2257
        %v2298 = vcombine.high %v2241, %v2257
        %v2300 = vunpack.c.l.s4 1934713408
        %v2301 = vunpack.c.0.s8 %v2300
        %v2302 = vlaneseq
        %v2303 = vshrl.u32 %v2302, 7
        %v2304 = vsub.s32 %v2301, %v2303
        %v2305 = vrot.slane %v2297, %v2304
        %v2307 = vunpack.c.l.s4 1934713408
        %v2308 = vunpack.c.0.s8 %v2307
        %v2309 = vlaneseq
        %v2310 = vshrl.u32 %v2309, 7
        %v2311 = vsub.s32 %v2308, %v2310
        %v2312 = vrot.slane %v2298, %v2311
        %v2313 = vcombine.low %v2248, %v2264
        %v2314 = vcombine.high %v2248, %v2264
        %v2316 = vunpack.c.l.s4 1934713408
        %v2317 = vunpack.c.0.s8 %v2316
        %v2318 = vlaneseq
        %v2319 = vshrl.u32 %v2318, 7
        %v2320 = vsub.s32 %v2317, %v2319
        %v2321 = vrot.slane %v2313, %v2320
        %v2323 = vunpack.c.l.s4 1934713408
        %v2324 = vunpack.c.0.s8 %v2323
        %v2325 = vlaneseq
        %v2326 = vshrl.u32 %v2325, 7
        %v2327 = vsub.s32 %v2324, %v2326
        %v2328 = vrot.slane %v2314, %v2327
        %v2329 = vcombine.low %v2273, %v2289
        %v2330 = vcombine.high %v2273, %v2289
        %v2332 = vunpack.c.l.s4 1934713408
        %v2333 = vunpack.c.0.s8 %v2332
        %v2334 = vlaneseq
        %v2335 = vshrl.u32 %v2334, 7
        %v2336 = vsub.s32 %v2333, %v2335
        %v2337 = vrot.slane %v2329, %v2336
        %v2339 = vunpack.c.l.s4 1934713408
        %v2340 = vunpack.c.0.s8 %v2339
        %v2341 = vlaneseq
        %v2342 = vshrl.u32 %v2341, 7
        %v2343 = vsub.s32 %v2340, %v2342
        %v2344 = vrot.slane %v2330, %v2343
        %v2345 = vcombine.low %v2280, %v2296
        %v2346 = vcombine.high %v2280, %v2296
        %v2348 = vunpack.c.l.s4 1934713408
        %v2349 = vunpack.c.0.s8 %v2348
        %v2350 = vlaneseq
        %v2351 = vshrl.u32 %v2350, 7
        %v2352 = vsub.s32 %v2349, %v2351
        %v2353 = vrot.slane %v2345, %v2352
        %v2355 = vunpack.c.l.s4 1934713408
        %v2356 = vunpack.c.0.s8 %v2355
        %v2357 = vlaneseq
        %v2358 = vshrl.u32 %v2357, 7
        %v2359 = vsub.s32 %v2356, %v2358
        %v2360 = vrot.slane %v2346, %v2359
        %v2361 = vcombine.low %v2305, %v2337
        %v2362 = vcombine.high %v2305, %v2337
        %v2363 = vcombine.low %v2312, %v2344
        %v2364 = vcombine.high %v2312, %v2344
        %v2365 = vcombine.low %v2321, %v2353
        %v2366 = vcombine.high %v2321, %v2353
        %v2367 = vcombine.low %v2328, %v2360
        %v2368 = vcombine.high %v2328, %v2360
        %v2369 = vcombine.low %v1931, %v1953
        %v2370 = vcombine.high %v1931, %v1953
        %v2372 = vunpack.c.l.s4 1983009808
        %v2373 = vunpack.c.0.s8 %v2372
        %v2374 = vlaneseq
        %v2375 = vshrl.u32 %v2374, 7
        %v2376 = vsub.s32 %v2373, %v2375
        %v2377 = vrot.slane %v2369, %v2376
        %v2379 = vunpack.c.l.s4 1983009808
        %v2380 = vunpack.c.0.s8 %v2379
        %v2381 = vlaneseq
        %v2382 = vshrl.u32 %v2381, 7
        %v2383 = vsub.s32 %v2380, %v2382
        %v2384 = vrot.slane %v2370, %v2383
        %v2385 = vcombine.low %v1942, %v1964
        %v2386 = vcombine.high %v1942, %v1964
        %v2388 = vunpack.c.l.s4 1983009808
        %v2389 = vunpack.c.0.s8 %v2388
        %v2390 = vlaneseq
        %v2391 = vshrl.u32 %v2390, 7
        %v2392 = vsub.s32 %v2389, %v2391
        %v2393 = vrot.slane %v2385, %v2392
        %v2395 = vunpack.c.l.s4 1983009808
        %v2396 = vunpack.c.0.s8 %v2395
        %v2397 = vlaneseq
        %v2398 = vshrl.u32 %v2397, 7
        %v2399 = vsub.s32 %v2396, %v2398
        %v2400 = vrot.slane %v2386, %v2399
        %v2401 = vcombine.low %v1975, %v1997
        %v2402 = vcombine.high %v1975, %v1997
        %v2404 = vunpack.c.l.s4 1983009808
        %v2405 = vunpack.c.0.s8 %v2404
        %v2406 = vlaneseq
        %v2407 = vshrl.u32 %v2406, 7
        %v2408 = vsub.s32 %v2405, %v2407
        %v2409 = vrot.slane %v2401, %v2408
        %v2411 = vunpack.c.l.s4 1983009808
        %v2412 = vunpack.c.0.s8 %v2411
        %v2413 = vlaneseq
        %v2414 = vshrl.u32 %v2413, 7
        %v2415 = vsub.s32 %v2412, %v2414
        %v2416 = vrot.slane %v2402, %v2415
        %v2417 = vcombine.low %v1986, %v2008
        %v2418 = vcombine.high %v1986, %v2008
        %v2420 = vunpack.c.l.s4 1983009808
        %v2421 = vunpack.c.0.s8 %v2420
        %v2422 = vlaneseq
        %v2423 = vshrl.u32 %v2422, 7
        %v2424 = vsub.s32 %v2421, %v2423
        %v2425 = vrot.slane %v2417, %v2424
        %v2427 = vunpack.c.l.s4 1983009808
        %v2428 = vunpack.c.0.s8 %v2427
        %v2429 = vlaneseq
        %v2430 = vshrl.u32 %v2429, 7
        %v2431 = vsub.s32 %v2428, %v2430
        %v2432 = vrot.slane %v2418, %v2431
        %v2433 = vcombine.low %v2377, %v2393
        %v2434 = vcombine.high %v2377, %v2393
        %v2436 = vunpack.c.l.s4 1934713408
        %v2437 = vunpack.c.0.s8 %v2436
        %v2438 = vlaneseq
        %v2439 = vshrl.u32 %v2438, 7
        %v2440 = vsub.s32 %v2437, %v2439
        %v2441 = vrot.slane %v2433, %v2440
        %v2443 = vunpack.c.l.s4 1934713408
        %v2444 = vunpack.c.0.s8 %v2443
        %v2445 = vlaneseq
        %v2446 = vshrl.u32 %v2445, 7
        %v2447 = vsub.s32 %v2444, %v2446
        %v2448 = vrot.slane %v2434, %v2447
        %v2449 = vcombine.low %v2384, %v2400
        %v2450 = vcombine.high %v2384, %v2400
        %v2452 = vunpack.c.l.s4 1934713408
        %v2453 = vunpack.c.0.s8 %v2452
        %v2454 = vlaneseq
        %v2455 = vshrl.u32 %v2454, 7
        %v2456 = vsub.s32 %v2453, %v2455
        %v2457 = vrot.slane %v2449, %v2456
        %v2459 = vunpack.c.l.s4 1934713408
        %v2460 = vunpack.c.0.s8 %v2459
        %v2461 = vlaneseq
        %v2462 = vshrl.u32 %v2461, 7
        %v2463 = vsub.s32 %v2460, %v2462
        %v2464 = vrot.slane %v2450, %v2463
        %v2465 = vcombine.low %v2409, %v2425
        %v2466 = vcombine.high %v2409, %v2425
        %v2468 = vunpack.c.l.s4 1934713408
        %v2469 = vunpack.c.0.s8 %v2468
        %v2470 = vlaneseq
        %v2471 = vshrl.u32 %v2470, 7
        %v2472 = vsub.s32 %v2469, %v2471
        %v2473 = vrot.slane %v2465, %v2472
        %v2475 = vunpack.c.l.s4 1934713408
        %v2476 = vunpack.c.0.s8 %v2475
        %v2477 = vlaneseq
        %v2478 = vshrl.u32 %v2477, 7
        %v2479 = vsub.s32 %v2476, %v2478
        %v2480 = vrot.slane %v2466, %v2479
        %v2481 = vcombine.low %v2416, %v2432
        %v2482 = vcombine.high %v2416, %v2432
        %v2484 = vunpack.c.l.s4 1934713408
        %v2485 = vunpack.c.0.s8 %v2484
        %v2486 = vlaneseq
        %v2487 = vshrl.u32 %v2486, 7
        %v2488 = vsub.s32 %v2485, %v2487
        %v2489 = vrot.slane %v2481, %v2488
        %v2491 = vunpack.c.l.s4 1934713408
        %v2492 = vunpack.c.0.s8 %v2491
        %v2493 = vlaneseq
        %v2494 = vshrl.u32 %v2493, 7
        %v2495 = vsub.s32 %v2492, %v2494
        %v2496 = vrot.slane %v2482, %v2495
        %v2497 = vcombine.low %v2441, %v2473
        %v2498 = vcombine.high %v2441, %v2473
        %v2499 = vcombine.low %v2448, %v2480
        %v2500 = vcombine.high %v2448, %v2480
        %v2501 = vcombine.low %v2457, %v2489
        %v2502 = vcombine.high %v2457, %v2489
        %v2503 = vcombine.low %v2464, %v2496
        %v2504 = vcombine.high %v2464, %v2496
        %v2505 = vcombine.low %v2019, %v2041
        %v2506 = vcombine.high %v2019, %v2041
        %v2508 = vunpack.c.l.s4 1983009808
        %v2509 = vunpack.c.0.s8 %v2508
        %v2510 = vlaneseq
        %v2511 = vshrl.u32 %v2510, 7
        %v2512 = vsub.s32 %v2509, %v2511
        %v2513 = vrot.slane %v2505, %v2512
        %v2515 = vunpack.c.l.s4 1983009808
        %v2516 = vunpack.c.0.s8 %v2515
        %v2517 = vlaneseq
        %v2518 = vshrl.u32 %v2517, 7
        %v2519 = vsub.s32 %v2516, %v2518
        %v2520 = vrot.slane %v2506, %v2519
        %v2521 = vcombine.low %v2030, %v2052
        %v2522 = vcombine.high %v2030, %v2052
        %v2524 = vunpack.c.l.s4 1983009808
        %v2525 = vunpack.c.0.s8 %v2524
        %v2526 = vlaneseq
        %v2527 = vshrl.u32 %v2526, 7
        %v2528 = vsub.s32 %v2525, %v2527
        %v2529 = vrot.slane %v2521, %v2528
        %v2531 = vunpack.c.l.s4 1983009808
        %v2532 = vunpack.c.0.s8 %v2531
        %v2533 = vlaneseq
        %v2534 = vshrl.u32 %v2533, 7
        %v2535 = vsub.s32 %v2532, %v2534
        %v2536 = vrot.slane %v2522, %v2535
        %v2537 = vcombine.low %v2063, %v2085
        %v2538 = vcombine.high %v2063, %v2085
        %v2540 = vunpack.c.l.s4 1983009808
        %v2541 = vunpack.c.0.s8 %v2540
        %v2542 = vlaneseq
        %v2543 = vshrl.u32 %v2542, 7
        %v2544 = vsub.s32 %v2541, %v2543
        %v2545 = vrot.slane %v2537, %v2544
        %v2547 = vunpack.c.l.s4 1983009808
        %v2548 = vunpack.c.0.s8 %v2547
        %v2549 = vlaneseq
        %v2550 = vshrl.u32 %v2549, 7
        %v2551 = vsub.s32 %v2548, %v2550
        %v2552 = vrot.slane %v2538, %v2551
        %v2553 = vcombine.low %v2074, %v2096
        %v2554 = vcombine.high %v2074, %v2096
        %v2556 = vunpack.c.l.s4 1983009808
        %v2557 = vunpack.c.0.s8 %v2556
        %v2558 = vlaneseq
        %v2559 = vshrl.u32 %v2558, 7
        %v2560 = vsub.s32 %v2557, %v2559
        %v2561 = vrot.slane %v2553, %v2560
        %v2563 = vunpack.c.l.s4 1983009808
        %v2564 = vunpack.c.0.s8 %v2563
        %v2565 = vlaneseq
        %v2566 = vshrl.u32 %v2565, 7
        %v2567 = vsub.s32 %v2564, %v2566
        %v2568 = vrot.slane %v2554, %v2567
        %v2569 = vcombine.low %v2513, %v2529
        %v2570 = vcombine.high %v2513, %v2529
        %v2572 = vunpack.c.l.s4 1934713408
        %v2573 = vunpack.c.0.s8 %v2572
        %v2574 = vlaneseq
        %v2575 = vshrl.u32 %v2574, 7
        %v2576 = vsub.s32 %v2573, %v2575
        %v2577 = vrot.slane %v2569, %v2576
        %v2579 = vunpack.c.l.s4 1934713408
        %v2580 = vunpack.c.0.s8 %v2579
        %v2581 = vlaneseq
        %v2582 = vshrl.u32 %v2581, 7
        %v2583 = vsub.s32 %v2580, %v2582
        %v2584 = vrot.slane %v2570, %v2583
        %v2585 = vcombine.low %v2520, %v2536
        %v2586 = vcombine.high %v2520, %v2536
        %v2588 = vunpack.c.l.s4 1934713408
        %v2589 = vunpack.c.0.s8 %v2588
        %v2590 = vlaneseq
        %v2591 = vshrl.u32 %v2590, 7
        %v2592 = vsub.s32 %v2589, %v2591
        %v2593 = vrot.slane %v2585, %v2592
        %v2595 = vunpack.c.l.s4 1934713408
        %v2596 = vunpack.c.0.s8 %v2595
        %v2597 = vlaneseq
        %v2598 = vshrl.u32 %v2597, 7
        %v2599 = vsub.s32 %v2596, %v2598
        %v2600 = vrot.slane %v2586, %v2599
        %v2601 = vcombine.low %v2545, %v2561
        %v2602 = vcombine.high %v2545, %v2561
        %v2604 = vunpack.c.l.s4 1934713408
        %v2605 = vunpack.c.0.s8 %v2604
        %v2606 = vlaneseq
        %v2607 = vshrl.u32 %v2606, 7
        %v2608 = vsub.s32 %v2605, %v2607
        %v2609 = vrot.slane %v2601, %v2608
        %v2611 = vunpack.c.l.s4 1934713408
        %v2612 = vunpack.c.0.s8 %v2611
        %v2613 = vlaneseq
        %v2614 = vshrl.u32 %v2613, 7
        %v2615 = vsub.s32 %v2612, %v2614
        %v2616 = vrot.slane %v2602, %v2615
        %v2617 = vcombine.low %v2552, %v2568
        %v2618 = vcombine.high %v2552, %v2568
        %v2620 = vunpack.c.l.s4 1934713408
        %v2621 = vunpack.c.0.s8 %v2620
        %v2622 = vlaneseq
        %v2623 = vshrl.u32 %v2622, 7
        %v2624 = vsub.s32 %v2621, %v2623
        %v2625 = vrot.slane %v2617, %v2624
        %v2627 = vunpack.c.l.s4 1934713408
        %v2628 = vunpack.c.0.s8 %v2627
        %v2629 = vlaneseq
        %v2630 = vshrl.u32 %v2629, 7
        %v2631 = vsub.s32 %v2628, %v2630
        %v2632 = vrot.slane %v2618, %v2631
        %v2633 = vcombine.low %v2577, %v2609
        %v2634 = vcombine.high %v2577, %v2609
        %v2635 = vcombine.low %v2584, %v2616
        %v2636 = vcombine.high %v2584, %v2616
        %v2637 = vcombine.low %v2593, %v2625
        %v2638 = vcombine.high %v2593, %v2625
        %v2639 = vcombine.low %v2600, %v2632
        %v2640 = vcombine.high %v2600, %v2632
        %2643 = vrot.lane.b32.xlu0 %v2226, 8
        %v2644 = vpop.permute.xlu0 %2643
        %2645 = vrot.lane.b32.xlu0 %v2362, 8
        %v2646 = vpop.permute.xlu0 %2645
        %2651 = vrot.lane.b32.xlu0 %v2227, 16
        %v2652 = vpop.permute.xlu0 %2651
        %2653 = vrot.lane.b32.xlu0 %v2363, 16
        %v2654 = vpop.permute.xlu0 %2653
        %2659 = vrot.lane.b32.xlu0 %v2228, 24
        %v2660 = vpop.permute.xlu0 %2659
        %2661 = vrot.lane.b32.xlu0 %v2364, 24
        %v2662 = vpop.permute.xlu0 %2661
        %2667 = vrot.lane.b32.xlu0 %v2229, 32
        %v2668 = vpop.permute.xlu0 %2667
        %2669 = vrot.lane.b32.xlu0 %v2365, 32
        %v2670 = vpop.permute.xlu0 %2669
        %2675 = vrot.lane.b32.xlu0 %v2230, 40
        %v2676 = vpop.permute.xlu0 %2675
        %2677 = vrot.lane.b32.xlu0 %v2366, 40
        %v2678 = vpop.permute.xlu0 %2677
        %2683 = vrot.lane.b32.xlu0 %v2231, 48
        %v2684 = vpop.permute.xlu0 %2683
        %2685 = vrot.lane.b32.xlu0 %v2367, 48
        %v2686 = vpop.permute.xlu0 %2685
        %2691 = vrot.lane.b32.xlu0 %v2232, 56
        %v2692 = vpop.permute.xlu0 %2691
        %2693 = vrot.lane.b32.xlu0 %v2368, 56
        %v2694 = vpop.permute.xlu0 %2693
        %2699 = vrot.lane.b32.xlu0 %v2497, 64
        %v2700 = vpop.permute.xlu0 %2699
        %2701 = vrot.lane.b32.xlu0 %v2633, 64
        %v2702 = vpop.permute.xlu0 %2701
        %2707 = vrot.lane.b32.xlu0 %v2498, 72
        %v2708 = vpop.permute.xlu0 %2707
        %2709 = vrot.lane.b32.xlu0 %v2634, 72
        %v2710 = vpop.permute.xlu0 %2709
        %2715 = vrot.lane.b32.xlu0 %v2499, 80
        %v2716 = vpop.permute.xlu0 %2715
        %2717 = vrot.lane.b32.xlu0 %v2635, 80
        %v2718 = vpop.permute.xlu0 %2717
        %2723 = vrot.lane.b32.xlu0 %v2500, 88
        %v2724 = vpop.permute.xlu0 %2723
        %2725 = vrot.lane.b32.xlu0 %v2636, 88
        %v2726 = vpop.permute.xlu0 %2725
        %2731 = vrot.lane.b32.xlu0 %v2501, 96
        %v2732 = vpop.permute.xlu0 %2731
        %2733 = vrot.lane.b32.xlu0 %v2637, 96
        %v2734 = vpop.permute.xlu0 %2733
        %2739 = vrot.lane.b32.xlu0 %v2502, 104
        %v2740 = vpop.permute.xlu0 %2739
        %2741 = vrot.lane.b32.xlu0 %v2638, 104
        %v2742 = vpop.permute.xlu0 %2741
        %2747 = vrot.lane.b32.xlu0 %v2503, 112
        %v2748 = vpop.permute.xlu0 %2747
        %2749 = vrot.lane.b32.xlu0 %v2639, 112
        %v2750 = vpop.permute.xlu0 %2749
        %2755 = vrot.lane.b32.xlu0 %v2504, 120
        %v2756 = vpop.permute.xlu0 %2755
        %2757 = vrot.lane.b32.xlu0 %v2640, 120
        %v2758 = vpop.permute.xlu0 %2757
        %v2761 = vsel %vm1006, %v2225, %v2644
        %v2762 = vsel %vm1006, %v2361, %v2646
        %v2763 = vsel %vm1009, %v2761, %v2652
        %v2764 = vsel %vm1009, %v2762, %v2654
        %v2765 = vsel %vm1012, %v2763, %v2660
        %v2766 = vsel %vm1012, %v2764, %v2662
        %v2767 = vsel %vm1015, %v2765, %v2668
        %v2768 = vsel %vm1015, %v2766, %v2670
        %v2769 = vsel %vm1018, %v2767, %v2676
        %v2770 = vsel %vm1018, %v2768, %v2678
        %v2771 = vsel %vm1021, %v2769, %v2684
        %v2772 = vsel %vm1021, %v2770, %v2686
        %v2773 = vsel %vm1024, %v2771, %v2692
        %v2774 = vsel %vm1024, %v2772, %v2694
        %v2775 = vsel %vm1027, %v2773, %v2700
        %v2776 = vsel %vm1027, %v2774, %v2702
        %v2777 = vsel %vm1030, %v2775, %v2708
        %v2778 = vsel %vm1030, %v2776, %v2710
        %v2779 = vsel %vm1033, %v2777, %v2716
        %v2780 = vsel %vm1033, %v2778, %v2718
        %v2781 = vsel %vm1036, %v2779, %v2724
        %v2782 = vsel %vm1036, %v2780, %v2726
        %v2783 = vsel %vm1039, %v2781, %v2732
        %v2784 = vsel %vm1039, %v2782, %v2734
        %v2785 = vsel %vm1042, %v2783, %v2740
        %v2786 = vsel %vm1042, %v2784, %v2742
        %v2787 = vsel %vm1045, %v2785, %v2748
        %v2788 = vsel %vm1045, %v2786, %v2750
        %v2789 = vsel %vm1048, %v2787, %v2756
        %v2790 = vsel %vm1048, %v2788, %v2758
        %v2791 = vlaneseq
        %v2792 = vshrl.u32 %v2791, 7
        %v2793 = vsub.s32 0, %v2792
        %v2794 = vrot.slane %v164, %v2793
        %2796 = vbcast.lane.b32.xlu0 %v2794, 256
        %v2797 = vpop.permute.xlu0 %2796
        %s2799 = sor.u32 256, 8
        %2800 = vbcast.lane.b32.xlu0 %v2794, %s2799
        %v2801 = vpop.permute.xlu0 %2800
        %v2802 = vlaneseq
        %v2803 = vshrl.u32 %v2802, 7
        %v2804 = vsub.s32 1, %v2803
        %v2805 = vrot.slane %v164, %v2804
        %2807 = vbcast.lane.b32.xlu0 %v2805, 256
        %v2808 = vpop.permute.xlu0 %2807
        %s2810 = sor.u32 256, 8
        %2811 = vbcast.lane.b32.xlu0 %v2805, %s2810
        %v2812 = vpop.permute.xlu0 %2811
        %v2813 = vlaneseq
        %v2814 = vshrl.u32 %v2813, 7
        %v2815 = vsub.s32 2, %v2814
        %v2816 = vrot.slane %v164, %v2815
        %2818 = vbcast.lane.b32.xlu0 %v2816, 256
        %v2819 = vpop.permute.xlu0 %2818
        %s2821 = sor.u32 256, 8
        %2822 = vbcast.lane.b32.xlu0 %v2816, %s2821
        %v2823 = vpop.permute.xlu0 %2822
        %v2824 = vlaneseq
        %v2825 = vshrl.u32 %v2824, 7
        %v2826 = vsub.s32 3, %v2825
        %v2827 = vrot.slane %v164, %v2826
        %2829 = vbcast.lane.b32.xlu0 %v2827, 256
        %v2830 = vpop.permute.xlu0 %2829
        %s2832 = sor.u32 256, 8
        %2833 = vbcast.lane.b32.xlu0 %v2827, %s2832
        %v2834 = vpop.permute.xlu0 %2833
        %v2835 = vlaneseq
        %v2836 = vshrl.u32 %v2835, 7
        %v2837 = vsub.s32 4, %v2836
        %v2838 = vrot.slane %v164, %v2837
        %2840 = vbcast.lane.b32.xlu0 %v2838, 256
        %v2841 = vpop.permute.xlu0 %2840
        %s2843 = sor.u32 256, 8
        %2844 = vbcast.lane.b32.xlu0 %v2838, %s2843
        %v2845 = vpop.permute.xlu0 %2844
        %v2846 = vlaneseq
        %v2847 = vshrl.u32 %v2846, 7
        %v2848 = vsub.s32 5, %v2847
        %v2849 = vrot.slane %v164, %v2848
        %2851 = vbcast.lane.b32.xlu0 %v2849, 256
        %v2852 = vpop.permute.xlu0 %2851
        %s2854 = sor.u32 256, 8
        %2855 = vbcast.lane.b32.xlu0 %v2849, %s2854
        %v2856 = vpop.permute.xlu0 %2855
        %v2857 = vlaneseq
        %v2858 = vshrl.u32 %v2857, 7
        %v2859 = vsub.s32 6, %v2858
        %v2860 = vrot.slane %v164, %v2859
        %2862 = vbcast.lane.b32.xlu0 %v2860, 256
        %v2863 = vpop.permute.xlu0 %2862
        %s2865 = sor.u32 256, 8
        %2866 = vbcast.lane.b32.xlu0 %v2860, %s2865
        %v2867 = vpop.permute.xlu0 %2866
        %v2868 = vlaneseq
        %v2869 = vshrl.u32 %v2868, 7
        %v2870 = vsub.s32 7, %v2869
        %v2871 = vrot.slane %v164, %v2870
        %2873 = vbcast.lane.b32.xlu0 %v2871, 256
        %v2874 = vpop.permute.xlu0 %2873
        %s2876 = sor.u32 256, 8
        %2877 = vbcast.lane.b32.xlu0 %v2871, %s2876
        %v2878 = vpop.permute.xlu0 %2877
        %v2879 = vlaneseq
        %v2880 = vshrl.u32 %v2879, 7
        %v2881 = vsub.s32 0, %v2880
        %v2882 = vrot.slane %v165, %v2881
        %2884 = vbcast.lane.b32.xlu0 %v2882, 256
        %v2885 = vpop.permute.xlu0 %2884
        %s2887 = sor.u32 256, 8
        %2888 = vbcast.lane.b32.xlu0 %v2882, %s2887
        %v2889 = vpop.permute.xlu0 %2888
        %v2890 = vlaneseq
        %v2891 = vshrl.u32 %v2890, 7
        %v2892 = vsub.s32 1, %v2891
        %v2893 = vrot.slane %v165, %v2892
        %2895 = vbcast.lane.b32.xlu0 %v2893, 256
        %v2896 = vpop.permute.xlu0 %2895
        %s2898 = sor.u32 256, 8
        %2899 = vbcast.lane.b32.xlu0 %v2893, %s2898
        %v2900 = vpop.permute.xlu0 %2899
        %v2901 = vlaneseq
        %v2902 = vshrl.u32 %v2901, 7
        %v2903 = vsub.s32 2, %v2902
        %v2904 = vrot.slane %v165, %v2903
        %2906 = vbcast.lane.b32.xlu0 %v2904, 256
        %v2907 = vpop.permute.xlu0 %2906
        %s2909 = sor.u32 256, 8
        %2910 = vbcast.lane.b32.xlu0 %v2904, %s2909
        %v2911 = vpop.permute.xlu0 %2910
        %v2912 = vlaneseq
        %v2913 = vshrl.u32 %v2912, 7
        %v2914 = vsub.s32 3, %v2913
        %v2915 = vrot.slane %v165, %v2914
        %2917 = vbcast.lane.b32.xlu0 %v2915, 256
        %v2918 = vpop.permute.xlu0 %2917
        %s2920 = sor.u32 256, 8
        %2921 = vbcast.lane.b32.xlu0 %v2915, %s2920
        %v2922 = vpop.permute.xlu0 %2921
        %v2923 = vlaneseq
        %v2924 = vshrl.u32 %v2923, 7
        %v2925 = vsub.s32 4, %v2924
        %v2926 = vrot.slane %v165, %v2925
        %2928 = vbcast.lane.b32.xlu0 %v2926, 256
        %v2929 = vpop.permute.xlu0 %2928
        %s2931 = sor.u32 256, 8
        %2932 = vbcast.lane.b32.xlu0 %v2926, %s2931
        %v2933 = vpop.permute.xlu0 %2932
        %v2934 = vlaneseq
        %v2935 = vshrl.u32 %v2934, 7
        %v2936 = vsub.s32 5, %v2935
        %v2937 = vrot.slane %v165, %v2936
        %2939 = vbcast.lane.b32.xlu0 %v2937, 256
        %v2940 = vpop.permute.xlu0 %2939
        %s2942 = sor.u32 256, 8
        %2943 = vbcast.lane.b32.xlu0 %v2937, %s2942
        %v2944 = vpop.permute.xlu0 %2943
        %v2945 = vlaneseq
        %v2946 = vshrl.u32 %v2945, 7
        %v2947 = vsub.s32 6, %v2946
        %v2948 = vrot.slane %v165, %v2947
        %2950 = vbcast.lane.b32.xlu0 %v2948, 256
        %v2951 = vpop.permute.xlu0 %2950
        %s2953 = sor.u32 256, 8
        %2954 = vbcast.lane.b32.xlu0 %v2948, %s2953
        %v2955 = vpop.permute.xlu0 %2954
        %v2956 = vlaneseq
        %v2957 = vshrl.u32 %v2956, 7
        %v2958 = vsub.s32 7, %v2957
        %v2959 = vrot.slane %v165, %v2958
        %2961 = vbcast.lane.b32.xlu0 %v2959, 256
        %v2962 = vpop.permute.xlu0 %2961
        %s2964 = sor.u32 256, 8
        %2965 = vbcast.lane.b32.xlu0 %v2959, %s2964
        %v2966 = vpop.permute.xlu0 %2965
        %v2967 = vcombine.low %v2797, %v2819
        %v2968 = vcombine.high %v2797, %v2819
        %v2970 = vunpack.c.l.s4 1983009808
        %v2971 = vunpack.c.0.s8 %v2970
        %v2972 = vlaneseq
        %v2973 = vshrl.u32 %v2972, 7
        %v2974 = vsub.s32 %v2971, %v2973
        %v2975 = vrot.slane %v2967, %v2974
        %v2977 = vunpack.c.l.s4 1983009808
        %v2978 = vunpack.c.0.s8 %v2977
        %v2979 = vlaneseq
        %v2980 = vshrl.u32 %v2979, 7
        %v2981 = vsub.s32 %v2978, %v2980
        %v2982 = vrot.slane %v2968, %v2981
        %v2983 = vcombine.low %v2808, %v2830
        %v2984 = vcombine.high %v2808, %v2830
        %v2986 = vunpack.c.l.s4 1983009808
        %v2987 = vunpack.c.0.s8 %v2986
        %v2988 = vlaneseq
        %v2989 = vshrl.u32 %v2988, 7
        %v2990 = vsub.s32 %v2987, %v2989
        %v2991 = vrot.slane %v2983, %v2990
        %v2993 = vunpack.c.l.s4 1983009808
        %v2994 = vunpack.c.0.s8 %v2993
        %v2995 = vlaneseq
        %v2996 = vshrl.u32 %v2995, 7
        %v2997 = vsub.s32 %v2994, %v2996
        %v2998 = vrot.slane %v2984, %v2997
        %v2999 = vcombine.low %v2841, %v2863
        %v3000 = vcombine.high %v2841, %v2863
        %v3002 = vunpack.c.l.s4 1983009808
        %v3003 = vunpack.c.0.s8 %v3002
        %v3004 = vlaneseq
        %v3005 = vshrl.u32 %v3004, 7
        %v3006 = vsub.s32 %v3003, %v3005
        %v3007 = vrot.slane %v2999, %v3006
        %v3009 = vunpack.c.l.s4 1983009808
        %v3010 = vunpack.c.0.s8 %v3009
        %v3011 = vlaneseq
        %v3012 = vshrl.u32 %v3011, 7
        %v3013 = vsub.s32 %v3010, %v3012
        %v3014 = vrot.slane %v3000, %v3013
        %v3015 = vcombine.low %v2852, %v2874
        %v3016 = vcombine.high %v2852, %v2874
        %v3018 = vunpack.c.l.s4 1983009808
        %v3019 = vunpack.c.0.s8 %v3018
        %v3020 = vlaneseq
        %v3021 = vshrl.u32 %v3020, 7
        %v3022 = vsub.s32 %v3019, %v3021
        %v3023 = vrot.slane %v3015, %v3022
        %v3025 = vunpack.c.l.s4 1983009808
        %v3026 = vunpack.c.0.s8 %v3025
        %v3027 = vlaneseq
        %v3028 = vshrl.u32 %v3027, 7
        %v3029 = vsub.s32 %v3026, %v3028
        %v3030 = vrot.slane %v3016, %v3029
        %v3031 = vcombine.low %v2975, %v2991
        %v3032 = vcombine.high %v2975, %v2991
        %v3034 = vunpack.c.l.s4 1934713408
        %v3035 = vunpack.c.0.s8 %v3034
        %v3036 = vlaneseq
        %v3037 = vshrl.u32 %v3036, 7
        %v3038 = vsub.s32 %v3035, %v3037
        %v3039 = vrot.slane %v3031, %v3038
        %v3041 = vunpack.c.l.s4 1934713408
        %v3042 = vunpack.c.0.s8 %v3041
        %v3043 = vlaneseq
        %v3044 = vshrl.u32 %v3043, 7
        %v3045 = vsub.s32 %v3042, %v3044
        %v3046 = vrot.slane %v3032, %v3045
        %v3047 = vcombine.low %v2982, %v2998
        %v3048 = vcombine.high %v2982, %v2998
        %v3050 = vunpack.c.l.s4 1934713408
        %v3051 = vunpack.c.0.s8 %v3050
        %v3052 = vlaneseq
        %v3053 = vshrl.u32 %v3052, 7
        %v3054 = vsub.s32 %v3051, %v3053
        %v3055 = vrot.slane %v3047, %v3054
        %v3057 = vunpack.c.l.s4 1934713408
        %v3058 = vunpack.c.0.s8 %v3057
        %v3059 = vlaneseq
        %v3060 = vshrl.u32 %v3059, 7
        %v3061 = vsub.s32 %v3058, %v3060
        %v3062 = vrot.slane %v3048, %v3061
        %v3063 = vcombine.low %v3007, %v3023
        %v3064 = vcombine.high %v3007, %v3023
        %v3066 = vunpack.c.l.s4 1934713408
        %v3067 = vunpack.c.0.s8 %v3066
        %v3068 = vlaneseq
        %v3069 = vshrl.u32 %v3068, 7
        %v3070 = vsub.s32 %v3067, %v3069
        %v3071 = vrot.slane %v3063, %v3070
        %v3073 = vunpack.c.l.s4 1934713408
        %v3074 = vunpack.c.0.s8 %v3073
        %v3075 = vlaneseq
        %v3076 = vshrl.u32 %v3075, 7
        %v3077 = vsub.s32 %v3074, %v3076
        %v3078 = vrot.slane %v3064, %v3077
        %v3079 = vcombine.low %v3014, %v3030
        %v3080 = vcombine.high %v3014, %v3030
        %v3082 = vunpack.c.l.s4 1934713408
        %v3083 = vunpack.c.0.s8 %v3082
        %v3084 = vlaneseq
        %v3085 = vshrl.u32 %v3084, 7
        %v3086 = vsub.s32 %v3083, %v3085
        %v3087 = vrot.slane %v3079, %v3086
        %v3089 = vunpack.c.l.s4 1934713408
        %v3090 = vunpack.c.0.s8 %v3089
        %v3091 = vlaneseq
        %v3092 = vshrl.u32 %v3091, 7
        %v3093 = vsub.s32 %v3090, %v3092
        %v3094 = vrot.slane %v3080, %v3093
        %v3095 = vcombine.low %v3039, %v3071
        %v3096 = vcombine.high %v3039, %v3071
        %v3097 = vcombine.low %v3046, %v3078
        %v3098 = vcombine.high %v3046, %v3078
        %v3099 = vcombine.low %v3055, %v3087
        %v3100 = vcombine.high %v3055, %v3087
        %v3101 = vcombine.low %v3062, %v3094
        %v3102 = vcombine.high %v3062, %v3094
        %v3103 = vcombine.low %v2885, %v2907
        %v3104 = vcombine.high %v2885, %v2907
        %v3106 = vunpack.c.l.s4 1983009808
        %v3107 = vunpack.c.0.s8 %v3106
        %v3108 = vlaneseq
        %v3109 = vshrl.u32 %v3108, 7
        %v3110 = vsub.s32 %v3107, %v3109
        %v3111 = vrot.slane %v3103, %v3110
        %v3113 = vunpack.c.l.s4 1983009808
        %v3114 = vunpack.c.0.s8 %v3113
        %v3115 = vlaneseq
        %v3116 = vshrl.u32 %v3115, 7
        %v3117 = vsub.s32 %v3114, %v3116
        %v3118 = vrot.slane %v3104, %v3117
        %v3119 = vcombine.low %v2896, %v2918
        %v3120 = vcombine.high %v2896, %v2918
        %v3122 = vunpack.c.l.s4 1983009808
        %v3123 = vunpack.c.0.s8 %v3122
        %v3124 = vlaneseq
        %v3125 = vshrl.u32 %v3124, 7
        %v3126 = vsub.s32 %v3123, %v3125
        %v3127 = vrot.slane %v3119, %v3126
        %v3129 = vunpack.c.l.s4 1983009808
        %v3130 = vunpack.c.0.s8 %v3129
        %v3131 = vlaneseq
        %v3132 = vshrl.u32 %v3131, 7
        %v3133 = vsub.s32 %v3130, %v3132
        %v3134 = vrot.slane %v3120, %v3133
        %v3135 = vcombine.low %v2929, %v2951
        %v3136 = vcombine.high %v2929, %v2951
        %v3138 = vunpack.c.l.s4 1983009808
        %v3139 = vunpack.c.0.s8 %v3138
        %v3140 = vlaneseq
        %v3141 = vshrl.u32 %v3140, 7
        %v3142 = vsub.s32 %v3139, %v3141
        %v3143 = vrot.slane %v3135, %v3142
        %v3145 = vunpack.c.l.s4 1983009808
        %v3146 = vunpack.c.0.s8 %v3145
        %v3147 = vlaneseq
        %v3148 = vshrl.u32 %v3147, 7
        %v3149 = vsub.s32 %v3146, %v3148
        %v3150 = vrot.slane %v3136, %v3149
        %v3151 = vcombine.low %v2940, %v2962
        %v3152 = vcombine.high %v2940, %v2962
        %v3154 = vunpack.c.l.s4 1983009808
        %v3155 = vunpack.c.0.s8 %v3154
        %v3156 = vlaneseq
        %v3157 = vshrl.u32 %v3156, 7
        %v3158 = vsub.s32 %v3155, %v3157
        %v3159 = vrot.slane %v3151, %v3158
        %v3161 = vunpack.c.l.s4 1983009808
        %v3162 = vunpack.c.0.s8 %v3161
        %v3163 = vlaneseq
        %v3164 = vshrl.u32 %v3163, 7
        %v3165 = vsub.s32 %v3162, %v3164
        %v3166 = vrot.slane %v3152, %v3165
        %v3167 = vcombine.low %v3111, %v3127
        %v3168 = vcombine.high %v3111, %v3127
        %v3170 = vunpack.c.l.s4 1934713408
        %v3171 = vunpack.c.0.s8 %v3170
        %v3172 = vlaneseq
        %v3173 = vshrl.u32 %v3172, 7
        %v3174 = vsub.s32 %v3171, %v3173
        %v3175 = vrot.slane %v3167, %v3174
        %v3177 = vunpack.c.l.s4 1934713408
        %v3178 = vunpack.c.0.s8 %v3177
        %v3179 = vlaneseq
        %v3180 = vshrl.u32 %v3179, 7
        %v3181 = vsub.s32 %v3178, %v3180
        %v3182 = vrot.slane %v3168, %v3181
        %v3183 = vcombine.low %v3118, %v3134
        %v3184 = vcombine.high %v3118, %v3134
        %v3186 = vunpack.c.l.s4 1934713408
        %v3187 = vunpack.c.0.s8 %v3186
        %v3188 = vlaneseq
        %v3189 = vshrl.u32 %v3188, 7
        %v3190 = vsub.s32 %v3187, %v3189
        %v3191 = vrot.slane %v3183, %v3190
        %v3193 = vunpack.c.l.s4 1934713408
        %v3194 = vunpack.c.0.s8 %v3193
        %v3195 = vlaneseq
        %v3196 = vshrl.u32 %v3195, 7
        %v3197 = vsub.s32 %v3194, %v3196
        %v3198 = vrot.slane %v3184, %v3197
        %v3199 = vcombine.low %v3143, %v3159
        %v3200 = vcombine.high %v3143, %v3159
        %v3202 = vunpack.c.l.s4 1934713408
        %v3203 = vunpack.c.0.s8 %v3202
        %v3204 = vlaneseq
        %v3205 = vshrl.u32 %v3204, 7
        %v3206 = vsub.s32 %v3203, %v3205
        %v3207 = vrot.slane %v3199, %v3206
        %v3209 = vunpack.c.l.s4 1934713408
        %v3210 = vunpack.c.0.s8 %v3209
        %v3211 = vlaneseq
        %v3212 = vshrl.u32 %v3211, 7
        %v3213 = vsub.s32 %v3210, %v3212
        %v3214 = vrot.slane %v3200, %v3213
        %v3215 = vcombine.low %v3150, %v3166
        %v3216 = vcombine.high %v3150, %v3166
        %v3218 = vunpack.c.l.s4 1934713408
        %v3219 = vunpack.c.0.s8 %v3218
        %v3220 = vlaneseq
        %v3221 = vshrl.u32 %v3220, 7
        %v3222 = vsub.s32 %v3219, %v3221
        %v3223 = vrot.slane %v3215, %v3222
        %v3225 = vunpack.c.l.s4 1934713408
        %v3226 = vunpack.c.0.s8 %v3225
        %v3227 = vlaneseq
        %v3228 = vshrl.u32 %v3227, 7
        %v3229 = vsub.s32 %v3226, %v3228
        %v3230 = vrot.slane %v3216, %v3229
        %v3231 = vcombine.low %v3175, %v3207
        %v3232 = vcombine.high %v3175, %v3207
        %v3233 = vcombine.low %v3182, %v3214
        %v3234 = vcombine.high %v3182, %v3214
        %v3235 = vcombine.low %v3191, %v3223
        %v3236 = vcombine.high %v3191, %v3223
        %v3237 = vcombine.low %v3198, %v3230
        %v3238 = vcombine.high %v3198, %v3230
        %v3239 = vcombine.low %v2801, %v2823
        %v3240 = vcombine.high %v2801, %v2823
        %v3242 = vunpack.c.l.s4 1983009808
        %v3243 = vunpack.c.0.s8 %v3242
        %v3244 = vlaneseq
        %v3245 = vshrl.u32 %v3244, 7
        %v3246 = vsub.s32 %v3243, %v3245
        %v3247 = vrot.slane %v3239, %v3246
        %v3249 = vunpack.c.l.s4 1983009808
        %v3250 = vunpack.c.0.s8 %v3249
        %v3251 = vlaneseq
        %v3252 = vshrl.u32 %v3251, 7
        %v3253 = vsub.s32 %v3250, %v3252
        %v3254 = vrot.slane %v3240, %v3253
        %v3255 = vcombine.low %v2812, %v2834
        %v3256 = vcombine.high %v2812, %v2834
        %v3258 = vunpack.c.l.s4 1983009808
        %v3259 = vunpack.c.0.s8 %v3258
        %v3260 = vlaneseq
        %v3261 = vshrl.u32 %v3260, 7
        %v3262 = vsub.s32 %v3259, %v3261
        %v3263 = vrot.slane %v3255, %v3262
        %v3265 = vunpack.c.l.s4 1983009808
        %v3266 = vunpack.c.0.s8 %v3265
        %v3267 = vlaneseq
        %v3268 = vshrl.u32 %v3267, 7
        %v3269 = vsub.s32 %v3266, %v3268
        %v3270 = vrot.slane %v3256, %v3269
        %v3271 = vcombine.low %v2845, %v2867
        %v3272 = vcombine.high %v2845, %v2867
        %v3274 = vunpack.c.l.s4 1983009808
        %v3275 = vunpack.c.0.s8 %v3274
        %v3276 = vlaneseq
        %v3277 = vshrl.u32 %v3276, 7
        %v3278 = vsub.s32 %v3275, %v3277
        %v3279 = vrot.slane %v3271, %v3278
        %v3281 = vunpack.c.l.s4 1983009808
        %v3282 = vunpack.c.0.s8 %v3281
        %v3283 = vlaneseq
        %v3284 = vshrl.u32 %v3283, 7
        %v3285 = vsub.s32 %v3282, %v3284
        %v3286 = vrot.slane %v3272, %v3285
        %v3287 = vcombine.low %v2856, %v2878
        %v3288 = vcombine.high %v2856, %v2878
        %v3290 = vunpack.c.l.s4 1983009808
        %v3291 = vunpack.c.0.s8 %v3290
        %v3292 = vlaneseq
        %v3293 = vshrl.u32 %v3292, 7
        %v3294 = vsub.s32 %v3291, %v3293
        %v3295 = vrot.slane %v3287, %v3294
        %v3297 = vunpack.c.l.s4 1983009808
        %v3298 = vunpack.c.0.s8 %v3297
        %v3299 = vlaneseq
        %v3300 = vshrl.u32 %v3299, 7
        %v3301 = vsub.s32 %v3298, %v3300
        %v3302 = vrot.slane %v3288, %v3301
        %v3303 = vcombine.low %v3247, %v3263
        %v3304 = vcombine.high %v3247, %v3263
        %v3306 = vunpack.c.l.s4 1934713408
        %v3307 = vunpack.c.0.s8 %v3306
        %v3308 = vlaneseq
        %v3309 = vshrl.u32 %v3308, 7
        %v3310 = vsub.s32 %v3307, %v3309
        %v3311 = vrot.slane %v3303, %v3310
        %v3313 = vunpack.c.l.s4 1934713408
        %v3314 = vunpack.c.0.s8 %v3313
        %v3315 = vlaneseq
        %v3316 = vshrl.u32 %v3315, 7
        %v3317 = vsub.s32 %v3314, %v3316
        %v3318 = vrot.slane %v3304, %v3317
        %v3319 = vcombine.low %v3254, %v3270
        %v3320 = vcombine.high %v3254, %v3270
        %v3322 = vunpack.c.l.s4 1934713408
        %v3323 = vunpack.c.0.s8 %v3322
        %v3324 = vlaneseq
        %v3325 = vshrl.u32 %v3324, 7
        %v3326 = vsub.s32 %v3323, %v3325
        %v3327 = vrot.slane %v3319, %v3326
        %v3329 = vunpack.c.l.s4 1934713408
        %v3330 = vunpack.c.0.s8 %v3329
        %v3331 = vlaneseq
        %v3332 = vshrl.u32 %v3331, 7
        %v3333 = vsub.s32 %v3330, %v3332
        %v3334 = vrot.slane %v3320, %v3333
        %v3335 = vcombine.low %v3279, %v3295
        %v3336 = vcombine.high %v3279, %v3295
        %v3338 = vunpack.c.l.s4 1934713408
        %v3339 = vunpack.c.0.s8 %v3338
        %v3340 = vlaneseq
        %v3341 = vshrl.u32 %v3340, 7
        %v3342 = vsub.s32 %v3339, %v3341
        %v3343 = vrot.slane %v3335, %v3342
        %v3345 = vunpack.c.l.s4 1934713408
        %v3346 = vunpack.c.0.s8 %v3345
        %v3347 = vlaneseq
        %v3348 = vshrl.u32 %v3347, 7
        %v3349 = vsub.s32 %v3346, %v3348
        %v3350 = vrot.slane %v3336, %v3349
        %v3351 = vcombine.low %v3286, %v3302
        %v3352 = vcombine.high %v3286, %v3302
        %v3354 = vunpack.c.l.s4 1934713408
        %v3355 = vunpack.c.0.s8 %v3354
        %v3356 = vlaneseq
        %v3357 = vshrl.u32 %v3356, 7
        %v3358 = vsub.s32 %v3355, %v3357
        %v3359 = vrot.slane %v3351, %v3358
        %v3361 = vunpack.c.l.s4 1934713408
        %v3362 = vunpack.c.0.s8 %v3361
        %v3363 = vlaneseq
        %v3364 = vshrl.u32 %v3363, 7
        %v3365 = vsub.s32 %v3362, %v3364
        %v3366 = vrot.slane %v3352, %v3365
        %v3367 = vcombine.low %v3311, %v3343
        %v3368 = vcombine.high %v3311, %v3343
        %v3369 = vcombine.low %v3318, %v3350
        %v3370 = vcombine.high %v3318, %v3350
        %v3371 = vcombine.low %v3327, %v3359
        %v3372 = vcombine.high %v3327, %v3359
        %v3373 = vcombine.low %v3334, %v3366
        %v3374 = vcombine.high %v3334, %v3366
        %v3375 = vcombine.low %v2889, %v2911
        %v3376 = vcombine.high %v2889, %v2911
        %v3378 = vunpack.c.l.s4 1983009808
        %v3379 = vunpack.c.0.s8 %v3378
        %v3380 = vlaneseq
        %v3381 = vshrl.u32 %v3380, 7
        %v3382 = vsub.s32 %v3379, %v3381
        %v3383 = vrot.slane %v3375, %v3382
        %v3385 = vunpack.c.l.s4 1983009808
        %v3386 = vunpack.c.0.s8 %v3385
        %v3387 = vlaneseq
        %v3388 = vshrl.u32 %v3387, 7
        %v3389 = vsub.s32 %v3386, %v3388
        %v3390 = vrot.slane %v3376, %v3389
        %v3391 = vcombine.low %v2900, %v2922
        %v3392 = vcombine.high %v2900, %v2922
        %v3394 = vunpack.c.l.s4 1983009808
        %v3395 = vunpack.c.0.s8 %v3394
        %v3396 = vlaneseq
        %v3397 = vshrl.u32 %v3396, 7
        %v3398 = vsub.s32 %v3395, %v3397
        %v3399 = vrot.slane %v3391, %v3398
        %v3401 = vunpack.c.l.s4 1983009808
        %v3402 = vunpack.c.0.s8 %v3401
        %v3403 = vlaneseq
        %v3404 = vshrl.u32 %v3403, 7
        %v3405 = vsub.s32 %v3402, %v3404
        %v3406 = vrot.slane %v3392, %v3405
        %v3407 = vcombine.low %v2933, %v2955
        %v3408 = vcombine.high %v2933, %v2955
        %v3410 = vunpack.c.l.s4 1983009808
        %v3411 = vunpack.c.0.s8 %v3410
        %v3412 = vlaneseq
        %v3413 = vshrl.u32 %v3412, 7
        %v3414 = vsub.s32 %v3411, %v3413
        %v3415 = vrot.slane %v3407, %v3414
        %v3417 = vunpack.c.l.s4 1983009808
        %v3418 = vunpack.c.0.s8 %v3417
        %v3419 = vlaneseq
        %v3420 = vshrl.u32 %v3419, 7
        %v3421 = vsub.s32 %v3418, %v3420
        %v3422 = vrot.slane %v3408, %v3421
        %v3423 = vcombine.low %v2944, %v2966
        %v3424 = vcombine.high %v2944, %v2966
        %v3426 = vunpack.c.l.s4 1983009808
        %v3427 = vunpack.c.0.s8 %v3426
        %v3428 = vlaneseq
        %v3429 = vshrl.u32 %v3428, 7
        %v3430 = vsub.s32 %v3427, %v3429
        %v3431 = vrot.slane %v3423, %v3430
        %v3433 = vunpack.c.l.s4 1983009808
        %v3434 = vunpack.c.0.s8 %v3433
        %v3435 = vlaneseq
        %v3436 = vshrl.u32 %v3435, 7
        %v3437 = vsub.s32 %v3434, %v3436
        %v3438 = vrot.slane %v3424, %v3437
        %v3439 = vcombine.low %v3383, %v3399
        %v3440 = vcombine.high %v3383, %v3399
        %v3442 = vunpack.c.l.s4 1934713408
        %v3443 = vunpack.c.0.s8 %v3442
        %v3444 = vlaneseq
        %v3445 = vshrl.u32 %v3444, 7
        %v3446 = vsub.s32 %v3443, %v3445
        %v3447 = vrot.slane %v3439, %v3446
        %v3449 = vunpack.c.l.s4 1934713408
        %v3450 = vunpack.c.0.s8 %v3449
        %v3451 = vlaneseq
        %v3452 = vshrl.u32 %v3451, 7
        %v3453 = vsub.s32 %v3450, %v3452
        %v3454 = vrot.slane %v3440, %v3453
        %v3455 = vcombine.low %v3390, %v3406
        %v3456 = vcombine.high %v3390, %v3406
        %v3458 = vunpack.c.l.s4 1934713408
        %v3459 = vunpack.c.0.s8 %v3458
        %v3460 = vlaneseq
        %v3461 = vshrl.u32 %v3460, 7
        %v3462 = vsub.s32 %v3459, %v3461
        %v3463 = vrot.slane %v3455, %v3462
        %v3465 = vunpack.c.l.s4 1934713408
        %v3466 = vunpack.c.0.s8 %v3465
        %v3467 = vlaneseq
        %v3468 = vshrl.u32 %v3467, 7
        %v3469 = vsub.s32 %v3466, %v3468
        %v3470 = vrot.slane %v3456, %v3469
        %v3471 = vcombine.low %v3415, %v3431
        %v3472 = vcombine.high %v3415, %v3431
        %v3474 = vunpack.c.l.s4 1934713408
        %v3475 = vunpack.c.0.s8 %v3474
        %v3476 = vlaneseq
        %v3477 = vshrl.u32 %v3476, 7
        %v3478 = vsub.s32 %v3475, %v3477
        %v3479 = vrot.slane %v3471, %v3478
        %v3481 = vunpack.c.l.s4 1934713408
        %v3482 = vunpack.c.0.s8 %v3481
        %v3483 = vlaneseq
        %v3484 = vshrl.u32 %v3483, 7
        %v3485 = vsub.s32 %v3482, %v3484
        %v3486 = vrot.slane %v3472, %v3485
        %v3487 = vcombine.low %v3422, %v3438
        %v3488 = vcombine.high %v3422, %v3438
        %v3490 = vunpack.c.l.s4 1934713408
        %v3491 = vunpack.c.0.s8 %v3490
        %v3492 = vlaneseq
        %v3493 = vshrl.u32 %v3492, 7
        %v3494 = vsub.s32 %v3491, %v3493
        %v3495 = vrot.slane %v3487, %v3494
        %v3497 = vunpack.c.l.s4 1934713408
        %v3498 = vunpack.c.0.s8 %v3497
        %v3499 = vlaneseq
        %v3500 = vshrl.u32 %v3499, 7
        %v3501 = vsub.s32 %v3498, %v3500
        %v3502 = vrot.slane %v3488, %v3501
        %v3503 = vcombine.low %v3447, %v3479
        %v3504 = vcombine.high %v3447, %v3479
        %v3505 = vcombine.low %v3454, %v3486
        %v3506 = vcombine.high %v3454, %v3486
        %v3507 = vcombine.low %v3463, %v3495
        %v3508 = vcombine.high %v3463, %v3495
        %v3509 = vcombine.low %v3470, %v3502
        %v3510 = vcombine.high %v3470, %v3502
        %3513 = vrot.lane.b32.xlu0 %v3096, 8
        %v3514 = vpop.permute.xlu0 %3513
        %3515 = vrot.lane.b32.xlu0 %v3232, 8
        %v3516 = vpop.permute.xlu0 %3515
        %3521 = vrot.lane.b32.xlu0 %v3097, 16
        %v3522 = vpop.permute.xlu0 %3521
        %3523 = vrot.lane.b32.xlu0 %v3233, 16
        %v3524 = vpop.permute.xlu0 %3523
        %3529 = vrot.lane.b32.xlu0 %v3098, 24
        %v3530 = vpop.permute.xlu0 %3529
        %3531 = vrot.lane.b32.xlu0 %v3234, 24
        %v3532 = vpop.permute.xlu0 %3531
        %3537 = vrot.lane.b32.xlu0 %v3099, 32
        %v3538 = vpop.permute.xlu0 %3537
        %3539 = vrot.lane.b32.xlu0 %v3235, 32
        %v3540 = vpop.permute.xlu0 %3539
        %3545 = vrot.lane.b32.xlu0 %v3100, 40
        %v3546 = vpop.permute.xlu0 %3545
        %3547 = vrot.lane.b32.xlu0 %v3236, 40
        %v3548 = vpop.permute.xlu0 %3547
        %3553 = vrot.lane.b32.xlu0 %v3101, 48
        %v3554 = vpop.permute.xlu0 %3553
        %3555 = vrot.lane.b32.xlu0 %v3237, 48
        %v3556 = vpop.permute.xlu0 %3555
        %3561 = vrot.lane.b32.xlu0 %v3102, 56
        %v3562 = vpop.permute.xlu0 %3561
        %3563 = vrot.lane.b32.xlu0 %v3238, 56
        %v3564 = vpop.permute.xlu0 %3563
        %3569 = vrot.lane.b32.xlu0 %v3367, 64
        %v3570 = vpop.permute.xlu0 %3569
        %3571 = vrot.lane.b32.xlu0 %v3503, 64
        %v3572 = vpop.permute.xlu0 %3571
        %3577 = vrot.lane.b32.xlu0 %v3368, 72
        %v3578 = vpop.permute.xlu0 %3577
        %3579 = vrot.lane.b32.xlu0 %v3504, 72
        %v3580 = vpop.permute.xlu0 %3579
        %3585 = vrot.lane.b32.xlu0 %v3369, 80
        %v3586 = vpop.permute.xlu0 %3585
        %3587 = vrot.lane.b32.xlu0 %v3505, 80
        %v3588 = vpop.permute.xlu0 %3587
        %3593 = vrot.lane.b32.xlu0 %v3370, 88
        %v3594 = vpop.permute.xlu0 %3593
        %3595 = vrot.lane.b32.xlu0 %v3506, 88
        %v3596 = vpop.permute.xlu0 %3595
        %3601 = vrot.lane.b32.xlu0 %v3371, 96
        %v3602 = vpop.permute.xlu0 %3601
        %3603 = vrot.lane.b32.xlu0 %v3507, 96
        %v3604 = vpop.permute.xlu0 %3603
        %3609 = vrot.lane.b32.xlu0 %v3372, 104
        %v3610 = vpop.permute.xlu0 %3609
        %3611 = vrot.lane.b32.xlu0 %v3508, 104
        %v3612 = vpop.permute.xlu0 %3611
        %3617 = vrot.lane.b32.xlu0 %v3373, 112
        %v3618 = vpop.permute.xlu0 %3617
        %3619 = vrot.lane.b32.xlu0 %v3509, 112
        %v3620 = vpop.permute.xlu0 %3619
        %3625 = vrot.lane.b32.xlu0 %v3374, 120
        %v3626 = vpop.permute.xlu0 %3625
        %3627 = vrot.lane.b32.xlu0 %v3510, 120
        %v3628 = vpop.permute.xlu0 %3627
        %v3631 = vsel %vm1006, %v3095, %v3514
        %v3632 = vsel %vm1006, %v3231, %v3516
        %v3633 = vsel %vm1009, %v3631, %v3522
        %v3634 = vsel %vm1009, %v3632, %v3524
        %v3635 = vsel %vm1012, %v3633, %v3530
        %v3636 = vsel %vm1012, %v3634, %v3532
        %v3637 = vsel %vm1015, %v3635, %v3538
        %v3638 = vsel %vm1015, %v3636, %v3540
        %v3639 = vsel %vm1018, %v3637, %v3546
        %v3640 = vsel %vm1018, %v3638, %v3548
        %v3641 = vsel %vm1021, %v3639, %v3554
        %v3642 = vsel %vm1021, %v3640, %v3556
        %v3643 = vsel %vm1024, %v3641, %v3562
        %v3644 = vsel %vm1024, %v3642, %v3564
        %v3645 = vsel %vm1027, %v3643, %v3570
        %v3646 = vsel %vm1027, %v3644, %v3572
        %v3647 = vsel %vm1030, %v3645, %v3578
        %v3648 = vsel %vm1030, %v3646, %v3580
        %v3649 = vsel %vm1033, %v3647, %v3586
        %v3650 = vsel %vm1033, %v3648, %v3588
        %v3651 = vsel %vm1036, %v3649, %v3594
        %v3652 = vsel %vm1036, %v3650, %v3596
        %v3653 = vsel %vm1039, %v3651, %v3602
        %v3654 = vsel %vm1039, %v3652, %v3604
        %v3655 = vsel %vm1042, %v3653, %v3610
        %v3656 = vsel %vm1042, %v3654, %v3612
        %v3657 = vsel %vm1045, %v3655, %v3618
        %v3658 = vsel %vm1045, %v3656, %v3620
        %v3659 = vsel %vm1048, %v3657, %v3626
        %v3660 = vsel %vm1048, %v3658, %v3628
        %v3661 = vlaneseq
        %v3662 = vand.u32 %v3661, 127
        %vm3663 = vcmp.lt.s32.totalorder %v3662, 0
        %v3664 = vsub.s32 0, %v3662
        %v3665 = vsel %vm3663, %v3664, %v3662
        %v3666 = vshrl.u32 %v3665, 3
        %v3667 = vand.u32 %v3665, 7
        %v3668 = vsub.s32 0, %v3667
        %v3669 = vsel %vm3663, %v3668, %v3667
        %vm3670 = vcmp.ne.s32.totalorder %v3669, 0
        %vm3671 = vcmp.lt.s32.totalorder %v3669, 0
        %vm3672 = vmand %vm3671, %vm3670
        %v3673 = vadd.s32 %v3669, 8
        %v3674 = vsel %vm3672, %v3673, %v3669
        %v3675 = vcvt.s32.f32 %v3674
        %v3676 = vsub.f32 %v3675, 3.5
        %v3677 = vmul.f32 %v3676, 0.125
        %v3678 = vmul.f32 %v1049, %v3677
        %v3679 = vmul.f32 %v1050, %v3677
        %v3680 = vadd.f32 %v3678, %v2789
        %v3681 = vadd.f32 %v3679, %v2790
        %v3682 = vmul.f32 %v1919, -0.4375
        %v3683 = vmul.f32 %v1920, -0.4375
        %v3684 = vadd.f32 %v3680, %v3682
        %v3685 = vadd.f32 %v3681, %v3683
        %v3686 = vrcp.pop %v3684
        %v3687 = vrcp.pop %v3685
        %v3688 = vmul.f32 %v3659, %v3686
        %v3689 = vmul.f32 %v3660, %v3687
        %v3692 = vcombine.high %v3688, %v3688
        %v3694 = vunpack.c.l.s4 1966171168
        %v3695 = vunpack.c.0.s8 %v3694
        %v3696 = vlaneseq
        %v3697 = vshrl.u32 %v3696, 7
        %v3698 = vsub.s32 %v3695, %v3697
        %v3699 = vrot.slane %v3688, %v3698
        %v3701 = vunpack.c.l.s4 1966171168
        %v3702 = vunpack.c.0.s8 %v3701
        %v3703 = vlaneseq
        %v3704 = vshrl.u32 %v3703, 7
        %v3705 = vsub.s32 %v3702, %v3704
        %v3706 = vrot.slane %v3692, %v3705
        %v3707 = vcombine.high %v3699, %v3699
        %v3708 = vcombine.high %v3706, %v3706
        %v3710 = vunpack.c.l.s4 1966171168
        %v3711 = vunpack.c.0.s8 %v3710
        %v3712 = vlaneseq
        %v3713 = vshrl.u32 %v3712, 7
        %v3714 = vsub.s32 %v3711, %v3713
        %v3715 = vrot.slane %v3699, %v3714
        %v3717 = vunpack.c.l.s4 1966171168
        %v3718 = vunpack.c.0.s8 %v3717
        %v3719 = vlaneseq
        %v3720 = vshrl.u32 %v3719, 7
        %v3721 = vsub.s32 %v3718, %v3720
        %v3722 = vrot.slane %v3706, %v3721
        %v3724 = vunpack.c.l.s4 1966171168
        %v3725 = vunpack.c.0.s8 %v3724
        %v3726 = vlaneseq
        %v3727 = vshrl.u32 %v3726, 7
        %v3728 = vsub.s32 %v3725, %v3727
        %v3729 = vrot.slane %v3707, %v3728
        %v3731 = vunpack.c.l.s4 1966171168
        %v3732 = vunpack.c.0.s8 %v3731
        %v3733 = vlaneseq
        %v3734 = vshrl.u32 %v3733, 7
        %v3735 = vsub.s32 %v3732, %v3734
        %v3736 = vrot.slane %v3708, %v3735
        %v3737 = vcombine.high %v3715, %v3715
        %v3738 = vcombine.high %v3722, %v3722
        %v3739 = vcombine.high %v3729, %v3729
        %v3740 = vcombine.high %v3736, %v3736
        %v3741 = vcombine.high %v3689, %v3689
        %v3743 = vunpack.c.l.s4 1966171168
        %v3744 = vunpack.c.0.s8 %v3743
        %v3745 = vlaneseq
        %v3746 = vshrl.u32 %v3745, 7
        %v3747 = vsub.s32 %v3744, %v3746
        %v3748 = vrot.slane %v3689, %v3747
        %v3750 = vunpack.c.l.s4 1966171168
        %v3751 = vunpack.c.0.s8 %v3750
        %v3752 = vlaneseq
        %v3753 = vshrl.u32 %v3752, 7
        %v3754 = vsub.s32 %v3751, %v3753
        %v3755 = vrot.slane %v3741, %v3754
        %v3756 = vcombine.high %v3748, %v3748
        %v3757 = vcombine.high %v3755, %v3755
        %v3759 = vunpack.c.l.s4 1966171168
        %v3760 = vunpack.c.0.s8 %v3759
        %v3761 = vlaneseq
        %v3762 = vshrl.u32 %v3761, 7
        %v3763 = vsub.s32 %v3760, %v3762
        %v3764 = vrot.slane %v3748, %v3763
        %v3766 = vunpack.c.l.s4 1966171168
        %v3767 = vunpack.c.0.s8 %v3766
        %v3768 = vlaneseq
        %v3769 = vshrl.u32 %v3768, 7
        %v3770 = vsub.s32 %v3767, %v3769
        %v3771 = vrot.slane %v3755, %v3770
        %v3773 = vunpack.c.l.s4 1966171168
        %v3774 = vunpack.c.0.s8 %v3773
        %v3775 = vlaneseq
        %v3776 = vshrl.u32 %v3775, 7
        %v3777 = vsub.s32 %v3774, %v3776
        %v3778 = vrot.slane %v3756, %v3777
        %v3780 = vunpack.c.l.s4 1966171168
        %v3781 = vunpack.c.0.s8 %v3780
        %v3782 = vlaneseq
        %v3783 = vshrl.u32 %v3782, 7
        %v3784 = vsub.s32 %v3781, %v3783
        %v3785 = vrot.slane %v3757, %v3784
        %v3786 = vcombine.high %v3764, %v3764
        %v3787 = vcombine.high %v3771, %v3771
        %v3788 = vcombine.high %v3778, %v3778
        %v3789 = vcombine.high %v3785, %v3785
        %3806 = vst [vmem:[%s152] sm:$0x1] %v3715
        %3807 = vst [vmem:[%s152 + $0x8] sm:$0x1] %v3729
        %3808 = vst [vmem:[%s152 + $0x10] sm:$0x1] %v3737
        %3809 = vst [vmem:[%s152 + $0x18] sm:$0x1] %v3739
        %3810 = vst [vmem:[%s152 + $0x20] sm:$0x1] %v3722
        %3811 = vst [vmem:[%s152 + $0x28] sm:$0x1] %v3736
        %3812 = vst [vmem:[%s152 + $0x30] sm:$0x1] %v3738
        %3813 = vst [vmem:[%s152 + $0x38] sm:$0x1] %v3740
        %3814 = vst [vmem:[%s152 + $0x40] sm:$0x1] %v3764
        %3815 = vst [vmem:[%s152 + $0x48] sm:$0x1] %v3778
        %3816 = vst [vmem:[%s152 + $0x50] sm:$0x1] %v3786
        %3817 = vst [vmem:[%s152 + $0x58] sm:$0x1] %v3788
        %3818 = vst [vmem:[%s152 + $0x60] sm:$0x1] %v3771
        %3819 = vst [vmem:[%s152 + $0x68] sm:$0x1] %v3785
        %3820 = vst [vmem:[%s152 + $0x70] sm:$0x1] %v3787
        %3821 = vst [vmem:[%s152 + $0x78] sm:$0x1] %v3789
        %v3822 = vmul.f32 %v1919, -0.3125
        %v3823 = vmul.f32 %v1920, -0.3125
        %v3824 = vadd.f32 %v3680, %v3822
        %v3825 = vadd.f32 %v3681, %v3823
        %v3826 = vrcp.pop %v3824
        %v3827 = vrcp.pop %v3825
        %v3828 = vmul.f32 %v3659, %v3826
        %v3829 = vmul.f32 %v3660, %v3827
        %v3832 = vcombine.high %v3828, %v3828
        %v3834 = vunpack.c.l.s4 1966171168
        %v3835 = vunpack.c.0.s8 %v3834
        %v3836 = vlaneseq
        %v3837 = vshrl.u32 %v3836, 7
        %v3838 = vsub.s32 %v3835, %v3837
        %v3839 = vrot.slane %v3828, %v3838
        %v3841 = vunpack.c.l.s4 1966171168
        %v3842 = vunpack.c.0.s8 %v3841
        %v3843 = vlaneseq
        %v3844 = vshrl.u32 %v3843, 7
        %v3845 = vsub.s32 %v3842, %v3844
        %v3846 = vrot.slane %v3832, %v3845
        %v3847 = vcombine.high %v3839, %v3839
        %v3848 = vcombine.high %v3846, %v3846
        %v3850 = vunpack.c.l.s4 1966171168
        %v3851 = vunpack.c.0.s8 %v3850
        %v3852 = vlaneseq
        %v3853 = vshrl.u32 %v3852, 7
        %v3854 = vsub.s32 %v3851, %v3853
        %v3855 = vrot.slane %v3839, %v3854
        %v3857 = vunpack.c.l.s4 1966171168
        %v3858 = vunpack.c.0.s8 %v3857
        %v3859 = vlaneseq
        %v3860 = vshrl.u32 %v3859, 7
        %v3861 = vsub.s32 %v3858, %v3860
        %v3862 = vrot.slane %v3846, %v3861
        %v3864 = vunpack.c.l.s4 1966171168
        %v3865 = vunpack.c.0.s8 %v3864
        %v3866 = vlaneseq
        %v3867 = vshrl.u32 %v3866, 7
        %v3868 = vsub.s32 %v3865, %v3867
        %v3869 = vrot.slane %v3847, %v3868
        %v3871 = vunpack.c.l.s4 1966171168
        %v3872 = vunpack.c.0.s8 %v3871
        %v3873 = vlaneseq
        %v3874 = vshrl.u32 %v3873, 7
        %v3875 = vsub.s32 %v3872, %v3874
        %v3876 = vrot.slane %v3848, %v3875
        %v3877 = vcombine.high %v3855, %v3855
        %v3878 = vcombine.high %v3862, %v3862
        %v3879 = vcombine.high %v3869, %v3869
        %v3880 = vcombine.high %v3876, %v3876
        %v3881 = vcombine.high %v3829, %v3829
        %v3883 = vunpack.c.l.s4 1966171168
        %v3884 = vunpack.c.0.s8 %v3883
        %v3885 = vlaneseq
        %v3886 = vshrl.u32 %v3885, 7
        %v3887 = vsub.s32 %v3884, %v3886
        %v3888 = vrot.slane %v3829, %v3887
        %v3890 = vunpack.c.l.s4 1966171168
        %v3891 = vunpack.c.0.s8 %v3890
        %v3892 = vlaneseq
        %v3893 = vshrl.u32 %v3892, 7
        %v3894 = vsub.s32 %v3891, %v3893
        %v3895 = vrot.slane %v3881, %v3894
        %v3896 = vcombine.high %v3888, %v3888
        %v3897 = vcombine.high %v3895, %v3895
        %v3899 = vunpack.c.l.s4 1966171168
        %v3900 = vunpack.c.0.s8 %v3899
        %v3901 = vlaneseq
        %v3902 = vshrl.u32 %v3901, 7
        %v3903 = vsub.s32 %v3900, %v3902
        %v3904 = vrot.slane %v3888, %v3903
        %v3906 = vunpack.c.l.s4 1966171168
        %v3907 = vunpack.c.0.s8 %v3906
        %v3908 = vlaneseq
        %v3909 = vshrl.u32 %v3908, 7
        %v3910 = vsub.s32 %v3907, %v3909
        %v3911 = vrot.slane %v3895, %v3910
        %v3913 = vunpack.c.l.s4 1966171168
        %v3914 = vunpack.c.0.s8 %v3913
        %v3915 = vlaneseq
        %v3916 = vshrl.u32 %v3915, 7
        %v3917 = vsub.s32 %v3914, %v3916
        %v3918 = vrot.slane %v3896, %v3917
        %v3920 = vunpack.c.l.s4 1966171168
        %v3921 = vunpack.c.0.s8 %v3920
        %v3922 = vlaneseq
        %v3923 = vshrl.u32 %v3922, 7
        %v3924 = vsub.s32 %v3921, %v3923
        %v3925 = vrot.slane %v3897, %v3924
        %v3926 = vcombine.high %v3904, %v3904
        %v3927 = vcombine.high %v3911, %v3911
        %v3928 = vcombine.high %v3918, %v3918
        %v3929 = vcombine.high %v3925, %v3925
        %3946 = vst [vmem:[%s152 + $0x1] sm:$0x1] %v3855
        %3947 = vst [vmem:[%s152 + $0x9] sm:$0x1] %v3869
        %3948 = vst [vmem:[%s152 + $0x11] sm:$0x1] %v3877
        %3949 = vst [vmem:[%s152 + $0x19] sm:$0x1] %v3879
        %3950 = vst [vmem:[%s152 + $0x21] sm:$0x1] %v3862
        %3951 = vst [vmem:[%s152 + $0x29] sm:$0x1] %v3876
        %3952 = vst [vmem:[%s152 + $0x31] sm:$0x1] %v3878
        %3953 = vst [vmem:[%s152 + $0x39] sm:$0x1] %v3880
        %3954 = vst [vmem:[%s152 + $0x41] sm:$0x1] %v3904
        %3955 = vst [vmem:[%s152 + $0x49] sm:$0x1] %v3918
        %3956 = vst [vmem:[%s152 + $0x51] sm:$0x1] %v3926
        %3957 = vst [vmem:[%s152 + $0x59] sm:$0x1] %v3928
        %3958 = vst [vmem:[%s152 + $0x61] sm:$0x1] %v3911
        %3959 = vst [vmem:[%s152 + $0x69] sm:$0x1] %v3925
        %3960 = vst [vmem:[%s152 + $0x71] sm:$0x1] %v3927
        %3961 = vst [vmem:[%s152 + $0x79] sm:$0x1] %v3929
        %v3962 = vmul.f32 %v1919, -0.1875
        %v3963 = vmul.f32 %v1920, -0.1875
        %v3964 = vadd.f32 %v3680, %v3962
        %v3965 = vadd.f32 %v3681, %v3963
        %v3966 = vrcp.pop %v3964
        %v3967 = vrcp.pop %v3965
        %v3968 = vmul.f32 %v3659, %v3966
        %v3969 = vmul.f32 %v3660, %v3967
        %v3972 = vcombine.high %v3968, %v3968
        %v3974 = vunpack.c.l.s4 1966171168
        %v3975 = vunpack.c.0.s8 %v3974
        %v3976 = vlaneseq
        %v3977 = vshrl.u32 %v3976, 7
        %v3978 = vsub.s32 %v3975, %v3977
        %v3979 = vrot.slane %v3968, %v3978
        %v3981 = vunpack.c.l.s4 1966171168
        %v3982 = vunpack.c.0.s8 %v3981
        %v3983 = vlaneseq
        %v3984 = vshrl.u32 %v3983, 7
        %v3985 = vsub.s32 %v3982, %v3984
        %v3986 = vrot.slane %v3972, %v3985
        %v3987 = vcombine.high %v3979, %v3979
        %v3988 = vcombine.high %v3986, %v3986
        %v3990 = vunpack.c.l.s4 1966171168
        %v3991 = vunpack.c.0.s8 %v3990
        %v3992 = vlaneseq
        %v3993 = vshrl.u32 %v3992, 7
        %v3994 = vsub.s32 %v3991, %v3993
        %v3995 = vrot.slane %v3979, %v3994
        %v3997 = vunpack.c.l.s4 1966171168
        %v3998 = vunpack.c.0.s8 %v3997
        %v3999 = vlaneseq
        %v4000 = vshrl.u32 %v3999, 7
        %v4001 = vsub.s32 %v3998, %v4000
        %v4002 = vrot.slane %v3986, %v4001
        %v4004 = vunpack.c.l.s4 1966171168
        %v4005 = vunpack.c.0.s8 %v4004
        %v4006 = vlaneseq
        %v4007 = vshrl.u32 %v4006, 7
        %v4008 = vsub.s32 %v4005, %v4007
        %v4009 = vrot.slane %v3987, %v4008
        %v4011 = vunpack.c.l.s4 1966171168
        %v4012 = vunpack.c.0.s8 %v4011
        %v4013 = vlaneseq
        %v4014 = vshrl.u32 %v4013, 7
        %v4015 = vsub.s32 %v4012, %v4014
        %v4016 = vrot.slane %v3988, %v4015
        %v4017 = vcombine.high %v3995, %v3995
        %v4018 = vcombine.high %v4002, %v4002
        %v4019 = vcombine.high %v4009, %v4009
        %v4020 = vcombine.high %v4016, %v4016
        %v4021 = vcombine.high %v3969, %v3969
        %v4023 = vunpack.c.l.s4 1966171168
        %v4024 = vunpack.c.0.s8 %v4023
        %v4025 = vlaneseq
        %v4026 = vshrl.u32 %v4025, 7
        %v4027 = vsub.s32 %v4024, %v4026
        %v4028 = vrot.slane %v3969, %v4027
        %v4030 = vunpack.c.l.s4 1966171168
        %v4031 = vunpack.c.0.s8 %v4030
        %v4032 = vlaneseq
        %v4033 = vshrl.u32 %v4032, 7
        %v4034 = vsub.s32 %v4031, %v4033
        %v4035 = vrot.slane %v4021, %v4034
        %v4036 = vcombine.high %v4028, %v4028
        %v4037 = vcombine.high %v4035, %v4035
        %v4039 = vunpack.c.l.s4 1966171168
        %v4040 = vunpack.c.0.s8 %v4039
        %v4041 = vlaneseq
        %v4042 = vshrl.u32 %v4041, 7
        %v4043 = vsub.s32 %v4040, %v4042
        %v4044 = vrot.slane %v4028, %v4043
        %v4046 = vunpack.c.l.s4 1966171168
        %v4047 = vunpack.c.0.s8 %v4046
        %v4048 = vlaneseq
        %v4049 = vshrl.u32 %v4048, 7
        %v4050 = vsub.s32 %v4047, %v4049
        %v4051 = vrot.slane %v4035, %v4050
        %v4053 = vunpack.c.l.s4 1966171168
        %v4054 = vunpack.c.0.s8 %v4053
        %v4055 = vlaneseq
        %v4056 = vshrl.u32 %v4055, 7
        %v4057 = vsub.s32 %v4054, %v4056
        %v4058 = vrot.slane %v4036, %v4057
        %v4060 = vunpack.c.l.s4 1966171168
        %v4061 = vunpack.c.0.s8 %v4060
        %v4062 = vlaneseq
        %v4063 = vshrl.u32 %v4062, 7
        %v4064 = vsub.s32 %v4061, %v4063
        %v4065 = vrot.slane %v4037, %v4064
        %v4066 = vcombine.high %v4044, %v4044
        %v4067 = vcombine.high %v4051, %v4051
        %v4068 = vcombine.high %v4058, %v4058
        %v4069 = vcombine.high %v4065, %v4065
        %4086 = vst [vmem:[%s152 + $0x2] sm:$0x1] %v3995
        %4087 = vst [vmem:[%s152 + $0xa] sm:$0x1] %v4009
        %4088 = vst [vmem:[%s152 + $0x12] sm:$0x1] %v4017
        %4089 = vst [vmem:[%s152 + $0x1a] sm:$0x1] %v4019
        %4090 = vst [vmem:[%s152 + $0x22] sm:$0x1] %v4002
        %4091 = vst [vmem:[%s152 + $0x2a] sm:$0x1] %v4016
        %4092 = vst [vmem:[%s152 + $0x32] sm:$0x1] %v4018
        %4093 = vst [vmem:[%s152 + $0x3a] sm:$0x1] %v4020
        %4094 = vst [vmem:[%s152 + $0x42] sm:$0x1] %v4044
        %4095 = vst [vmem:[%s152 + $0x4a] sm:$0x1] %v4058
        %4096 = vst [vmem:[%s152 + $0x52] sm:$0x1] %v4066
        %4097 = vst [vmem:[%s152 + $0x5a] sm:$0x1] %v4068
        %4098 = vst [vmem:[%s152 + $0x62] sm:$0x1] %v4051
        %4099 = vst [vmem:[%s152 + $0x6a] sm:$0x1] %v4065
        %4100 = vst [vmem:[%s152 + $0x72] sm:$0x1] %v4067
        %4101 = vst [vmem:[%s152 + $0x7a] sm:$0x1] %v4069
        %v4102 = vmul.f32 %v1919, -0.0625
        %v4103 = vmul.f32 %v1920, -0.0625
        %v4104 = vadd.f32 %v3680, %v4102
        %v4105 = vadd.f32 %v3681, %v4103
        %v4106 = vrcp.pop %v4104
        %v4107 = vrcp.pop %v4105
        %v4108 = vmul.f32 %v3659, %v4106
        %v4109 = vmul.f32 %v3660, %v4107
        %v4112 = vcombine.high %v4108, %v4108
        %v4114 = vunpack.c.l.s4 1966171168
        %v4115 = vunpack.c.0.s8 %v4114
        %v4116 = vlaneseq
        %v4117 = vshrl.u32 %v4116, 7
        %v4118 = vsub.s32 %v4115, %v4117
        %v4119 = vrot.slane %v4108, %v4118
        %v4121 = vunpack.c.l.s4 1966171168
        %v4122 = vunpack.c.0.s8 %v4121
        %v4123 = vlaneseq
        %v4124 = vshrl.u32 %v4123, 7
        %v4125 = vsub.s32 %v4122, %v4124
        %v4126 = vrot.slane %v4112, %v4125
        %v4127 = vcombine.high %v4119, %v4119
        %v4128 = vcombine.high %v4126, %v4126
        %v4130 = vunpack.c.l.s4 1966171168
        %v4131 = vunpack.c.0.s8 %v4130
        %v4132 = vlaneseq
        %v4133 = vshrl.u32 %v4132, 7
        %v4134 = vsub.s32 %v4131, %v4133
        %v4135 = vrot.slane %v4119, %v4134
        %v4137 = vunpack.c.l.s4 1966171168
        %v4138 = vunpack.c.0.s8 %v4137
        %v4139 = vlaneseq
        %v4140 = vshrl.u32 %v4139, 7
        %v4141 = vsub.s32 %v4138, %v4140
        %v4142 = vrot.slane %v4126, %v4141
        %v4144 = vunpack.c.l.s4 1966171168
        %v4145 = vunpack.c.0.s8 %v4144
        %v4146 = vlaneseq
        %v4147 = vshrl.u32 %v4146, 7
        %v4148 = vsub.s32 %v4145, %v4147
        %v4149 = vrot.slane %v4127, %v4148
        %v4151 = vunpack.c.l.s4 1966171168
        %v4152 = vunpack.c.0.s8 %v4151
        %v4153 = vlaneseq
        %v4154 = vshrl.u32 %v4153, 7
        %v4155 = vsub.s32 %v4152, %v4154
        %v4156 = vrot.slane %v4128, %v4155
        %v4157 = vcombine.high %v4135, %v4135
        %v4158 = vcombine.high %v4142, %v4142
        %v4159 = vcombine.high %v4149, %v4149
        %v4160 = vcombine.high %v4156, %v4156
        %v4161 = vcombine.high %v4109, %v4109
        %v4163 = vunpack.c.l.s4 1966171168
        %v4164 = vunpack.c.0.s8 %v4163
        %v4165 = vlaneseq
        %v4166 = vshrl.u32 %v4165, 7
        %v4167 = vsub.s32 %v4164, %v4166
        %v4168 = vrot.slane %v4109, %v4167
        %v4170 = vunpack.c.l.s4 1966171168
        %v4171 = vunpack.c.0.s8 %v4170
        %v4172 = vlaneseq
        %v4173 = vshrl.u32 %v4172, 7
        %v4174 = vsub.s32 %v4171, %v4173
        %v4175 = vrot.slane %v4161, %v4174
        %v4176 = vcombine.high %v4168, %v4168
        %v4177 = vcombine.high %v4175, %v4175
        %v4179 = vunpack.c.l.s4 1966171168
        %v4180 = vunpack.c.0.s8 %v4179
        %v4181 = vlaneseq
        %v4182 = vshrl.u32 %v4181, 7
        %v4183 = vsub.s32 %v4180, %v4182
        %v4184 = vrot.slane %v4168, %v4183
        %v4186 = vunpack.c.l.s4 1966171168
        %v4187 = vunpack.c.0.s8 %v4186
        %v4188 = vlaneseq
        %v4189 = vshrl.u32 %v4188, 7
        %v4190 = vsub.s32 %v4187, %v4189
        %v4191 = vrot.slane %v4175, %v4190
        %v4193 = vunpack.c.l.s4 1966171168
        %v4194 = vunpack.c.0.s8 %v4193
        %v4195 = vlaneseq
        %v4196 = vshrl.u32 %v4195, 7
        %v4197 = vsub.s32 %v4194, %v4196
        %v4198 = vrot.slane %v4176, %v4197
        %v4200 = vunpack.c.l.s4 1966171168
        %v4201 = vunpack.c.0.s8 %v4200
        %v4202 = vlaneseq
        %v4203 = vshrl.u32 %v4202, 7
        %v4204 = vsub.s32 %v4201, %v4203
        %v4205 = vrot.slane %v4177, %v4204
        %v4206 = vcombine.high %v4184, %v4184
        %v4207 = vcombine.high %v4191, %v4191
        %v4208 = vcombine.high %v4198, %v4198
        %v4209 = vcombine.high %v4205, %v4205
        %4226 = vst [vmem:[%s152 + $0x3] sm:$0x1] %v4135
        %4227 = vst [vmem:[%s152 + $0xb] sm:$0x1] %v4149
        %4228 = vst [vmem:[%s152 + $0x13] sm:$0x1] %v4157
        %4229 = vst [vmem:[%s152 + $0x1b] sm:$0x1] %v4159
        %4230 = vst [vmem:[%s152 + $0x23] sm:$0x1] %v4142
        %4231 = vst [vmem:[%s152 + $0x2b] sm:$0x1] %v4156
        %4232 = vst [vmem:[%s152 + $0x33] sm:$0x1] %v4158
        %4233 = vst [vmem:[%s152 + $0x3b] sm:$0x1] %v4160
        %4234 = vst [vmem:[%s152 + $0x43] sm:$0x1] %v4184
        %4235 = vst [vmem:[%s152 + $0x4b] sm:$0x1] %v4198
        %4236 = vst [vmem:[%s152 + $0x53] sm:$0x1] %v4206
        %4237 = vst [vmem:[%s152 + $0x5b] sm:$0x1] %v4208
        %4238 = vst [vmem:[%s152 + $0x63] sm:$0x1] %v4191
        %4239 = vst [vmem:[%s152 + $0x6b] sm:$0x1] %v4205
        %4240 = vst [vmem:[%s152 + $0x73] sm:$0x1] %v4207
        %4241 = vst [vmem:[%s152 + $0x7b] sm:$0x1] %v4209
        %v4242 = vmul.f32 %v1919, 0.0625
        %v4243 = vmul.f32 %v1920, 0.0625
        %v4244 = vadd.f32 %v3680, %v4242
        %v4245 = vadd.f32 %v3681, %v4243
        %v4246 = vrcp.pop %v4244
        %v4247 = vrcp.pop %v4245
        %v4248 = vmul.f32 %v3659, %v4246
        %v4249 = vmul.f32 %v3660, %v4247
        %v4252 = vcombine.high %v4248, %v4248
        %v4254 = vunpack.c.l.s4 1966171168
        %v4255 = vunpack.c.0.s8 %v4254
        %v4256 = vlaneseq
        %v4257 = vshrl.u32 %v4256, 7
        %v4258 = vsub.s32 %v4255, %v4257
        %v4259 = vrot.slane %v4248, %v4258
        %v4261 = vunpack.c.l.s4 1966171168
        %v4262 = vunpack.c.0.s8 %v4261
        %v4263 = vlaneseq
        %v4264 = vshrl.u32 %v4263, 7
        %v4265 = vsub.s32 %v4262, %v4264
        %v4266 = vrot.slane %v4252, %v4265
        %v4267 = vcombine.high %v4259, %v4259
        %v4268 = vcombine.high %v4266, %v4266
        %v4270 = vunpack.c.l.s4 1966171168
        %v4271 = vunpack.c.0.s8 %v4270
        %v4272 = vlaneseq
        %v4273 = vshrl.u32 %v4272, 7
        %v4274 = vsub.s32 %v4271, %v4273
        %v4275 = vrot.slane %v4259, %v4274
        %v4277 = vunpack.c.l.s4 1966171168
        %v4278 = vunpack.c.0.s8 %v4277
        %v4279 = vlaneseq
        %v4280 = vshrl.u32 %v4279, 7
        %v4281 = vsub.s32 %v4278, %v4280
        %v4282 = vrot.slane %v4266, %v4281
        %v4284 = vunpack.c.l.s4 1966171168
        %v4285 = vunpack.c.0.s8 %v4284
        %v4286 = vlaneseq
        %v4287 = vshrl.u32 %v4286, 7
        %v4288 = vsub.s32 %v4285, %v4287
        %v4289 = vrot.slane %v4267, %v4288
        %v4291 = vunpack.c.l.s4 1966171168
        %v4292 = vunpack.c.0.s8 %v4291
        %v4293 = vlaneseq
        %v4294 = vshrl.u32 %v4293, 7
        %v4295 = vsub.s32 %v4292, %v4294
        %v4296 = vrot.slane %v4268, %v4295
        %v4297 = vcombine.high %v4275, %v4275
        %v4298 = vcombine.high %v4282, %v4282
        %v4299 = vcombine.high %v4289, %v4289
        %v4300 = vcombine.high %v4296, %v4296
        %v4301 = vcombine.high %v4249, %v4249
        %v4303 = vunpack.c.l.s4 1966171168
        %v4304 = vunpack.c.0.s8 %v4303
        %v4305 = vlaneseq
        %v4306 = vshrl.u32 %v4305, 7
        %v4307 = vsub.s32 %v4304, %v4306
        %v4308 = vrot.slane %v4249, %v4307
        %v4310 = vunpack.c.l.s4 1966171168
        %v4311 = vunpack.c.0.s8 %v4310
        %v4312 = vlaneseq
        %v4313 = vshrl.u32 %v4312, 7
        %v4314 = vsub.s32 %v4311, %v4313
        %v4315 = vrot.slane %v4301, %v4314
        %v4316 = vcombine.high %v4308, %v4308
        %v4317 = vcombine.high %v4315, %v4315
        %v4319 = vunpack.c.l.s4 1966171168
        %v4320 = vunpack.c.0.s8 %v4319
        %v4321 = vlaneseq
        %v4322 = vshrl.u32 %v4321, 7
        %v4323 = vsub.s32 %v4320, %v4322
        %v4324 = vrot.slane %v4308, %v4323
        %v4326 = vunpack.c.l.s4 1966171168
        %v4327 = vunpack.c.0.s8 %v4326
        %v4328 = vlaneseq
        %v4329 = vshrl.u32 %v4328, 7
        %v4330 = vsub.s32 %v4327, %v4329
        %v4331 = vrot.slane %v4315, %v4330
        %v4333 = vunpack.c.l.s4 1966171168
        %v4334 = vunpack.c.0.s8 %v4333
        %v4335 = vlaneseq
        %v4336 = vshrl.u32 %v4335, 7
        %v4337 = vsub.s32 %v4334, %v4336
        %v4338 = vrot.slane %v4316, %v4337
        %v4340 = vunpack.c.l.s4 1966171168
        %v4341 = vunpack.c.0.s8 %v4340
        %v4342 = vlaneseq
        %v4343 = vshrl.u32 %v4342, 7
        %v4344 = vsub.s32 %v4341, %v4343
        %v4345 = vrot.slane %v4317, %v4344
        %v4346 = vcombine.high %v4324, %v4324
        %v4347 = vcombine.high %v4331, %v4331
        %v4348 = vcombine.high %v4338, %v4338
        %v4349 = vcombine.high %v4345, %v4345
        %4366 = vst [vmem:[%s152 + $0x4] sm:$0x1] %v4275
        %4367 = vst [vmem:[%s152 + $0xc] sm:$0x1] %v4289
        %4368 = vst [vmem:[%s152 + $0x14] sm:$0x1] %v4297
        %4369 = vst [vmem:[%s152 + $0x1c] sm:$0x1] %v4299
        %4370 = vst [vmem:[%s152 + $0x24] sm:$0x1] %v4282
        %4371 = vst [vmem:[%s152 + $0x2c] sm:$0x1] %v4296
        %4372 = vst [vmem:[%s152 + $0x34] sm:$0x1] %v4298
        %4373 = vst [vmem:[%s152 + $0x3c] sm:$0x1] %v4300
        %4374 = vst [vmem:[%s152 + $0x44] sm:$0x1] %v4324
        %4375 = vst [vmem:[%s152 + $0x4c] sm:$0x1] %v4338
        %4376 = vst [vmem:[%s152 + $0x54] sm:$0x1] %v4346
        %4377 = vst [vmem:[%s152 + $0x5c] sm:$0x1] %v4348
        %4378 = vst [vmem:[%s152 + $0x64] sm:$0x1] %v4331
        %4379 = vst [vmem:[%s152 + $0x6c] sm:$0x1] %v4345
        %4380 = vst [vmem:[%s152 + $0x74] sm:$0x1] %v4347
        %4381 = vst [vmem:[%s152 + $0x7c] sm:$0x1] %v4349
        %v4382 = vmul.f32 %v1919, 0.1875
        %v4383 = vmul.f32 %v1920, 0.1875
        %v4384 = vadd.f32 %v3680, %v4382
        %v4385 = vadd.f32 %v3681, %v4383
        %v4386 = vrcp.pop %v4384
        %v4387 = vrcp.pop %v4385
        %v4388 = vmul.f32 %v3659, %v4386
        %v4389 = vmul.f32 %v3660, %v4387
        %v4392 = vcombine.high %v4388, %v4388
        %v4394 = vunpack.c.l.s4 1966171168
        %v4395 = vunpack.c.0.s8 %v4394
        %v4396 = vlaneseq
        %v4397 = vshrl.u32 %v4396, 7
        %v4398 = vsub.s32 %v4395, %v4397
        %v4399 = vrot.slane %v4388, %v4398
        %v4401 = vunpack.c.l.s4 1966171168
        %v4402 = vunpack.c.0.s8 %v4401
        %v4403 = vlaneseq
        %v4404 = vshrl.u32 %v4403, 7
        %v4405 = vsub.s32 %v4402, %v4404
        %v4406 = vrot.slane %v4392, %v4405
        %v4407 = vcombine.high %v4399, %v4399
        %v4408 = vcombine.high %v4406, %v4406
        %v4410 = vunpack.c.l.s4 1966171168
        %v4411 = vunpack.c.0.s8 %v4410
        %v4412 = vlaneseq
        %v4413 = vshrl.u32 %v4412, 7
        %v4414 = vsub.s32 %v4411, %v4413
        %v4415 = vrot.slane %v4399, %v4414
        %v4417 = vunpack.c.l.s4 1966171168
        %v4418 = vunpack.c.0.s8 %v4417
        %v4419 = vlaneseq
        %v4420 = vshrl.u32 %v4419, 7
        %v4421 = vsub.s32 %v4418, %v4420
        %v4422 = vrot.slane %v4406, %v4421
        %v4424 = vunpack.c.l.s4 1966171168
        %v4425 = vunpack.c.0.s8 %v4424
        %v4426 = vlaneseq
        %v4427 = vshrl.u32 %v4426, 7
        %v4428 = vsub.s32 %v4425, %v4427
        %v4429 = vrot.slane %v4407, %v4428
        %v4431 = vunpack.c.l.s4 1966171168
        %v4432 = vunpack.c.0.s8 %v4431
        %v4433 = vlaneseq
        %v4434 = vshrl.u32 %v4433, 7
        %v4435 = vsub.s32 %v4432, %v4434
        %v4436 = vrot.slane %v4408, %v4435
        %v4437 = vcombine.high %v4415, %v4415
        %v4438 = vcombine.high %v4422, %v4422
        %v4439 = vcombine.high %v4429, %v4429
        %v4440 = vcombine.high %v4436, %v4436
        %v4441 = vcombine.high %v4389, %v4389
        %v4443 = vunpack.c.l.s4 1966171168
        %v4444 = vunpack.c.0.s8 %v4443
        %v4445 = vlaneseq
        %v4446 = vshrl.u32 %v4445, 7
        %v4447 = vsub.s32 %v4444, %v4446
        %v4448 = vrot.slane %v4389, %v4447
        %v4450 = vunpack.c.l.s4 1966171168
        %v4451 = vunpack.c.0.s8 %v4450
        %v4452 = vlaneseq
        %v4453 = vshrl.u32 %v4452, 7
        %v4454 = vsub.s32 %v4451, %v4453
        %v4455 = vrot.slane %v4441, %v4454
        %v4456 = vcombine.high %v4448, %v4448
        %v4457 = vcombine.high %v4455, %v4455
        %v4459 = vunpack.c.l.s4 1966171168
        %v4460 = vunpack.c.0.s8 %v4459
        %v4461 = vlaneseq
        %v4462 = vshrl.u32 %v4461, 7
        %v4463 = vsub.s32 %v4460, %v4462
        %v4464 = vrot.slane %v4448, %v4463
        %v4466 = vunpack.c.l.s4 1966171168
        %v4467 = vunpack.c.0.s8 %v4466
        %v4468 = vlaneseq
        %v4469 = vshrl.u32 %v4468, 7
        %v4470 = vsub.s32 %v4467, %v4469
        %v4471 = vrot.slane %v4455, %v4470
        %v4473 = vunpack.c.l.s4 1966171168
        %v4474 = vunpack.c.0.s8 %v4473
        %v4475 = vlaneseq
        %v4476 = vshrl.u32 %v4475, 7
        %v4477 = vsub.s32 %v4474, %v4476
        %v4478 = vrot.slane %v4456, %v4477
        %v4480 = vunpack.c.l.s4 1966171168
        %v4481 = vunpack.c.0.s8 %v4480
        %v4482 = vlaneseq
        %v4483 = vshrl.u32 %v4482, 7
        %v4484 = vsub.s32 %v4481, %v4483
        %v4485 = vrot.slane %v4457, %v4484
        %v4486 = vcombine.high %v4464, %v4464
        %v4487 = vcombine.high %v4471, %v4471
        %v4488 = vcombine.high %v4478, %v4478
        %v4489 = vcombine.high %v4485, %v4485
        %4506 = vst [vmem:[%s152 + $0x5] sm:$0x1] %v4415
        %4507 = vst [vmem:[%s152 + $0xd] sm:$0x1] %v4429
        %4508 = vst [vmem:[%s152 + $0x15] sm:$0x1] %v4437
        %4509 = vst [vmem:[%s152 + $0x1d] sm:$0x1] %v4439
        %4510 = vst [vmem:[%s152 + $0x25] sm:$0x1] %v4422
        %4511 = vst [vmem:[%s152 + $0x2d] sm:$0x1] %v4436
        %4512 = vst [vmem:[%s152 + $0x35] sm:$0x1] %v4438
        %4513 = vst [vmem:[%s152 + $0x3d] sm:$0x1] %v4440
        %4514 = vst [vmem:[%s152 + $0x45] sm:$0x1] %v4464
        %4515 = vst [vmem:[%s152 + $0x4d] sm:$0x1] %v4478
        %4516 = vst [vmem:[%s152 + $0x55] sm:$0x1] %v4486
        %4517 = vst [vmem:[%s152 + $0x5d] sm:$0x1] %v4488
        %4518 = vst [vmem:[%s152 + $0x65] sm:$0x1] %v4471
        %4519 = vst [vmem:[%s152 + $0x6d] sm:$0x1] %v4485
        %4520 = vst [vmem:[%s152 + $0x75] sm:$0x1] %v4487
        %4521 = vst [vmem:[%s152 + $0x7d] sm:$0x1] %v4489
        %v4522 = vmul.f32 %v1919, 0.3125
        %v4523 = vmul.f32 %v1920, 0.3125
        %v4524 = vadd.f32 %v3680, %v4522
        %v4525 = vadd.f32 %v3681, %v4523
        %v4526 = vrcp.pop %v4524
        %v4527 = vrcp.pop %v4525
        %v4528 = vmul.f32 %v3659, %v4526
        %v4529 = vmul.f32 %v3660, %v4527
        %v4532 = vcombine.high %v4528, %v4528
        %v4534 = vunpack.c.l.s4 1966171168
        %v4535 = vunpack.c.0.s8 %v4534
        %v4536 = vlaneseq
        %v4537 = vshrl.u32 %v4536, 7
        %v4538 = vsub.s32 %v4535, %v4537
        %v4539 = vrot.slane %v4528, %v4538
        %v4541 = vunpack.c.l.s4 1966171168
        %v4542 = vunpack.c.0.s8 %v4541
        %v4543 = vlaneseq
        %v4544 = vshrl.u32 %v4543, 7
        %v4545 = vsub.s32 %v4542, %v4544
        %v4546 = vrot.slane %v4532, %v4545
        %v4547 = vcombine.high %v4539, %v4539
        %v4548 = vcombine.high %v4546, %v4546
        %v4550 = vunpack.c.l.s4 1966171168
        %v4551 = vunpack.c.0.s8 %v4550
        %v4552 = vlaneseq
        %v4553 = vshrl.u32 %v4552, 7
        %v4554 = vsub.s32 %v4551, %v4553
        %v4555 = vrot.slane %v4539, %v4554
        %v4557 = vunpack.c.l.s4 1966171168
        %v4558 = vunpack.c.0.s8 %v4557
        %v4559 = vlaneseq
        %v4560 = vshrl.u32 %v4559, 7
        %v4561 = vsub.s32 %v4558, %v4560
        %v4562 = vrot.slane %v4546, %v4561
        %v4564 = vunpack.c.l.s4 1966171168
        %v4565 = vunpack.c.0.s8 %v4564
        %v4566 = vlaneseq
        %v4567 = vshrl.u32 %v4566, 7
        %v4568 = vsub.s32 %v4565, %v4567
        %v4569 = vrot.slane %v4547, %v4568
        %v4571 = vunpack.c.l.s4 1966171168
        %v4572 = vunpack.c.0.s8 %v4571
        %v4573 = vlaneseq
        %v4574 = vshrl.u32 %v4573, 7
        %v4575 = vsub.s32 %v4572, %v4574
        %v4576 = vrot.slane %v4548, %v4575
        %v4577 = vcombine.high %v4555, %v4555
        %v4578 = vcombine.high %v4562, %v4562
        %v4579 = vcombine.high %v4569, %v4569
        %v4580 = vcombine.high %v4576, %v4576
        %v4581 = vcombine.high %v4529, %v4529
        %v4583 = vunpack.c.l.s4 1966171168
        %v4584 = vunpack.c.0.s8 %v4583
        %v4585 = vlaneseq
        %v4586 = vshrl.u32 %v4585, 7
        %v4587 = vsub.s32 %v4584, %v4586
        %v4588 = vrot.slane %v4529, %v4587
        %v4590 = vunpack.c.l.s4 1966171168
        %v4591 = vunpack.c.0.s8 %v4590
        %v4592 = vlaneseq
        %v4593 = vshrl.u32 %v4592, 7
        %v4594 = vsub.s32 %v4591, %v4593
        %v4595 = vrot.slane %v4581, %v4594
        %v4596 = vcombine.high %v4588, %v4588
        %v4597 = vcombine.high %v4595, %v4595
        %v4599 = vunpack.c.l.s4 1966171168
        %v4600 = vunpack.c.0.s8 %v4599
        %v4601 = vlaneseq
        %v4602 = vshrl.u32 %v4601, 7
        %v4603 = vsub.s32 %v4600, %v4602
        %v4604 = vrot.slane %v4588, %v4603
        %v4606 = vunpack.c.l.s4 1966171168
        %v4607 = vunpack.c.0.s8 %v4606
        %v4608 = vlaneseq
        %v4609 = vshrl.u32 %v4608, 7
        %v4610 = vsub.s32 %v4607, %v4609
        %v4611 = vrot.slane %v4595, %v4610
        %v4613 = vunpack.c.l.s4 1966171168
        %v4614 = vunpack.c.0.s8 %v4613
        %v4615 = vlaneseq
        %v4616 = vshrl.u32 %v4615, 7
        %v4617 = vsub.s32 %v4614, %v4616
        %v4618 = vrot.slane %v4596, %v4617
        %v4620 = vunpack.c.l.s4 1966171168
        %v4621 = vunpack.c.0.s8 %v4620
        %v4622 = vlaneseq
        %v4623 = vshrl.u32 %v4622, 7
        %v4624 = vsub.s32 %v4621, %v4623
        %v4625 = vrot.slane %v4597, %v4624
        %v4626 = vcombine.high %v4604, %v4604
        %v4627 = vcombine.high %v4611, %v4611
        %v4628 = vcombine.high %v4618, %v4618
        %v4629 = vcombine.high %v4625, %v4625
        %4646 = vst [vmem:[%s152 + $0x6] sm:$0x1] %v4555
        %4647 = vst [vmem:[%s152 + $0xe] sm:$0x1] %v4569
        %4648 = vst [vmem:[%s152 + $0x16] sm:$0x1] %v4577
        %4649 = vst [vmem:[%s152 + $0x1e] sm:$0x1] %v4579
        %4650 = vst [vmem:[%s152 + $0x26] sm:$0x1] %v4562
        %4651 = vst [vmem:[%s152 + $0x2e] sm:$0x1] %v4576
        %4652 = vst [vmem:[%s152 + $0x36] sm:$0x1] %v4578
        %4653 = vst [vmem:[%s152 + $0x3e] sm:$0x1] %v4580
        %4654 = vst [vmem:[%s152 + $0x46] sm:$0x1] %v4604
        %4655 = vst [vmem:[%s152 + $0x4e] sm:$0x1] %v4618
        %4656 = vst [vmem:[%s152 + $0x56] sm:$0x1] %v4626
        %4657 = vst [vmem:[%s152 + $0x5e] sm:$0x1] %v4628
        %4658 = vst [vmem:[%s152 + $0x66] sm:$0x1] %v4611
        %4659 = vst [vmem:[%s152 + $0x6e] sm:$0x1] %v4625
        %4660 = vst [vmem:[%s152 + $0x76] sm:$0x1] %v4627
        %4661 = vst [vmem:[%s152 + $0x7e] sm:$0x1] %v4629
        %v4662 = vmul.f32 %v1919, 0.4375
        %v4663 = vmul.f32 %v1920, 0.4375
        %v4664 = vadd.f32 %v3680, %v4662
        %v4665 = vadd.f32 %v3681, %v4663
        %v4666 = vrcp.pop %v4664
        %v4667 = vrcp.pop %v4665
        %v4668 = vmul.f32 %v3659, %v4666
        %v4669 = vmul.f32 %v3660, %v4667
        %v4672 = vcombine.high %v4668, %v4668
        %v4674 = vunpack.c.l.s4 1966171168
        %v4675 = vunpack.c.0.s8 %v4674
        %v4676 = vlaneseq
        %v4677 = vshrl.u32 %v4676, 7
        %v4678 = vsub.s32 %v4675, %v4677
        %v4679 = vrot.slane %v4668, %v4678
        %v4681 = vunpack.c.l.s4 1966171168
        %v4682 = vunpack.c.0.s8 %v4681
        %v4683 = vlaneseq
        %v4684 = vshrl.u32 %v4683, 7
        %v4685 = vsub.s32 %v4682, %v4684
        %v4686 = vrot.slane %v4672, %v4685
        %v4687 = vcombine.high %v4679, %v4679
        %v4688 = vcombine.high %v4686, %v4686
        %v4690 = vunpack.c.l.s4 1966171168
        %v4691 = vunpack.c.0.s8 %v4690
        %v4692 = vlaneseq
        %v4693 = vshrl.u32 %v4692, 7
        %v4694 = vsub.s32 %v4691, %v4693
        %v4695 = vrot.slane %v4679, %v4694
        %v4697 = vunpack.c.l.s4 1966171168
        %v4698 = vunpack.c.0.s8 %v4697
        %v4699 = vlaneseq
        %v4700 = vshrl.u32 %v4699, 7
        %v4701 = vsub.s32 %v4698, %v4700
        %v4702 = vrot.slane %v4686, %v4701
        %v4704 = vunpack.c.l.s4 1966171168
        %v4705 = vunpack.c.0.s8 %v4704
        %v4706 = vlaneseq
        %v4707 = vshrl.u32 %v4706, 7
        %v4708 = vsub.s32 %v4705, %v4707
        %v4709 = vrot.slane %v4687, %v4708
        %v4711 = vunpack.c.l.s4 1966171168
        %v4712 = vunpack.c.0.s8 %v4711
        %v4713 = vlaneseq
        %v4714 = vshrl.u32 %v4713, 7
        %v4715 = vsub.s32 %v4712, %v4714
        %v4716 = vrot.slane %v4688, %v4715
        %v4717 = vcombine.high %v4695, %v4695
        %v4718 = vcombine.high %v4702, %v4702
        %v4719 = vcombine.high %v4709, %v4709
        %v4720 = vcombine.high %v4716, %v4716
        %v4721 = vcombine.high %v4669, %v4669
        %v4723 = vunpack.c.l.s4 1966171168
        %v4724 = vunpack.c.0.s8 %v4723
        %v4725 = vlaneseq
        %v4726 = vshrl.u32 %v4725, 7
        %v4727 = vsub.s32 %v4724, %v4726
        %v4728 = vrot.slane %v4669, %v4727
        %v4730 = vunpack.c.l.s4 1966171168
        %v4731 = vunpack.c.0.s8 %v4730
        %v4732 = vlaneseq
        %v4733 = vshrl.u32 %v4732, 7
        %v4734 = vsub.s32 %v4731, %v4733
        %v4735 = vrot.slane %v4721, %v4734
        %v4736 = vcombine.high %v4728, %v4728
        %v4737 = vcombine.high %v4735, %v4735
        %v4739 = vunpack.c.l.s4 1966171168
        %v4740 = vunpack.c.0.s8 %v4739
        %v4741 = vlaneseq
        %v4742 = vshrl.u32 %v4741, 7
        %v4743 = vsub.s32 %v4740, %v4742
        %v4744 = vrot.slane %v4728, %v4743
        %v4746 = vunpack.c.l.s4 1966171168
        %v4747 = vunpack.c.0.s8 %v4746
        %v4748 = vlaneseq
        %v4749 = vshrl.u32 %v4748, 7
        %v4750 = vsub.s32 %v4747, %v4749
        %v4751 = vrot.slane %v4735, %v4750
        %v4753 = vunpack.c.l.s4 1966171168
        %v4754 = vunpack.c.0.s8 %v4753
        %v4755 = vlaneseq
        %v4756 = vshrl.u32 %v4755, 7
        %v4757 = vsub.s32 %v4754, %v4756
        %v4758 = vrot.slane %v4736, %v4757
        %v4760 = vunpack.c.l.s4 1966171168
        %v4761 = vunpack.c.0.s8 %v4760
        %v4762 = vlaneseq
        %v4763 = vshrl.u32 %v4762, 7
        %v4764 = vsub.s32 %v4761, %v4763
        %v4765 = vrot.slane %v4737, %v4764
        %v4766 = vcombine.high %v4744, %v4744
        %v4767 = vcombine.high %v4751, %v4751
        %v4768 = vcombine.high %v4758, %v4758
        %v4769 = vcombine.high %v4765, %v4765
        %4786 = vst [vmem:[%s152 + $0x7] sm:$0x1] %v4695
        %4787 = vst [vmem:[%s152 + $0xf] sm:$0x1] %v4709
        %4788 = vst [vmem:[%s152 + $0x17] sm:$0x1] %v4717
        %4789 = vst [vmem:[%s152 + $0x1f] sm:$0x1] %v4719
        %4790 = vst [vmem:[%s152 + $0x27] sm:$0x1] %v4702
        %4791 = vst [vmem:[%s152 + $0x2f] sm:$0x1] %v4716
        %4792 = vst [vmem:[%s152 + $0x37] sm:$0x1] %v4718
        %4793 = vst [vmem:[%s152 + $0x3f] sm:$0x1] %v4720
        %4794 = vst [vmem:[%s152 + $0x47] sm:$0x1] %v4744
        %4795 = vst [vmem:[%s152 + $0x4f] sm:$0x1] %v4758
        %4796 = vst [vmem:[%s152 + $0x57] sm:$0x1] %v4766
        %4797 = vst [vmem:[%s152 + $0x5f] sm:$0x1] %v4768
        %4798 = vst [vmem:[%s152 + $0x67] sm:$0x1] %v4751
        %4799 = vst [vmem:[%s152 + $0x6f] sm:$0x1] %v4765
        %4800 = vst [vmem:[%s152 + $0x77] sm:$0x1] %v4767
        %4801 = vst [vmem:[%s152 + $0x7f] sm:$0x1] %v4769
        %s4802 = sand.u32 %s68, 1
        %s4803 = scalar_lea.sflag [#allocation4], %s4802
        %s4804 = sand.u32 %s68, 1
        %s4805 = smul.addr %s4804, 128
        %s4806 = scalar_lea.vmem [#allocation5], %s4805
        // Predicated region
        $region29: #{tpu_custom_call.1} parent=23 // pred_check
          %p4807 = pneg %p78
        $region30: #{tpu_custom_call.1} parent=23 // pred_check_branch
          %4809 = sbr.rel (%p4807) target = $region32
        $region31: #{tpu_custom_call.1} parent=23 // pred_region
          %s4810 = smul.u32 16, %s23
          %s4812 = ssub.s32 2048, 2048
          %4813 = vsyncadd %s4803, %s4812
          %s4814 = smul.addr %s22, 16
          %s4815 = sadd.s32 %s4810, %s4814
          %s4816 = smul.addr %s4815, 128
          %s4817 = scalar_lea.hbm %s1, %s4816
          %s4818 = sshll.u32 %s4806, 4
          %s4819 = int_to_ptr.vmem [resolvable:$true] %s4818
          %4824 = dma.vmem_to_hbm [thread:$0]  %s4819, 2048, %s4817, %s4803, 128, 128, 8
        $region32: #{tpu_custom_call.1} parent=23 // pred_fallthru
          _
      $region24: #{tpu_custom_call.1} parent=5 // pred_fallthru
        _
      %p4825 = scmp.le.s32.totalorder 2, %s13
      // Predicated region
      $region33: #{tpu_custom_call.1} parent=5 // pred_check
        %p4826 = pneg %p4825
      $region34: #{tpu_custom_call.1} parent=5 // pred_check_branch
        %4828 = sbr.rel (%p4826) target = $region36
      $region35: #{tpu_custom_call.1} parent=5 // pred_region
        %s4829 = ssub.s32 %s13, 2
        // Predicated region
        $region37: #{tpu_custom_call.1} parent=35 // pred_check
          %p4830 = pneg %p84
        $region38: #{tpu_custom_call.1} parent=35 // pred_check_branch
          %4832 = sbr.rel (%p4830) target = $region40
        $region39: #{tpu_custom_call.1} parent=35 // pred_region
          %s4833 = sand.u32 %s69, 1
          %s4834 = scalar_lea.sflag [#allocation4], %s4833
          %s4835 = sand.u32 %s69, 1
          %s4836 = smul.addr %s4835, 128
          %s4837 = scalar_lea.vmem [#allocation5], %s4836
          %4838 = dma.done %s4834, 2048
        $region40: #{tpu_custom_call.1} parent=35 // pred_fallthru
          _
      $region36: #{tpu_custom_call.1} parent=5 // pred_fallthru
        _
    $region6: #{tpu_custom_call.1} parent=1 // loop_footer
      %s17 = sadd.s32 1, %s13
    $region7: #{tpu_custom_call.1} parent=1 // loop_footer_branch
      %12 = sbr.rel target = $region3
    $region8: #{tpu_custom_call.1} parent=1 // loop_exit
      _
    %4839 = vsyncpa [#allocation3], 1
    %s4840 = scalar_lea.sflag [#allocation3], 1
    %4841 = vsyncpa %s4840, 1
    %4842 = vsyncpa [#allocation4], 1
    %s4843 = scalar_lea.sflag [#allocation4], 1
    %4844 = vsyncpa %s4843, 1

</llo_original>
